<compile_context>
chip_gen: v7x
topology: tpu7x:2x2x1
jax: 0.10.0
libtpu: 0.0.40
codegen_flags: <defaults>
</compile_context>

<pallas_src>
import numpy as np
import jax
import jax.numpy as jnp
from jax.experimental import pallas as pl
from jax.experimental.pallas import tpu as pltpu

# ----------------------------- model hyperparams -----------------------------
NODE_IN_FEATS = 16
EDGE_IN_FEATS = 8
NODE_FEATS = 16          # node_feats
NODE_HID_FEATS = 32      # node_hid_feats
PRED_HID_FEATS = 32      # pred_hid_feats
NUM_STEP_MP = 5          # num_step_message_passing
N_NODES = 8
N_EDGES = 16

VMEM = pl.BlockSpec(memory_space=pltpu.MemorySpace.VMEM)
SMEM = pl.BlockSpec(memory_space=pltpu.MemorySpace.SMEM)


# ------------------------------- fused kernel --------------------------------
def _nmr_mpnn_fused_kernel(
    # graph data + constant helpers
    x_ref, eattr_ref, srcoh_ref, dstoh_ref, pmat_ref, bmask_ref,
    # project_node_feats MLP
    pw0, pb0, pw1, pb1, pw2, pb2, pw3, pb3,
    # edge_network MLP
    ew0, eb0, ew1, eb1, ew2, eb2, ew3, eb3,
    # NNConv bias, merged GRU weights/biases
    cb_ref, gw_ref, gbih_ref, gbhh_ref,
    # readout_n_naive MLP
    rw0, rb0, rw1, rb1, rw2, rb2, rw3, rb3,
    # PReLU alphas (SMEM scalars)
    alphas_ref,
    # output
    o_ref,
):
    F = NODE_FEATS
    E = N_EDGES
    N = N_NODES

    def dense(x, w_ref, b_ref):
        return jnp.dot(x, w_ref[...], preferred_element_type=jnp.float32) + b_ref[...]

    # ---------------- project_node_feats: 3x(Linear+ReLU) + Linear+Tanh -------
    h = jnp.maximum(dense(x_ref[...], pw0, pb0), 0.0)
    h = jnp.maximum(dense(h, pw1, pb1), 0.0)
    h = jnp.maximum(dense(h, pw2, pb2), 0.0)
    h = jnp.tanh(dense(h, pw3, pb3))                                  # (N, F)

    # ---------------- edge_network: 3x(Linear+ReLU) + Linear+ReLU -> (E, F*F) --
    w = jnp.maximum(dense(eattr_ref[...], ew0, eb0), 0.0)
    w = jnp.maximum(dense(w, ew1, eb1), 0.0)
    w = jnp.maximum(dense(w, ew2, eb2), 0.0)
    wflat = jnp.maximum(dense(w, ew3, eb3), 0.0)                      # (E, F*F)
    # Rearrange to (F*E, F): row f*E + e holds W_e[f, :] = wflat[e, f*F:(f+1)*F]
    # (sublane-aligned concat of lane slices; no risky lane<->sublane reshape).
    w2d = jnp.concatenate([wflat[:, f * F:(f + 1) * F] for f in range(F)],
                          axis=0)                                     # (F*E, F)

    srcoh = srcoh_ref[...]                                            # (E, N)
    dstoh = dstoh_ref[...]                                            # (N, E)
    pmat = pmat_ref[...]                                              # (F, F*E)
    bmask = bmask_ref[...]                                            # (E, F*E)
    cb = cb_ref[...]                                                  # (1, F)
    gw = gw_ref[...]                                                  # (F, 6F) = [Wih | Whh]
    gbih = gbih_ref[...]                                              # (1, 3F)
    gbhh = gbhh_ref[...]                                              # (1, 3F)

    # ---------------- 5 message-passing + GRU steps (fully in VMEM/vregs) -----
    aggr = [h]
    for _ in range(NUM_STEP_MP):
        # gather h at edge sources: MXU one-hot matmul
        h_src = jnp.dot(srcoh, h, preferred_element_type=jnp.float32)          # (E, F)
        # per-edge message m_e = h_src[e] @ W_e, as pure 2D MXU matmuls:
        #   hs_blk[e, f*E+e'] = h_src[e, f] * (e' == e)
        hs_blk = jnp.dot(h_src, pmat, preferred_element_type=jnp.float32) * bmask  # (E, F*E)
        m = jnp.dot(hs_blk, w2d, preferred_element_type=jnp.float32)           # (E, F)
        # scatter-sum to destinations + NNConv bias (MXU one-hot matmul)
        msg = jnp.dot(dstoh, m, preferred_element_type=jnp.float32) + cb       # (N, F)

        # merged GRU: one matmul with rows stacked [msg; h] and cols [Wih | Whh]
        stacked = jnp.concatenate([msg, h], axis=0)                             # (2N, F)
        g2 = jnp.dot(stacked, gw, preferred_element_type=jnp.float32)           # (2N, 6F)
        gi = g2[0:N, 0:3 * F] + gbih          # msg @ Wih + bih
        gh = g2[N:2 * N, 3 * F:6 * F] + gbhh  # h   @ Whh + bhh
        r = jax.nn.sigmoid(gi[:, 0:F] + gh[:, 0:F])
        z = jax.nn.sigmoid(gi[:, F:2 * F] + gh[:, F:2 * F])
        n = jnp.tanh(gi[:, 2 * F:3 * F] + r * gh[:, 2 * F:3 * F])
        h = (1.0 - z) * n + z * h
        aggr.append(h)

    # ---------------- readout_n_naive (Dropout = identity in eval) ------------
    # First layer consumes the concatenation [h0|h1|...|h5]; implemented as a
    # sum of per-block matmuls (avoids an in-kernel lane concat).
    rw0v = rw0[...]                                                    # (6F, P)
    y = rb0[...] + jnp.dot(aggr[0], rw0v[0:F, :], preferred_element_type=jnp.float32)
    for t in range(1, NUM_STEP_MP + 1):
        y = y + jnp.dot(aggr[t], rw0v[t * F:(t + 1) * F, :],
                        preferred_element_type=jnp.float32)
    y = jnp.where(y >= 0.0, y, alphas_ref[0] * y)                      # PReLU
    y = dense(y, rw1, rb1)
    y = jnp.where(y >= 0.0, y, alphas_ref[1] * y)
    y = dense(y, rw2, rb2)
    y = jnp.where(y >= 0.0, y, alphas_ref[2] * y)
    y = dense(y, rw3, rb3)                                             # (N, 1)
    o_ref[...] = y


# --------------------------------- wrapper ------------------------------------
@jax.jit
def forward(params, node_attr, edge_attr, src_onehot, dst_onehot, pmat, bmask):
    p = params
    n = node_attr.shape[0]
    out = pl.pallas_call(
        _nmr_mpnn_fused_kernel,
        out_shape=jax.ShapeDtypeStruct((n, 1), jnp.float32),
        in_specs=[VMEM] * 34 + [SMEM],
        out_specs=VMEM,
    )(node_attr, edge_attr, src_onehot, dst_onehot, pmat, bmask,
      *p["proj0"], *p["proj1"], *p["proj2"], *p["proj3"],
      *p["edge0"], *p["edge1"], *p["edge2"], *p["edge3"],
      p["nnconv_b"], p["gru_wcat"], p["gru_bih"], p["gru_bhh"],
      *p["r0"], *p["r1"], *p["r2"], *p["r3"],
      p["alphas"])
    return out[:, 0]


# ------------------------------ parameter init --------------------------------
def init_linear_params(key, fan_in, fan_out):
    k1, k2 = jax.random.split(key)
    bound = 1.0 / np.sqrt(fan_in)
    w = jax.random.uniform(k1, (fan_in, fan_out), jnp.float32, -bound, bound)
    b = jax.random.uniform(k2, (1, fan_out), jnp.float32, -bound, bound)
    return w, b


def init_params(key):
    keys = jax.random.split(key, 20)
    p = {}
    # project_node_feats MLP
    p["proj0"] = init_linear_params(keys[0], NODE_IN_FEATS, NODE_HID_FEATS)
    p["proj1"] = init_linear_params(keys[1], NODE_HID_FEATS, NODE_HID_FEATS)
    p["proj2"] = init_linear_params(keys[2], NODE_HID_FEATS, NODE_HID_FEATS)
    p["proj3"] = init_linear_params(keys[3], NODE_HID_FEATS, NODE_FEATS)
    # edge_network MLP (final layer has ReLU per the reference module)
    p["edge0"] = init_linear_params(keys[4], EDGE_IN_FEATS, NODE_HID_FEATS)
    p["edge1"] = init_linear_params(keys[5], NODE_HID_FEATS, NODE_HID_FEATS)
    p["edge2"] = init_linear_params(keys[6], NODE_HID_FEATS, NODE_HID_FEATS)
    p["edge3"] = init_linear_params(keys[7], NODE_HID_FEATS, NODE_FEATS * NODE_FEATS)
    # NNConv output bias
    p["nnconv_b"] = jax.random.uniform(keys[8], (1, NODE_FEATS), jnp.float32, -0.1, 0.1)
    # GRU(node_feats, node_feats): weights stored transposed (F, 3F), gate order r,z,n
    bound = 1.0 / np.sqrt(NODE_FEATS)
    wih = jax.random.uniform(keys[9], (NODE_FEATS, 3 * NODE_FEATS), jnp.float32, -bound, bound)
    whh = jax.random.uniform(keys[10], (NODE_FEATS, 3 * NODE_FEATS), jnp.float32, -bound, bound)
    p["gru_wcat"] = jnp.concatenate([wih, whh], axis=1)          # (F, 6F)
    p["gru_bih"] = jax.random.uniform(keys[11], (1, 3 * NODE_FEATS), jnp.float32, -bound, bound)
    p["gru_bhh"] = jax.random.uniform(keys[12], (1, 3 * NODE_FEATS), jnp.float32, -bound, bound)
    # readout_n_naive: in = node_feats * (1 + num_step_message_passing)
    rin = NODE_FEATS * (1 + NUM_STEP_MP)
    p["r0"] = init_linear_params(keys[13], rin, PRED_HID_FEATS)
    p["r1"] = init_linear_params(keys[14], PRED_HID_FEATS, PRED_HID_FEATS)
    p["r2"] = init_linear_params(keys[15], PRED_HID_FEATS, PRED_HID_FEATS)
    p["r3"] = init_linear_params(keys[16], PRED_HID_FEATS, 1)
    # PReLU parameters (PyTorch default single param = 0.25)
    p["alphas"] = jnp.full((3,), 0.25, jnp.float32)
    return p


# -------------------------- pure-JAX reference (check) -------------------------
def reference_forward(params, node_attr, edge_attr, src, dst):
    p = params
    F = NODE_FEATS

    def lin(x, wb):
        w, b = wb
        return x @ w + b

    h = jnp.maximum(lin(node_attr, p["proj0"]), 0.0)
    h = jnp.maximum(lin(h, p["proj1"]), 0.0)
    h = jnp.maximum(lin(h, p["proj2"]), 0.0)
    h = jnp.tanh(lin(h, p["proj3"]))

    ef = jnp.maximum(lin(edge_attr, p["edge0"]), 0.0)
    ef = jnp.maximum(lin(ef, p["edge1"]), 0.0)
    ef = jnp.maximum(lin(ef, p["edge2"]), 0.0)
    ef = jnp.maximum(lin(ef, p["edge3"]), 0.0)
    wmat = ef.reshape(-1, F, F)

    wih = p["gru_wcat"][:, :3 * F]
    whh = p["gru_wcat"][:, 3 * F:]

    aggr = [h]
    for _ in range(NUM_STEP_MP):
        h_src = h[src]
        m = jnp.einsum("ef,efg->eg", h_src, wmat)
        msg = jax.ops.segment_sum(m, dst, num_segments=N_NODES) + p["nnconv_b"]
        gi = msg @ wih + p["gru_bih"]
        gh = h @ whh + p["gru_bhh"]
        r = jax.nn.sigmoid(gi[:, :F] + gh[:, :F])
        z = jax.nn.sigmoid(gi[:, F:2 * F] + gh[:, F:2 * F])
        n = jnp.tanh(gi[:, 2 * F:] + r * gh[:, 2 * F:])
        h = (1.0 - z) * n + z * h
        aggr.append(h)
    a = jnp.concatenate(aggr, axis=1)

    def prelu(y, alpha):
        return jnp.where(y >= 0.0, y, alpha * y)

    y = prelu(lin(a, p["r0"]), p["alphas"][0])
    y = prelu(lin(y, p["r1"]), p["alphas"][1])
    y = prelu(lin(y, p["r2"]), p["alphas"][2])
    y = lin(y, p["r3"])
    return y[:, 0]


# ----------------------------------- main --------------------------------------
if __name__ == "__main__":
    key = jax.random.PRNGKey(0)
    k_param, k_node, k_edge, k_src, k_dst = jax.random.split(key, 5)

    params = init_params(k_param)

    node_attr = jax.random.normal(k_node, (N_NODES, NODE_IN_FEATS), jnp.float32)
    edge_attr = jax.random.normal(k_edge, (N_EDGES, EDGE_IN_FEATS), jnp.float32)
    src = jax.random.randint(k_src, (N_EDGES,), 0, N_NODES)
    dst = jax.random.randint(k_dst, (N_EDGES,), 0, N_NODES)

    # --- host-built topology constants (hoisted out of the jitted forward) ----
    src_np = np.asarray(src)
    dst_np = np.asarray(dst)
    src_onehot = jnp.asarray(
        (src_np[:, None] == np.arange(N_NODES)[None, :]).astype(np.float32))   # (E, N)
    dst_onehot = jnp.asarray(
        (np.arange(N_NODES)[:, None] == dst_np[None, :]).astype(np.float32))   # (N, E)
    # block-diag helpers:  pmat[f, f'*E+e'] = (f==f'), bmask[e, f*E+e'] = (e==e')
    pmat = jnp.asarray(np.kron(np.eye(NODE_FEATS, dtype=np.float32),
                               np.ones((1, N_EDGES), dtype=np.float32)))        # (F, F*E)
    bmask = jnp.asarray(np.kron(np.ones((1, NODE_FEATS), dtype=np.float32),
                                np.eye(N_EDGES, dtype=np.float32)))             # (E, F*E)

    # `masks` is host-side boolean node selection (static), applied after the kernel.
    masks = np.array([True, False, True, True, False, True, True, False])
    mask_idx = np.where(masks)[0]

    out_all = forward(params, node_attr, edge_attr, src_onehot, dst_onehot, pmat, bmask)
    out = out_all[mask_idx]                              # == out[masks][:, 0] in torch
    jax.block_until_ready(out)

    # correctness check against a pure-JAX reference of the module
    ref_all = reference_forward(params, node_attr, edge_attr, src, dst)
    ref = ref_all[mask_idx]
    assert out.shape == (int(masks.sum()),)
    assert bool(jnp.all(jnp.isfinite(out)))
    assert float(jnp.max(jnp.abs(out - ref))) < 5e-3, "mismatch vs JAX reference"

    print("KERNEL_OK")
</pallas_src>

<mosaic_0001>
module attributes {stable_mosaic.version = 11 : i64} {
  func.func @_nmr_mpnn_fused_kernel(%arg0: memref<8x16xf32, #tpu.memory_space<vmem>>, %arg1: memref<16x8xf32, #tpu.memory_space<vmem>>, %arg2: memref<16x8xf32, #tpu.memory_space<vmem>>, %arg3: memref<8x16xf32, #tpu.memory_space<vmem>>, %arg4: memref<16x256xf32, #tpu.memory_space<vmem>>, %arg5: memref<16x256xf32, #tpu.memory_space<vmem>>, %arg6: memref<16x32xf32, #tpu.memory_space<vmem>>, %arg7: memref<1x32xf32, #tpu.memory_space<vmem>>, %arg8: memref<32x32xf32, #tpu.memory_space<vmem>>, %arg9: memref<1x32xf32, #tpu.memory_space<vmem>>, %arg10: memref<32x32xf32, #tpu.memory_space<vmem>>, %arg11: memref<1x32xf32, #tpu.memory_space<vmem>>, %arg12: memref<32x16xf32, #tpu.memory_space<vmem>>, %arg13: memref<1x16xf32, #tpu.memory_space<vmem>>, %arg14: memref<8x32xf32, #tpu.memory_space<vmem>>, %arg15: memref<1x32xf32, #tpu.memory_space<vmem>>, %arg16: memref<32x32xf32, #tpu.memory_space<vmem>>, %arg17: memref<1x32xf32, #tpu.memory_space<vmem>>, %arg18: memref<32x32xf32, #tpu.memory_space<vmem>>, %arg19: memref<1x32xf32, #tpu.memory_space<vmem>>, %arg20: memref<32x256xf32, #tpu.memory_space<vmem>>, %arg21: memref<1x256xf32, #tpu.memory_space<vmem>>, %arg22: memref<1x16xf32, #tpu.memory_space<vmem>>, %arg23: memref<16x96xf32, #tpu.memory_space<vmem>>, %arg24: memref<1x48xf32, #tpu.memory_space<vmem>>, %arg25: memref<1x48xf32, #tpu.memory_space<vmem>>, %arg26: memref<96x32xf32, #tpu.memory_space<vmem>>, %arg27: memref<1x32xf32, #tpu.memory_space<vmem>>, %arg28: memref<32x32xf32, #tpu.memory_space<vmem>>, %arg29: memref<1x32xf32, #tpu.memory_space<vmem>>, %arg30: memref<32x32xf32, #tpu.memory_space<vmem>>, %arg31: memref<1x32xf32, #tpu.memory_space<vmem>>, %arg32: memref<32x1xf32, #tpu.memory_space<vmem>>, %arg33: memref<1x1xf32, #tpu.memory_space<vmem>>, %arg34: memref<3xf32, #tpu.memory_space<smem>>, %arg35: memref<8x1xf32, #tpu.memory_space<vmem>>) attributes {dimension_semantics = [], scalar_prefetch = 0 : i64, scratch_operands = 0 : i64, tpu.core_type = #tpu.core_type<tc>} {
    %c0 = arith.constant 0 : index
    %c0_0 = arith.constant 0 : index
    %0 = vector.load %arg0[%c0, %c0_0] : memref<8x16xf32, #tpu.memory_space<vmem>>, vector<8x16xf32>
    %c0_1 = arith.constant 0 : index
    %c0_2 = arith.constant 0 : index
    %1 = vector.load %arg6[%c0_1, %c0_2] : memref<16x32xf32, #tpu.memory_space<vmem>>, vector<16x32xf32>
    %cst = arith.constant dense<0.000000e+00> : vector<8x32xf32>
    %2 = tpu.matmul %0, %1, %cst {dimension_numbers = #tpu.dot_dimension_numbers<[1], [0], [0], [1], [0, 0, 1, 1], [], []>} : vector<8x16xf32>, vector<16x32xf32>, vector<8x32xf32> -> vector<8x32xf32>
    %c0_3 = arith.constant 0 : index
    %c0_4 = arith.constant 0 : index
    %3 = vector.load %arg7[%c0_3, %c0_4] : memref<1x32xf32, #tpu.memory_space<vmem>>, vector<1x32xf32>
    %4 = vector.broadcast %3 : vector<1x32xf32> to vector<8x32xf32>
    %5 = arith.addf %2, %4 : vector<8x32xf32>
    %cst_5 = arith.constant 0.000000e+00 : f32
    %6 = vector.broadcast %cst_5 : f32 to vector<8x32xf32>
    %7 = arith.maximumf %5, %6 : vector<8x32xf32>
    %c0_6 = arith.constant 0 : index
    %c0_7 = arith.constant 0 : index
    %8 = vector.load %arg8[%c0_6, %c0_7] : memref<32x32xf32, #tpu.memory_space<vmem>>, vector<32x32xf32>
    %cst_8 = arith.constant dense<0.000000e+00> : vector<8x32xf32>
    %9 = tpu.matmul %7, %8, %cst_8 {dimension_numbers = #tpu.dot_dimension_numbers<[1], [0], [0], [1], [0, 0, 1, 1], [], []>} : vector<8x32xf32>, vector<32x32xf32>, vector<8x32xf32> -> vector<8x32xf32>
    %c0_9 = arith.constant 0 : index
    %c0_10 = arith.constant 0 : index
    %10 = vector.load %arg9[%c0_9, %c0_10] : memref<1x32xf32, #tpu.memory_space<vmem>>, vector<1x32xf32>
    %11 = vector.broadcast %10 : vector<1x32xf32> to vector<8x32xf32>
    %12 = arith.addf %9, %11 : vector<8x32xf32>
    %cst_11 = arith.constant 0.000000e+00 : f32
    %13 = vector.broadcast %cst_11 : f32 to vector<8x32xf32>
    %14 = arith.maximumf %12, %13 : vector<8x32xf32>
    %c0_12 = arith.constant 0 : index
    %c0_13 = arith.constant 0 : index
    %15 = vector.load %arg10[%c0_12, %c0_13] : memref<32x32xf32, #tpu.memory_space<vmem>>, vector<32x32xf32>
    %cst_14 = arith.constant dense<0.000000e+00> : vector<8x32xf32>
    %16 = tpu.matmul %14, %15, %cst_14 {dimension_numbers = #tpu.dot_dimension_numbers<[1], [0], [0], [1], [0, 0, 1, 1], [], []>} : vector<8x32xf32>, vector<32x32xf32>, vector<8x32xf32> -> vector<8x32xf32>
    %c0_15 = arith.constant 0 : index
    %c0_16 = arith.constant 0 : index
    %17 = vector.load %arg11[%c0_15, %c0_16] : memref<1x32xf32, #tpu.memory_space<vmem>>, vector<1x32xf32>
    %18 = vector.broadcast %17 : vector<1x32xf32> to vector<8x32xf32>
    %19 = arith.addf %16, %18 : vector<8x32xf32>
    %cst_17 = arith.constant 0.000000e+00 : f32
    %20 = vector.broadcast %cst_17 : f32 to vector<8x32xf32>
    %21 = arith.maximumf %19, %20 : vector<8x32xf32>
    %c0_18 = arith.constant 0 : index
    %c0_19 = arith.constant 0 : index
    %22 = vector.load %arg12[%c0_18, %c0_19] : memref<32x16xf32, #tpu.memory_space<vmem>>, vector<32x16xf32>
    %cst_20 = arith.constant dense<0.000000e+00> : vector<8x16xf32>
    %23 = tpu.matmul %21, %22, %cst_20 {dimension_numbers = #tpu.dot_dimension_numbers<[1], [0], [0], [1], [0, 0, 1, 1], [], []>} : vector<8x32xf32>, vector<32x16xf32>, vector<8x16xf32> -> vector<8x16xf32>
    %c0_21 = arith.constant 0 : index
    %c0_22 = arith.constant 0 : index
    %24 = vector.load %arg13[%c0_21, %c0_22] : memref<1x16xf32, #tpu.memory_space<vmem>>, vector<1x16xf32>
    %25 = vector.broadcast %24 : vector<1x16xf32> to vector<8x16xf32>
    %26 = arith.addf %23, %25 : vector<8x16xf32>
    %27 = math.tanh %26 : vector<8x16xf32>
    %c0_23 = arith.constant 0 : index
    %c0_24 = arith.constant 0 : index
    %28 = vector.load %arg1[%c0_23, %c0_24] : memref<16x8xf32, #tpu.memory_space<vmem>>, vector<16x8xf32>
    %c0_25 = arith.constant 0 : index
    %c0_26 = arith.constant 0 : index
    %29 = vector.load %arg14[%c0_25, %c0_26] : memref<8x32xf32, #tpu.memory_space<vmem>>, vector<8x32xf32>
    %cst_27 = arith.constant dense<0.000000e+00> : vector<16x32xf32>
    %30 = tpu.matmul %28, %29, %cst_27 {dimension_numbers = #tpu.dot_dimension_numbers<[1], [0], [0], [1], [0, 0, 1, 1], [], []>} : vector<16x8xf32>, vector<8x32xf32>, vector<16x32xf32> -> vector<16x32xf32>
    %c0_28 = arith.constant 0 : index
    %c0_29 = arith.constant 0 : index
    %31 = vector.load %arg15[%c0_28, %c0_29] : memref<1x32xf32, #tpu.memory_space<vmem>>, vector<1x32xf32>
    %32 = vector.broadcast %31 : vector<1x32xf32> to vector<16x32xf32>
    %33 = arith.addf %30, %32 : vector<16x32xf32>
    %cst_30 = arith.constant 0.000000e+00 : f32
    %34 = vector.broadcast %cst_30 : f32 to vector<16x32xf32>
    %35 = arith.maximumf %33, %34 : vector<16x32xf32>
    %c0_31 = arith.constant 0 : index
    %c0_32 = arith.constant 0 : index
    %36 = vector.load %arg16[%c0_31, %c0_32] : memref<32x32xf32, #tpu.memory_space<vmem>>, vector<32x32xf32>
    %cst_33 = arith.constant dense<0.000000e+00> : vector<16x32xf32>
    %37 = tpu.matmul %35, %36, %cst_33 {dimension_numbers = #tpu.dot_dimension_numbers<[1], [0], [0], [1], [0, 0, 1, 1], [], []>} : vector<16x32xf32>, vector<32x32xf32>, vector<16x32xf32> -> vector<16x32xf32>
    %c0_34 = arith.constant 0 : index
    %c0_35 = arith.constant 0 : index
    %38 = vector.load %arg17[%c0_34, %c0_35] : memref<1x32xf32, #tpu.memory_space<vmem>>, vector<1x32xf32>
    %39 = vector.broadcast %38 : vector<1x32xf32> to vector<16x32xf32>
    %40 = arith.addf %37, %39 : vector<16x32xf32>
    %cst_36 = arith.constant 0.000000e+00 : f32
    %41 = vector.broadcast %cst_36 : f32 to vector<16x32xf32>
    %42 = arith.maximumf %40, %41 : vector<16x32xf32>
    %c0_37 = arith.constant 0 : index
    %c0_38 = arith.constant 0 : index
    %43 = vector.load %arg18[%c0_37, %c0_38] : memref<32x32xf32, #tpu.memory_space<vmem>>, vector<32x32xf32>
    %cst_39 = arith.constant dense<0.000000e+00> : vector<16x32xf32>
    %44 = tpu.matmul %42, %43, %cst_39 {dimension_numbers = #tpu.dot_dimension_numbers<[1], [0], [0], [1], [0, 0, 1, 1], [], []>} : vector<16x32xf32>, vector<32x32xf32>, vector<16x32xf32> -> vector<16x32xf32>
    %c0_40 = arith.constant 0 : index
    %c0_41 = arith.constant 0 : index
    %45 = vector.load %arg19[%c0_40, %c0_41] : memref<1x32xf32, #tpu.memory_space<vmem>>, vector<1x32xf32>
    %46 = vector.broadcast %45 : vector<1x32xf32> to vector<16x32xf32>
    %47 = arith.addf %44, %46 : vector<16x32xf32>
    %cst_42 = arith.constant 0.000000e+00 : f32
    %48 = vector.broadcast %cst_42 : f32 to vector<16x32xf32>
    %49 = arith.maximumf %47, %48 : vector<16x32xf32>
    %c0_43 = arith.constant 0 : index
    %c0_44 = arith.constant 0 : index
    %50 = vector.load %arg20[%c0_43, %c0_44] : memref<32x256xf32, #tpu.memory_space<vmem>>, vector<32x256xf32>
    %cst_45 = arith.constant dense<0.000000e+00> : vector<16x256xf32>
    %51 = tpu.matmul %49, %50, %cst_45 {dimension_numbers = #tpu.dot_dimension_numbers<[1], [0], [0], [1], [0, 0, 1, 1], [], []>} : vector<16x32xf32>, vector<32x256xf32>, vector<16x256xf32> -> vector<16x256xf32>
    %c0_46 = arith.constant 0 : index
    %c0_47 = arith.constant 0 : index
    %52 = vector.load %arg21[%c0_46, %c0_47] : memref<1x256xf32, #tpu.memory_space<vmem>>, vector<1x256xf32>
    %53 = vector.broadcast %52 : vector<1x256xf32> to vector<16x256xf32>
    %54 = arith.addf %51, %53 : vector<16x256xf32>
    %cst_48 = arith.constant 0.000000e+00 : f32
    %55 = vector.broadcast %cst_48 : f32 to vector<16x256xf32>
    %56 = arith.maximumf %54, %55 : vector<16x256xf32>
    %57 = vector.extract_strided_slice %56 {offsets = [0, 0], sizes = [16, 16], strides = [1, 1]} : vector<16x256xf32> to vector<16x16xf32>
    %58 = vector.extract_strided_slice %56 {offsets = [0, 16], sizes = [16, 16], strides = [1, 1]} : vector<16x256xf32> to vector<16x16xf32>
    %59 = vector.extract_strided_slice %56 {offsets = [0, 32], sizes = [16, 16], strides = [1, 1]} : vector<16x256xf32> to vector<16x16xf32>
    %60 = vector.extract_strided_slice %56 {offsets = [0, 48], sizes = [16, 16], strides = [1, 1]} : vector<16x256xf32> to vector<16x16xf32>
    %61 = vector.extract_strided_slice %56 {offsets = [0, 64], sizes = [16, 16], strides = [1, 1]} : vector<16x256xf32> to vector<16x16xf32>
    %62 = vector.extract_strided_slice %56 {offsets = [0, 80], sizes = [16, 16], strides = [1, 1]} : vector<16x256xf32> to vector<16x16xf32>
    %63 = vector.extract_strided_slice %56 {offsets = [0, 96], sizes = [16, 16], strides = [1, 1]} : vector<16x256xf32> to vector<16x16xf32>
    %64 = vector.extract_strided_slice %56 {offsets = [0, 112], sizes = [16, 16], strides = [1, 1]} : vector<16x256xf32> to vector<16x16xf32>
    %65 = vector.extract_strided_slice %56 {offsets = [0, 128], sizes = [16, 16], strides = [1, 1]} : vector<16x256xf32> to vector<16x16xf32>
    %66 = vector.extract_strided_slice %56 {offsets = [0, 144], sizes = [16, 16], strides = [1, 1]} : vector<16x256xf32> to vector<16x16xf32>
    %67 = vector.extract_strided_slice %56 {offsets = [0, 160], sizes = [16, 16], strides = [1, 1]} : vector<16x256xf32> to vector<16x16xf32>
    %68 = vector.extract_strided_slice %56 {offsets = [0, 176], sizes = [16, 16], strides = [1, 1]} : vector<16x256xf32> to vector<16x16xf32>
    %69 = vector.extract_strided_slice %56 {offsets = [0, 192], sizes = [16, 16], strides = [1, 1]} : vector<16x256xf32> to vector<16x16xf32>
    %70 = vector.extract_strided_slice %56 {offsets = [0, 208], sizes = [16, 16], strides = [1, 1]} : vector<16x256xf32> to vector<16x16xf32>
    %71 = vector.extract_strided_slice %56 {offsets = [0, 224], sizes = [16, 16], strides = [1, 1]} : vector<16x256xf32> to vector<16x16xf32>
    %72 = vector.extract_strided_slice %56 {offsets = [0, 240], sizes = [16, 16], strides = [1, 1]} : vector<16x256xf32> to vector<16x16xf32>
    %73 = tpu.concatenate %57, %58, %59, %60, %61, %62, %63, %64, %65, %66, %67, %68, %69, %70, %71, %72 in 0 : vector<16x16xf32>, vector<16x16xf32>, vector<16x16xf32>, vector<16x16xf32>, vector<16x16xf32>, vector<16x16xf32>, vector<16x16xf32>, vector<16x16xf32>, vector<16x16xf32>, vector<16x16xf32>, vector<16x16xf32>, vector<16x16xf32>, vector<16x16xf32>, vector<16x16xf32>, vector<16x16xf32>, vector<16x16xf32> -> vector<256x16xf32>
    %c0_49 = arith.constant 0 : index
    %c0_50 = arith.constant 0 : index
    %74 = vector.load %arg2[%c0_49, %c0_50] : memref<16x8xf32, #tpu.memory_space<vmem>>, vector<16x8xf32>
    %c0_51 = arith.constant 0 : index
    %c0_52 = arith.constant 0 : index
    %75 = vector.load %arg3[%c0_51, %c0_52] : memref<8x16xf32, #tpu.memory_space<vmem>>, vector<8x16xf32>
    %c0_53 = arith.constant 0 : index
    %c0_54 = arith.constant 0 : index
    %76 = vector.load %arg4[%c0_53, %c0_54] : memref<16x256xf32, #tpu.memory_space<vmem>>, vector<16x256xf32>
    %c0_55 = arith.constant 0 : index
    %c0_56 = arith.constant 0 : index
    %77 = vector.load %arg5[%c0_55, %c0_56] : memref<16x256xf32, #tpu.memory_space<vmem>>, vector<16x256xf32>
    %c0_57 = arith.constant 0 : index
    %c0_58 = arith.constant 0 : index
    %78 = vector.load %arg22[%c0_57, %c0_58] : memref<1x16xf32, #tpu.memory_space<vmem>>, vector<1x16xf32>
    %c0_59 = arith.constant 0 : index
    %c0_60 = arith.constant 0 : index
    %79 = vector.load %arg23[%c0_59, %c0_60] : memref<16x96xf32, #tpu.memory_space<vmem>>, vector<16x96xf32>
    %c0_61 = arith.constant 0 : index
    %c0_62 = arith.constant 0 : index
    %80 = vector.load %arg24[%c0_61, %c0_62] : memref<1x48xf32, #tpu.memory_space<vmem>>, vector<1x48xf32>
    %c0_63 = arith.constant 0 : index
    %c0_64 = arith.constant 0 : index
    %81 = vector.load %arg25[%c0_63, %c0_64] : memref<1x48xf32, #tpu.memory_space<vmem>>, vector<1x48xf32>
    %cst_65 = arith.constant dense<0.000000e+00> : vector<16x16xf32>
    %82 = tpu.matmul %74, %27, %cst_65 {dimension_numbers = #tpu.dot_dimension_numbers<[1], [0], [0], [1], [0, 0, 1, 1], [], []>} : vector<16x8xf32>, vector<8x16xf32>, vector<16x16xf32> -> vector<16x16xf32>
    %cst_66 = arith.constant dense<0.000000e+00> : vector<16x256xf32>
    %83 = tpu.matmul %82, %76, %cst_66 {dimension_numbers = #tpu.dot_dimension_numbers<[1], [0], [0], [1], [0, 0, 1, 1], [], []>} : vector<16x16xf32>, vector<16x256xf32>, vector<16x256xf32> -> vector<16x256xf32>
    %84 = arith.mulf %83, %77 : vector<16x256xf32>
    %cst_67 = arith.constant dense<0.000000e+00> : vector<16x16xf32>
    %85 = tpu.matmul %84, %73, %cst_67 {dimension_numbers = #tpu.dot_dimension_numbers<[1], [0], [0], [1], [0, 0, 1, 1], [], []>} : vector<16x256xf32>, vector<256x16xf32>, vector<16x16xf32> -> vector<16x16xf32>
    %cst_68 = arith.constant dense<0.000000e+00> : vector<8x16xf32>
    %86 = tpu.matmul %75, %85, %cst_68 {dimension_numbers = #tpu.dot_dimension_numbers<[1], [0], [0], [1], [0, 0, 1, 1], [], []>} : vector<8x16xf32>, vector<16x16xf32>, vector<8x16xf32> -> vector<8x16xf32>
    %87 = vector.broadcast %78 : vector<1x16xf32> to vector<8x16xf32>
    %88 = arith.addf %86, %87 : vector<8x16xf32>
    %89 = tpu.concatenate %88, %27 in 0 : vector<8x16xf32>, vector<8x16xf32> -> vector<16x16xf32>
    %cst_69 = arith.constant dense<0.000000e+00> : vector<16x96xf32>
    %90 = tpu.matmul %89, %79, %cst_69 {dimension_numbers = #tpu.dot_dimension_numbers<[1], [0], [0], [1], [0, 0, 1, 1], [], []>} : vector<16x16xf32>, vector<16x96xf32>, vector<16x96xf32> -> vector<16x96xf32>
    %91 = vector.extract_strided_slice %90 {offsets = [0, 0], sizes = [8, 48], strides = [1, 1]} : vector<16x96xf32> to vector<8x48xf32>
    %92 = vector.broadcast %80 : vector<1x48xf32> to vector<8x48xf32>
    %93 = arith.addf %91, %92 : vector<8x48xf32>
    %94 = vector.extract_strided_slice %90 {offsets = [8, 48], sizes = [8, 48], strides = [1, 1]} : vector<16x96xf32> to vector<8x48xf32>
    %95 = vector.broadcast %81 : vector<1x48xf32> to vector<8x48xf32>
    %96 = arith.addf %94, %95 : vector<8x48xf32>
    %97 = vector.extract_strided_slice %93 {offsets = [0, 0], sizes = [8, 16], strides = [1, 1]} : vector<8x48xf32> to vector<8x16xf32>
    %98 = vector.extract_strided_slice %96 {offsets = [0, 0], sizes = [8, 16], strides = [1, 1]} : vector<8x48xf32> to vector<8x16xf32>
    %99 = arith.addf %97, %98 : vector<8x16xf32>
    %100 = arith.negf %99 : vector<8x16xf32>
    %101 = math.exp %100 : vector<8x16xf32>
    %cst_70 = arith.constant 1.000000e+00 : f32
    %102 = vector.broadcast %cst_70 : f32 to vector<8x16xf32>
    %103 = arith.addf %102, %101 : vector<8x16xf32>
    %104 = arith.divf %102, %103 : vector<8x16xf32>
    %105 = vector.extract_strided_slice %93 {offsets = [0, 16], sizes = [8, 16], strides = [1, 1]} : vector<8x48xf32> to vector<8x16xf32>
    %106 = vector.extract_strided_slice %96 {offsets = [0, 16], sizes = [8, 16], strides = [1, 1]} : vector<8x48xf32> to vector<8x16xf32>
    %107 = arith.addf %105, %106 : vector<8x16xf32>
    %108 = arith.negf %107 : vector<8x16xf32>
    %109 = math.exp %108 : vector<8x16xf32>
    %cst_71 = arith.constant 1.000000e+00 : f32
    %110 = vector.broadcast %cst_71 : f32 to vector<8x16xf32>
    %111 = arith.addf %110, %109 : vector<8x16xf32>
    %112 = arith.divf %110, %111 : vector<8x16xf32>
    %113 = vector.extract_strided_slice %93 {offsets = [0, 32], sizes = [8, 16], strides = [1, 1]} : vector<8x48xf32> to vector<8x16xf32>
    %114 = vector.extract_strided_slice %96 {offsets = [0, 32], sizes = [8, 16], strides = [1, 1]} : vector<8x48xf32> to vector<8x16xf32>
    %115 = arith.mulf %104, %114 : vector<8x16xf32>
    %116 = arith.addf %113, %115 : vector<8x16xf32>
    %117 = math.tanh %116 : vector<8x16xf32>
    %cst_72 = arith.constant 1.000000e+00 : f32
    %118 = vector.broadcast %cst_72 : f32 to vector<8x16xf32>
    %119 = arith.subf %118, %112 : vector<8x16xf32>
    %120 = arith.mulf %119, %117 : vector<8x16xf32>
    %121 = arith.mulf %112, %27 : vector<8x16xf32>
    %122 = arith.addf %120, %121 : vector<8x16xf32>
    %cst_73 = arith.constant dense<0.000000e+00> : vector<16x16xf32>
    %123 = tpu.matmul %74, %122, %cst_73 {dimension_numbers = #tpu.dot_dimension_numbers<[1], [0], [0], [1], [0, 0, 1, 1], [], []>} : vector<16x8xf32>, vector<8x16xf32>, vector<16x16xf32> -> vector<16x16xf32>
    %cst_74 = arith.constant dense<0.000000e+00> : vector<16x256xf32>
    %124 = tpu.matmul %123, %76, %cst_74 {dimension_numbers = #tpu.dot_dimension_numbers<[1], [0], [0], [1], [0, 0, 1, 1], [], []>} : vector<16x16xf32>, vector<16x256xf32>, vector<16x256xf32> -> vector<16x256xf32>
    %125 = arith.mulf %124, %77 : vector<16x256xf32>
    %cst_75 = arith.constant dense<0.000000e+00> : vector<16x16xf32>
    %126 = tpu.matmul %125, %73, %cst_75 {dimension_numbers = #tpu.dot_dimension_numbers<[1], [0], [0], [1], [0, 0, 1, 1], [], []>} : vector<16x256xf32>, vector<256x16xf32>, vector<16x16xf32> -> vector<16x16xf32>
    %cst_76 = arith.constant dense<0.000000e+00> : vector<8x16xf32>
    %127 = tpu.matmul %75, %126, %cst_76 {dimension_numbers = #tpu.dot_dimension_numbers<[1], [0], [0], [1], [0, 0, 1, 1], [], []>} : vector<8x16xf32>, vector<16x16xf32>, vector<8x16xf32> -> vector<8x16xf32>
    %128 = vector.broadcast %78 : vector<1x16xf32> to vector<8x16xf32>
    %129 = arith.addf %127, %128 : vector<8x16xf32>
    %130 = tpu.concatenate %129, %122 in 0 : vector<8x16xf32>, vector<8x16xf32> -> vector<16x16xf32>
    %cst_77 = arith.constant dense<0.000000e+00> : vector<16x96xf32>
    %131 = tpu.matmul %130, %79, %cst_77 {dimension_numbers = #tpu.dot_dimension_numbers<[1], [0], [0], [1], [0, 0, 1, 1], [], []>} : vector<16x16xf32>, vector<16x96xf32>, vector<16x96xf32> -> vector<16x96xf32>
    %132 = vector.extract_strided_slice %131 {offsets = [0, 0], sizes = [8, 48], strides = [1, 1]} : vector<16x96xf32> to vector<8x48xf32>
    %133 = vector.broadcast %80 : vector<1x48xf32> to vector<8x48xf32>
    %134 = arith.addf %132, %133 : vector<8x48xf32>
    %135 = vector.extract_strided_slice %131 {offsets = [8, 48], sizes = [8, 48], strides = [1, 1]} : vector<16x96xf32> to vector<8x48xf32>
    %136 = vector.broadcast %81 : vector<1x48xf32> to vector<8x48xf32>
    %137 = arith.addf %135, %136 : vector<8x48xf32>
    %138 = vector.extract_strided_slice %134 {offsets = [0, 0], sizes = [8, 16], strides = [1, 1]} : vector<8x48xf32> to vector<8x16xf32>
    %139 = vector.extract_strided_slice %137 {offsets = [0, 0], sizes = [8, 16], strides = [1, 1]} : vector<8x48xf32> to vector<8x16xf32>
    %140 = arith.addf %138, %139 : vector<8x16xf32>
    %141 = arith.negf %140 : vector<8x16xf32>
    %142 = math.exp %141 : vector<8x16xf32>
    %cst_78 = arith.constant 1.000000e+00 : f32
    %143 = vector.broadcast %cst_78 : f32 to vector<8x16xf32>
    %144 = arith.addf %143, %142 : vector<8x16xf32>
    %145 = arith.divf %143, %144 : vector<8x16xf32>
    %146 = vector.extract_strided_slice %134 {offsets = [0, 16], sizes = [8, 16], strides = [1, 1]} : vector<8x48xf32> to vector<8x16xf32>
    %147 = vector.extract_strided_slice %137 {offsets = [0, 16], sizes = [8, 16], strides = [1, 1]} : vector<8x48xf32> to vector<8x16xf32>
    %148 = arith.addf %146, %147 : vector<8x16xf32>
    %149 = arith.negf %148 : vector<8x16xf32>
    %150 = math.exp %149 : vector<8x16xf32>
    %cst_79 = arith.constant 1.000000e+00 : f32
    %151 = vector.broadcast %cst_79 : f32 to vector<8x16xf32>
    %152 = arith.addf %151, %150 : vector<8x16xf32>
    %153 = arith.divf %151, %152 : vector<8x16xf32>
    %154 = vector.extract_strided_slice %134 {offsets = [0, 32], sizes = [8, 16], strides = [1, 1]} : vector<8x48xf32> to vector<8x16xf32>
    %155 = vector.extract_strided_slice %137 {offsets = [0, 32], sizes = [8, 16], strides = [1, 1]} : vector<8x48xf32> to vector<8x16xf32>
    %156 = arith.mulf %145, %155 : vector<8x16xf32>
    %157 = arith.addf %154, %156 : vector<8x16xf32>
    %158 = math.tanh %157 : vector<8x16xf32>
    %cst_80 = arith.constant 1.000000e+00 : f32
    %159 = vector.broadcast %cst_80 : f32 to vector<8x16xf32>
    %160 = arith.subf %159, %153 : vector<8x16xf32>
    %161 = arith.mulf %160, %158 : vector<8x16xf32>
    %162 = arith.mulf %153, %122 : vector<8x16xf32>
    %163 = arith.addf %161, %162 : vector<8x16xf32>
    %cst_81 = arith.constant dense<0.000000e+00> : vector<16x16xf32>
    %164 = tpu.matmul %74, %163, %cst_81 {dimension_numbers = #tpu.dot_dimension_numbers<[1], [0], [0], [1], [0, 0, 1, 1], [], []>} : vector<16x8xf32>, vector<8x16xf32>, vector<16x16xf32> -> vector<16x16xf32>
    %cst_82 = arith.constant dense<0.000000e+00> : vector<16x256xf32>
    %165 = tpu.matmul %164, %76, %cst_82 {dimension_numbers = #tpu.dot_dimension_numbers<[1], [0], [0], [1], [0, 0, 1, 1], [], []>} : vector<16x16xf32>, vector<16x256xf32>, vector<16x256xf32> -> vector<16x256xf32>
    %166 = arith.mulf %165, %77 : vector<16x256xf32>
    %cst_83 = arith.constant dense<0.000000e+00> : vector<16x16xf32>
    %167 = tpu.matmul %166, %73, %cst_83 {dimension_numbers = #tpu.dot_dimension_numbers<[1], [0], [0], [1], [0, 0, 1, 1], [], []>} : vector<16x256xf32>, vector<256x16xf32>, vector<16x16xf32> -> vector<16x16xf32>
    %cst_84 = arith.constant dense<0.000000e+00> : vector<8x16xf32>
    %168 = tpu.matmul %75, %167, %cst_84 {dimension_numbers = #tpu.dot_dimension_numbers<[1], [0], [0], [1], [0, 0, 1, 1], [], []>} : vector<8x16xf32>, vector<16x16xf32>, vector<8x16xf32> -> vector<8x16xf32>
    %169 = vector.broadcast %78 : vector<1x16xf32> to vector<8x16xf32>
    %170 = arith.addf %168, %169 : vector<8x16xf32>
    %171 = tpu.concatenate %170, %163 in 0 : vector<8x16xf32>, vector<8x16xf32> -> vector<16x16xf32>
    %cst_85 = arith.constant dense<0.000000e+00> : vector<16x96xf32>
    %172 = tpu.matmul %171, %79, %cst_85 {dimension_numbers = #tpu.dot_dimension_numbers<[1], [0], [0], [1], [0, 0, 1, 1], [], []>} : vector<16x16xf32>, vector<16x96xf32>, vector<16x96xf32> -> vector<16x96xf32>
    %173 = vector.extract_strided_slice %172 {offsets = [0, 0], sizes = [8, 48], strides = [1, 1]} : vector<16x96xf32> to vector<8x48xf32>
    %174 = vector.broadcast %80 : vector<1x48xf32> to vector<8x48xf32>
    %175 = arith.addf %173, %174 : vector<8x48xf32>
    %176 = vector.extract_strided_slice %172 {offsets = [8, 48], sizes = [8, 48], strides = [1, 1]} : vector<16x96xf32> to vector<8x48xf32>
    %177 = vector.broadcast %81 : vector<1x48xf32> to vector<8x48xf32>
    %178 = arith.addf %176, %177 : vector<8x48xf32>
    %179 = vector.extract_strided_slice %175 {offsets = [0, 0], sizes = [8, 16], strides = [1, 1]} : vector<8x48xf32> to vector<8x16xf32>
    %180 = vector.extract_strided_slice %178 {offsets = [0, 0], sizes = [8, 16], strides = [1, 1]} : vector<8x48xf32> to vector<8x16xf32>
    %181 = arith.addf %179, %180 : vector<8x16xf32>
    %182 = arith.negf %181 : vector<8x16xf32>
    %183 = math.exp %182 : vector<8x16xf32>
    %cst_86 = arith.constant 1.000000e+00 : f32
    %184 = vector.broadcast %cst_86 : f32 to vector<8x16xf32>
    %185 = arith.addf %184, %183 : vector<8x16xf32>
    %186 = arith.divf %184, %185 : vector<8x16xf32>
    %187 = vector.extract_strided_slice %175 {offsets = [0, 16], sizes = [8, 16], strides = [1, 1]} : vector<8x48xf32> to vector<8x16xf32>
    %188 = vector.extract_strided_slice %178 {offsets = [0, 16], sizes = [8, 16], strides = [1, 1]} : vector<8x48xf32> to vector<8x16xf32>
    %189 = arith.addf %187, %188 : vector<8x16xf32>
    %190 = arith.negf %189 : vector<8x16xf32>
    %191 = math.exp %190 : vector<8x16xf32>
    %cst_87 = arith.constant 1.000000e+00 : f32
    %192 = vector.broadcast %cst_87 : f32 to vector<8x16xf32>
    %193 = arith.addf %192, %191 : vector<8x16xf32>
    %194 = arith.divf %192, %193 : vector<8x16xf32>
    %195 = vector.extract_strided_slice %175 {offsets = [0, 32], sizes = [8, 16], strides = [1, 1]} : vector<8x48xf32> to vector<8x16xf32>
    %196 = vector.extract_strided_slice %178 {offsets = [0, 32], sizes = [8, 16], strides = [1, 1]} : vector<8x48xf32> to vector<8x16xf32>
    %197 = arith.mulf %186, %196 : vector<8x16xf32>
    %198 = arith.addf %195, %197 : vector<8x16xf32>
    %199 = math.tanh %198 : vector<8x16xf32>
    %cst_88 = arith.constant 1.000000e+00 : f32
    %200 = vector.broadcast %cst_88 : f32 to vector<8x16xf32>
    %201 = arith.subf %200, %194 : vector<8x16xf32>
    %202 = arith.mulf %201, %199 : vector<8x16xf32>
    %203 = arith.mulf %194, %163 : vector<8x16xf32>
    %204 = arith.addf %202, %203 : vector<8x16xf32>
    %cst_89 = arith.constant dense<0.000000e+00> : vector<16x16xf32>
    %205 = tpu.matmul %74, %204, %cst_89 {dimension_numbers = #tpu.dot_dimension_numbers<[1], [0], [0], [1], [0, 0, 1, 1], [], []>} : vector<16x8xf32>, vector<8x16xf32>, vector<16x16xf32> -> vector<16x16xf32>
    %cst_90 = arith.constant dense<0.000000e+00> : vector<16x256xf32>
    %206 = tpu.matmul %205, %76, %cst_90 {dimension_numbers = #tpu.dot_dimension_numbers<[1], [0], [0], [1], [0, 0, 1, 1], [], []>} : vector<16x16xf32>, vector<16x256xf32>, vector<16x256xf32> -> vector<16x256xf32>
    %207 = arith.mulf %206, %77 : vector<16x256xf32>
    %cst_91 = arith.constant dense<0.000000e+00> : vector<16x16xf32>
    %208 = tpu.matmul %207, %73, %cst_91 {dimension_numbers = #tpu.dot_dimension_numbers<[1], [0], [0], [1], [0, 0, 1, 1], [], []>} : vector<16x256xf32>, vector<256x16xf32>, vector<16x16xf32> -> vector<16x16xf32>
    %cst_92 = arith.constant dense<0.000000e+00> : vector<8x16xf32>
    %209 = tpu.matmul %75, %208, %cst_92 {dimension_numbers = #tpu.dot_dimension_numbers<[1], [0], [0], [1], [0, 0, 1, 1], [], []>} : vector<8x16xf32>, vector<16x16xf32>, vector<8x16xf32> -> vector<8x16xf32>
    %210 = vector.broadcast %78 : vector<1x16xf32> to vector<8x16xf32>
    %211 = arith.addf %209, %210 : vector<8x16xf32>
    %212 = tpu.concatenate %211, %204 in 0 : vector<8x16xf32>, vector<8x16xf32> -> vector<16x16xf32>
    %cst_93 = arith.constant dense<0.000000e+00> : vector<16x96xf32>
    %213 = tpu.matmul %212, %79, %cst_93 {dimension_numbers = #tpu.dot_dimension_numbers<[1], [0], [0], [1], [0, 0, 1, 1], [], []>} : vector<16x16xf32>, vector<16x96xf32>, vector<16x96xf32> -> vector<16x96xf32>
    %214 = vector.extract_strided_slice %213 {offsets = [0, 0], sizes = [8, 48], strides = [1, 1]} : vector<16x96xf32> to vector<8x48xf32>
    %215 = vector.broadcast %80 : vector<1x48xf32> to vector<8x48xf32>
    %216 = arith.addf %214, %215 : vector<8x48xf32>
    %217 = vector.extract_strided_slice %213 {offsets = [8, 48], sizes = [8, 48], strides = [1, 1]} : vector<16x96xf32> to vector<8x48xf32>
    %218 = vector.broadcast %81 : vector<1x48xf32> to vector<8x48xf32>
    %219 = arith.addf %217, %218 : vector<8x48xf32>
    %220 = vector.extract_strided_slice %216 {offsets = [0, 0], sizes = [8, 16], strides = [1, 1]} : vector<8x48xf32> to vector<8x16xf32>
    %221 = vector.extract_strided_slice %219 {offsets = [0, 0], sizes = [8, 16], strides = [1, 1]} : vector<8x48xf32> to vector<8x16xf32>
    %222 = arith.addf %220, %221 : vector<8x16xf32>
    %223 = arith.negf %222 : vector<8x16xf32>
    %224 = math.exp %223 : vector<8x16xf32>
    %cst_94 = arith.constant 1.000000e+00 : f32
    %225 = vector.broadcast %cst_94 : f32 to vector<8x16xf32>
    %226 = arith.addf %225, %224 : vector<8x16xf32>
    %227 = arith.divf %225, %226 : vector<8x16xf32>
    %228 = vector.extract_strided_slice %216 {offsets = [0, 16], sizes = [8, 16], strides = [1, 1]} : vector<8x48xf32> to vector<8x16xf32>
    %229 = vector.extract_strided_slice %219 {offsets = [0, 16], sizes = [8, 16], strides = [1, 1]} : vector<8x48xf32> to vector<8x16xf32>
    %230 = arith.addf %228, %229 : vector<8x16xf32>
    %231 = arith.negf %230 : vector<8x16xf32>
    %232 = math.exp %231 : vector<8x16xf32>
    %cst_95 = arith.constant 1.000000e+00 : f32
    %233 = vector.broadcast %cst_95 : f32 to vector<8x16xf32>
    %234 = arith.addf %233, %232 : vector<8x16xf32>
    %235 = arith.divf %233, %234 : vector<8x16xf32>
    %236 = vector.extract_strided_slice %216 {offsets = [0, 32], sizes = [8, 16], strides = [1, 1]} : vector<8x48xf32> to vector<8x16xf32>
    %237 = vector.extract_strided_slice %219 {offsets = [0, 32], sizes = [8, 16], strides = [1, 1]} : vector<8x48xf32> to vector<8x16xf32>
    %238 = arith.mulf %227, %237 : vector<8x16xf32>
    %239 = arith.addf %236, %238 : vector<8x16xf32>
    %240 = math.tanh %239 : vector<8x16xf32>
    %cst_96 = arith.constant 1.000000e+00 : f32
    %241 = vector.broadcast %cst_96 : f32 to vector<8x16xf32>
    %242 = arith.subf %241, %235 : vector<8x16xf32>
    %243 = arith.mulf %242, %240 : vector<8x16xf32>
    %244 = arith.mulf %235, %204 : vector<8x16xf32>
    %245 = arith.addf %243, %244 : vector<8x16xf32>
    %cst_97 = arith.constant dense<0.000000e+00> : vector<16x16xf32>
    %246 = tpu.matmul %74, %245, %cst_97 {dimension_numbers = #tpu.dot_dimension_numbers<[1], [0], [0], [1], [0, 0, 1, 1], [], []>} : vector<16x8xf32>, vector<8x16xf32>, vector<16x16xf32> -> vector<16x16xf32>
    %cst_98 = arith.constant dense<0.000000e+00> : vector<16x256xf32>
    %247 = tpu.matmul %246, %76, %cst_98 {dimension_numbers = #tpu.dot_dimension_numbers<[1], [0], [0], [1], [0, 0, 1, 1], [], []>} : vector<16x16xf32>, vector<16x256xf32>, vector<16x256xf32> -> vector<16x256xf32>
    %248 = arith.mulf %247, %77 : vector<16x256xf32>
    %cst_99 = arith.constant dense<0.000000e+00> : vector<16x16xf32>
    %249 = tpu.matmul %248, %73, %cst_99 {dimension_numbers = #tpu.dot_dimension_numbers<[1], [0], [0], [1], [0, 0, 1, 1], [], []>} : vector<16x256xf32>, vector<256x16xf32>, vector<16x16xf32> -> vector<16x16xf32>
    %cst_100 = arith.constant dense<0.000000e+00> : vector<8x16xf32>
    %250 = tpu.matmul %75, %249, %cst_100 {dimension_numbers = #tpu.dot_dimension_numbers<[1], [0], [0], [1], [0, 0, 1, 1], [], []>} : vector<8x16xf32>, vector<16x16xf32>, vector<8x16xf32> -> vector<8x16xf32>
    %251 = vector.broadcast %78 : vector<1x16xf32> to vector<8x16xf32>
    %252 = arith.addf %250, %251 : vector<8x16xf32>
    %253 = tpu.concatenate %252, %245 in 0 : vector<8x16xf32>, vector<8x16xf32> -> vector<16x16xf32>
    %cst_101 = arith.constant dense<0.000000e+00> : vector<16x96xf32>
    %254 = tpu.matmul %253, %79, %cst_101 {dimension_numbers = #tpu.dot_dimension_numbers<[1], [0], [0], [1], [0, 0, 1, 1], [], []>} : vector<16x16xf32>, vector<16x96xf32>, vector<16x96xf32> -> vector<16x96xf32>
    %255 = vector.extract_strided_slice %254 {offsets = [0, 0], sizes = [8, 48], strides = [1, 1]} : vector<16x96xf32> to vector<8x48xf32>
    %256 = vector.broadcast %80 : vector<1x48xf32> to vector<8x48xf32>
    %257 = arith.addf %255, %256 : vector<8x48xf32>
    %258 = vector.extract_strided_slice %254 {offsets = [8, 48], sizes = [8, 48], strides = [1, 1]} : vector<16x96xf32> to vector<8x48xf32>
    %259 = vector.broadcast %81 : vector<1x48xf32> to vector<8x48xf32>
    %260 = arith.addf %258, %259 : vector<8x48xf32>
    %261 = vector.extract_strided_slice %257 {offsets = [0, 0], sizes = [8, 16], strides = [1, 1]} : vector<8x48xf32> to vector<8x16xf32>
    %262 = vector.extract_strided_slice %260 {offsets = [0, 0], sizes = [8, 16], strides = [1, 1]} : vector<8x48xf32> to vector<8x16xf32>
    %263 = arith.addf %261, %262 : vector<8x16xf32>
    %264 = arith.negf %263 : vector<8x16xf32>
    %265 = math.exp %264 : vector<8x16xf32>
    %cst_102 = arith.constant 1.000000e+00 : f32
    %266 = vector.broadcast %cst_102 : f32 to vector<8x16xf32>
    %267 = arith.addf %266, %265 : vector<8x16xf32>
    %268 = arith.divf %266, %267 : vector<8x16xf32>
    %269 = vector.extract_strided_slice %257 {offsets = [0, 16], sizes = [8, 16], strides = [1, 1]} : vector<8x48xf32> to vector<8x16xf32>
    %270 = vector.extract_strided_slice %260 {offsets = [0, 16], sizes = [8, 16], strides = [1, 1]} : vector<8x48xf32> to vector<8x16xf32>
    %271 = arith.addf %269, %270 : vector<8x16xf32>
    %272 = arith.negf %271 : vector<8x16xf32>
    %273 = math.exp %272 : vector<8x16xf32>
    %cst_103 = arith.constant 1.000000e+00 : f32
    %274 = vector.broadcast %cst_103 : f32 to vector<8x16xf32>
    %275 = arith.addf %274, %273 : vector<8x16xf32>
    %276 = arith.divf %274, %275 : vector<8x16xf32>
    %277 = vector.extract_strided_slice %257 {offsets = [0, 32], sizes = [8, 16], strides = [1, 1]} : vector<8x48xf32> to vector<8x16xf32>
    %278 = vector.extract_strided_slice %260 {offsets = [0, 32], sizes = [8, 16], strides = [1, 1]} : vector<8x48xf32> to vector<8x16xf32>
    %279 = arith.mulf %268, %278 : vector<8x16xf32>
    %280 = arith.addf %277, %279 : vector<8x16xf32>
    %281 = math.tanh %280 : vector<8x16xf32>
    %cst_104 = arith.constant 1.000000e+00 : f32
    %282 = vector.broadcast %cst_104 : f32 to vector<8x16xf32>
    %283 = arith.subf %282, %276 : vector<8x16xf32>
    %284 = arith.mulf %283, %281 : vector<8x16xf32>
    %285 = arith.mulf %276, %245 : vector<8x16xf32>
    %286 = arith.addf %284, %285 : vector<8x16xf32>
    %c0_105 = arith.constant 0 : index
    %c0_106 = arith.constant 0 : index
    %287 = vector.load %arg26[%c0_105, %c0_106] : memref<96x32xf32, #tpu.memory_space<vmem>>, vector<96x32xf32>
    %c0_107 = arith.constant 0 : index
    %c0_108 = arith.constant 0 : index
    %288 = vector.load %arg27[%c0_107, %c0_108] : memref<1x32xf32, #tpu.memory_space<vmem>>, vector<1x32xf32>
    %289 = vector.extract_strided_slice %287 {offsets = [0, 0], sizes = [16, 32], strides = [1, 1]} : vector<96x32xf32> to vector<16x32xf32>
    %cst_109 = arith.constant dense<0.000000e+00> : vector<8x32xf32>
    %290 = tpu.matmul %27, %289, %cst_109 {dimension_numbers = #tpu.dot_dimension_numbers<[1], [0], [0], [1], [0, 0, 1, 1], [], []>} : vector<8x16xf32>, vector<16x32xf32>, vector<8x32xf32> -> vector<8x32xf32>
    %291 = vector.broadcast %288 : vector<1x32xf32> to vector<8x32xf32>
    %292 = arith.addf %291, %290 : vector<8x32xf32>
    %293 = vector.extract_strided_slice %287 {offsets = [16, 0], sizes = [16, 32], strides = [1, 1]} : vector<96x32xf32> to vector<16x32xf32>
    %cst_110 = arith.constant dense<0.000000e+00> : vector<8x32xf32>
    %294 = tpu.matmul %122, %293, %cst_110 {dimension_numbers = #tpu.dot_dimension_numbers<[1], [0], [0], [1], [0, 0, 1, 1], [], []>} : vector<8x16xf32>, vector<16x32xf32>, vector<8x32xf32> -> vector<8x32xf32>
    %295 = arith.addf %292, %294 : vector<8x32xf32>
    %296 = vector.extract_strided_slice %287 {offsets = [32, 0], sizes = [16, 32], strides = [1, 1]} : vector<96x32xf32> to vector<16x32xf32>
    %cst_111 = arith.constant dense<0.000000e+00> : vector<8x32xf32>
    %297 = tpu.matmul %163, %296, %cst_111 {dimension_numbers = #tpu.dot_dimension_numbers<[1], [0], [0], [1], [0, 0, 1, 1], [], []>} : vector<8x16xf32>, vector<16x32xf32>, vector<8x32xf32> -> vector<8x32xf32>
    %298 = arith.addf %295, %297 : vector<8x32xf32>
    %299 = vector.extract_strided_slice %287 {offsets = [48, 0], sizes = [16, 32], strides = [1, 1]} : vector<96x32xf32> to vector<16x32xf32>
    %cst_112 = arith.constant dense<0.000000e+00> : vector<8x32xf32>
    %300 = tpu.matmul %204, %299, %cst_112 {dimension_numbers = #tpu.dot_dimension_numbers<[1], [0], [0], [1], [0, 0, 1, 1], [], []>} : vector<8x16xf32>, vector<16x32xf32>, vector<8x32xf32> -> vector<8x32xf32>
    %301 = arith.addf %298, %300 : vector<8x32xf32>
    %302 = vector.extract_strided_slice %287 {offsets = [64, 0], sizes = [16, 32], strides = [1, 1]} : vector<96x32xf32> to vector<16x32xf32>
    %cst_113 = arith.constant dense<0.000000e+00> : vector<8x32xf32>
    %303 = tpu.matmul %245, %302, %cst_113 {dimension_numbers = #tpu.dot_dimension_numbers<[1], [0], [0], [1], [0, 0, 1, 1], [], []>} : vector<8x16xf32>, vector<16x32xf32>, vector<8x32xf32> -> vector<8x32xf32>
    %304 = arith.addf %301, %303 : vector<8x32xf32>
    %305 = vector.extract_strided_slice %287 {offsets = [80, 0], sizes = [16, 32], strides = [1, 1]} : vector<96x32xf32> to vector<16x32xf32>
    %cst_114 = arith.constant dense<0.000000e+00> : vector<8x32xf32>
    %306 = tpu.matmul %286, %305, %cst_114 {dimension_numbers = #tpu.dot_dimension_numbers<[1], [0], [0], [1], [0, 0, 1, 1], [], []>} : vector<8x16xf32>, vector<16x32xf32>, vector<8x32xf32> -> vector<8x32xf32>
    %307 = arith.addf %304, %306 : vector<8x32xf32>
    %cst_115 = arith.constant 0.000000e+00 : f32
    %308 = vector.broadcast %cst_115 : f32 to vector<8x32xf32>
    %309 = arith.cmpf oge, %307, %308 : vector<8x32xf32>
    %c0_116 = arith.constant 0 : index
    %310 = memref.load %arg34[%c0_116] : memref<3xf32, #tpu.memory_space<smem>>
    %311 = vector.broadcast %310 : f32 to vector<8x32xf32>
    %312 = arith.mulf %311, %307 : vector<8x32xf32>
    %313 = arith.select %309, %307, %312 : vector<8x32xi1>, vector<8x32xf32>
    %c0_117 = arith.constant 0 : index
    %c0_118 = arith.constant 0 : index
    %314 = vector.load %arg28[%c0_117, %c0_118] : memref<32x32xf32, #tpu.memory_space<vmem>>, vector<32x32xf32>
    %cst_119 = arith.constant dense<0.000000e+00> : vector<8x32xf32>
    %315 = tpu.matmul %313, %314, %cst_119 {dimension_numbers = #tpu.dot_dimension_numbers<[1], [0], [0], [1], [0, 0, 1, 1], [], []>} : vector<8x32xf32>, vector<32x32xf32>, vector<8x32xf32> -> vector<8x32xf32>
    %c0_120 = arith.constant 0 : index
    %c0_121 = arith.constant 0 : index
    %316 = vector.load %arg29[%c0_120, %c0_121] : memref<1x32xf32, #tpu.memory_space<vmem>>, vector<1x32xf32>
    %317 = vector.broadcast %316 : vector<1x32xf32> to vector<8x32xf32>
    %318 = arith.addf %315, %317 : vector<8x32xf32>
    %cst_122 = arith.constant 0.000000e+00 : f32
    %319 = vector.broadcast %cst_122 : f32 to vector<8x32xf32>
    %320 = arith.cmpf oge, %318, %319 : vector<8x32xf32>
    %c1 = arith.constant 1 : index
    %321 = memref.load %arg34[%c1] : memref<3xf32, #tpu.memory_space<smem>>
    %322 = vector.broadcast %321 : f32 to vector<8x32xf32>
    %323 = arith.mulf %322, %318 : vector<8x32xf32>
    %324 = arith.select %320, %318, %323 : vector<8x32xi1>, vector<8x32xf32>
    %c0_123 = arith.constant 0 : index
    %c0_124 = arith.constant 0 : index
    %325 = vector.load %arg30[%c0_123, %c0_124] : memref<32x32xf32, #tpu.memory_space<vmem>>, vector<32x32xf32>
    %cst_125 = arith.constant dense<0.000000e+00> : vector<8x32xf32>
    %326 = tpu.matmul %324, %325, %cst_125 {dimension_numbers = #tpu.dot_dimension_numbers<[1], [0], [0], [1], [0, 0, 1, 1], [], []>} : vector<8x32xf32>, vector<32x32xf32>, vector<8x32xf32> -> vector<8x32xf32>
    %c0_126 = arith.constant 0 : index
    %c0_127 = arith.constant 0 : index
    %327 = vector.load %arg31[%c0_126, %c0_127] : memref<1x32xf32, #tpu.memory_space<vmem>>, vector<1x32xf32>
    %328 = vector.broadcast %327 : vector<1x32xf32> to vector<8x32xf32>
    %329 = arith.addf %326, %328 : vector<8x32xf32>
    %cst_128 = arith.constant 0.000000e+00 : f32
    %330 = vector.broadcast %cst_128 : f32 to vector<8x32xf32>
    %331 = arith.cmpf oge, %329, %330 : vector<8x32xf32>
    %c2 = arith.constant 2 : index
    %332 = memref.load %arg34[%c2] : memref<3xf32, #tpu.memory_space<smem>>
    %333 = vector.broadcast %332 : f32 to vector<8x32xf32>
    %334 = arith.mulf %333, %329 : vector<8x32xf32>
    %335 = arith.select %331, %329, %334 : vector<8x32xi1>, vector<8x32xf32>
    %c0_129 = arith.constant 0 : index
    %c0_130 = arith.constant 0 : index
    %336 = vector.load %arg32[%c0_129, %c0_130] : memref<32x1xf32, #tpu.memory_space<vmem>>, vector<32x1xf32>
    %cst_131 = arith.constant dense<0.000000e+00> : vector<8x1xf32>
    %337 = tpu.matmul %335, %336, %cst_131 {dimension_numbers = #tpu.dot_dimension_numbers<[1], [0], [0], [1], [0, 0, 1, 1], [], []>} : vector<8x32xf32>, vector<32x1xf32>, vector<8x1xf32> -> vector<8x1xf32>
    %c0_132 = arith.constant 0 : index
    %c0_133 = arith.constant 0 : index
    %338 = vector.load %arg33[%c0_132, %c0_133] : memref<1x1xf32, #tpu.memory_space<vmem>>, vector<1x1xf32>
    %339 = vector.broadcast %338 : vector<1x1xf32> to vector<8x1xf32>
    %340 = arith.addf %337, %339 : vector<8x1xf32>
    %c0_134 = arith.constant 0 : index
    %c0_135 = arith.constant 0 : index
    %341 = vector.load %arg35[%c0_134, %c0_135] : memref<8x1xf32, #tpu.memory_space<vmem>>, vector<8x1xf32>
    tpu.vector_store %arg35[%c0_134, %c0_135], %340 {strides = array<i32>} : memref<8x1xf32, #tpu.memory_space<vmem>>, vector<8x1xf32>,
    return
  }
}

</mosaic_0001>

<llo_original>
// kernel: forward.1
$region0: #{forward.1}
  #allocation0 [shape = 'u32[]', space=smem, size = 0x4, offset = 0x4, fixed_abs, tag = 'smem constant byte address 0x4 - core index']
  #allocation1 [shape = 'u32[144,128]{1,0:T(1,128)}', space=vmem, size = 0x12000, scoped, tag = 'internal scratch']
  #allocation2 [shape = 'f32[1,1]{1,0:T(1,128)S(1)}', space=vmem, size = 0x200, scoped, tag = 'scoped memory for forward.1']
  %s0 = inlined_call_operand.smem [shape: u32[36], index: -1, kind: input, shape index: {}]
  %s1 = sld [smem:[%s0]]
  %s2 = scalar_lea.smem %s0, 1
  %s3 = sld [smem:[%s2]]
  %s4 = scalar_lea.smem %s0, 2
  %s5 = sld [smem:[%s4]]
  %s6 = scalar_lea.smem %s0, 3
  %s7 = sld [smem:[%s6]]
  %s8 = scalar_lea.smem %s0, 4
  %s9 = sld [smem:[%s8]]
  %s10 = scalar_lea.smem %s0, 5
  %s11 = sld [smem:[%s10]]
  %s12 = scalar_lea.smem %s0, 6
  %s13 = sld [smem:[%s12]]
  %s14 = scalar_lea.smem %s0, 7
  %s15 = sld [smem:[%s14]]
  %s16 = scalar_lea.smem %s0, 8
  %s17 = sld [smem:[%s16]]
  %s18 = scalar_lea.smem %s0, 9
  %s19 = sld [smem:[%s18]]
  %s20 = scalar_lea.smem %s0, 10
  %s21 = sld [smem:[%s20]]
  %s22 = scalar_lea.smem %s0, 11
  %s23 = sld [smem:[%s22]]
  %s24 = scalar_lea.smem %s0, 12
  %s25 = sld [smem:[%s24]]
  %s26 = scalar_lea.smem %s0, 13
  %s27 = sld [smem:[%s26]]
  %s28 = scalar_lea.smem %s0, 14
  %s29 = sld [smem:[%s28]]
  %s30 = scalar_lea.smem %s0, 15
  %s31 = sld [smem:[%s30]]
  %s32 = scalar_lea.smem %s0, 16
  %s33 = sld [smem:[%s32]]
  %s34 = scalar_lea.smem %s0, 17
  %s35 = sld [smem:[%s34]]
  %s36 = scalar_lea.smem %s0, 18
  %s37 = sld [smem:[%s36]]
  %s38 = scalar_lea.smem %s0, 19
  %s39 = sld [smem:[%s38]]
  %s40 = scalar_lea.smem %s0, 20
  %s41 = sld [smem:[%s40]]
  %s42 = scalar_lea.smem %s0, 21
  %s43 = sld [smem:[%s42]]
  %s44 = scalar_lea.smem %s0, 22
  %s45 = sld [smem:[%s44]]
  %s46 = scalar_lea.smem %s0, 23
  %s47 = sld [smem:[%s46]]
  %s48 = scalar_lea.smem %s0, 24
  %s49 = sld [smem:[%s48]]
  %s50 = scalar_lea.smem %s0, 25
  %s51 = sld [smem:[%s50]]
  %s52 = scalar_lea.smem %s0, 26
  %s53 = sld [smem:[%s52]]
  %s54 = scalar_lea.smem %s0, 27
  %s55 = sld [smem:[%s54]]
  %s56 = scalar_lea.smem %s0, 28
  %s57 = sld [smem:[%s56]]
  %s58 = scalar_lea.smem %s0, 29
  %s59 = sld [smem:[%s58]]
  %s60 = scalar_lea.smem %s0, 30
  %s61 = sld [smem:[%s60]]
  %s62 = scalar_lea.smem %s0, 31
  %s63 = sld [smem:[%s62]]
  %s64 = scalar_lea.smem %s0, 32
  %s65 = sld [smem:[%s64]]
  %s66 = scalar_lea.smem %s0, 33
  %s67 = sld [smem:[%s66]]
  %s68 = scalar_lea.smem %s0, 34
  %s69 = sld [smem:[%s68]]
  %s70 = scalar_lea.smem %s0, 35
  %s71 = sld [smem:[%s70]]
  %s72 = sld [smem:[#allocation0]]
  $region214: #{forward.1} parent=0
    _
  %s74 = ssub.s32 1, %s72
  %s75 = scalar_select 0, %s74, %s72
  %v76 = vstv %s67
  %77 = vst [vmem:[#allocation2] sm:$0x1] %v76
  $region1: #{forward.1} parent=0
    #allocation3 [shape = 'u8[8192]{0}', space=vmem, size = 0x2000, scoped, tag = 'input window, operand 6, single buffered']
    #allocation4 [shape = 's32[1]{0}', space=sflag, size = 0x4, scoped, tag = 'scoped memory for forward.1']
    #allocation5 [shape = 's32[1]{0}', space=sflag, size = 0x4, scoped, tag = 'scoped memory for forward.1']
    #allocation6 [shape = 'u8[512]{0}', space=vmem, size = 0x400, scoped, tag = 'input window, operand 7, single buffered']
    #allocation7 [shape = 's32[1]{0}', space=sflag, size = 0x4, scoped, tag = 'scoped memory for forward.1']
    #allocation8 [shape = 'u8[512]{0}', space=vmem, size = 0x400, scoped, tag = 'input window, operand 9, single buffered']
    #allocation9 [shape = 'u8[512]{0}', space=vmem, size = 0x400, scoped, tag = 'input window, operand 11, single buffered']
    #allocation10 [shape = 's32[1]{0}', space=sflag, size = 0x4, scoped, tag = 'scoped memory for forward.1']
    #allocation11 [shape = 'u8[512]{0}', space=vmem, size = 0x400, scoped, tag = 'input window, operand 13, single buffered']
    #allocation12 [shape = 'u8[4096]{0}', space=vmem, size = 0x1000, scoped, tag = 'input window, operand 14, single buffered']
    #allocation13 [shape = 's32[1]{0}', space=sflag, size = 0x4, scoped, tag = 'scoped memory for forward.1']
    #allocation14 [shape = 'u8[512]{0}', space=vmem, size = 0x400, scoped, tag = 'input window, operand 15, single buffered']
    #allocation15 [shape = 'u8[512]{0}', space=vmem, size = 0x400, scoped, tag = 'input window, operand 17, single buffered']
    #allocation16 [shape = 's32[1]{0}', space=sflag, size = 0x4, scoped, tag = 'scoped memory for forward.1']
    #allocation17 [shape = 'u8[512]{0}', space=vmem, size = 0x400, scoped, tag = 'input window, operand 19, single buffered']
    #allocation18 [shape = 'u8[1024]{0}', space=vmem, size = 0x400, scoped, tag = 'input window, operand 21, single buffered']
    #allocation19 [shape = 's32[1]{0}', space=sflag, size = 0x4, scoped, tag = 'scoped memory for forward.1']
    #allocation20 [shape = 'u8[512]{0}', space=vmem, size = 0x400, scoped, tag = 'input window, operand 22, single buffered']
    #allocation21 [shape = 'u8[8192]{0}', space=vmem, size = 0x2000, scoped, tag = 'input window, operand 23, single buffered']
    #allocation22 [shape = 's32[1]{0}', space=sflag, size = 0x4, scoped, tag = 'scoped memory for forward.1']
    #allocation23 [shape = 'u8[512]{0}', space=vmem, size = 0x400, scoped, tag = 'input window, operand 24, single buffered']
    #allocation24 [shape = 'u8[512]{0}', space=vmem, size = 0x400, scoped, tag = 'input window, operand 25, single buffered']
    #allocation25 [shape = 's32[1]{0}', space=sflag, size = 0x4, scoped, tag = 'scoped memory for forward.1']
    #allocation26 [shape = 'u8[512]{0}', space=vmem, size = 0x400, scoped, tag = 'input window, operand 27, single buffered']
    #allocation27 [shape = 'u8[512]{0}', space=smem, size = 0x200, scoped, tag = 'input window, operand 34, single buffered']
    %78 = vsyncpa [#allocation4], 0
    %79 = vsyncpa [#allocation7], 0
    %80 = vsyncpa [#allocation10], 0
    %81 = vsyncpa [#allocation13], 0
    %82 = vsyncpa [#allocation16], 0
    %83 = vsyncpa [#allocation19], 0
    %84 = vsyncpa [#allocation22], 0
    %85 = vsyncpa [#allocation25], 0
    %86 = vsyncpa [#allocation5], 0
    // Predicated region
    $region2: #{forward.1} parent=1 // pred_check
      _
    $region3: #{forward.1} parent=1 // pred_check_branch
      %88 = sbr.rel (0) target = $region5
    $region4: #{forward.1} parent=1 // pred_region
      _
    $region5: #{forward.1} parent=1 // pred_fallthru
      _
    // Predicated region
    $region6: #{forward.1} parent=1 // pred_check
      _
    $region7: #{forward.1} parent=1 // pred_check_branch
      %90 = sbr.rel (0) target = $region9
    $region8: #{forward.1} parent=1 // pred_region
      _
    $region9: #{forward.1} parent=1 // pred_fallthru
      _
    // Predicated region
    $region10: #{forward.1} parent=1 // pred_check
      _
    $region11: #{forward.1} parent=1 // pred_check_branch
      %92 = sbr.rel (0) target = $region13
    $region12: #{forward.1} parent=1 // pred_region
      _
    $region13: #{forward.1} parent=1 // pred_fallthru
      _
    // Predicated region
    $region14: #{forward.1} parent=1 // pred_check
      _
    $region15: #{forward.1} parent=1 // pred_check_branch
      %94 = sbr.rel (0) target = $region17
    $region16: #{forward.1} parent=1 // pred_region
      _
    $region17: #{forward.1} parent=1 // pred_fallthru
      _
    // Predicated region
    $region18: #{forward.1} parent=1 // pred_check
      _
    $region19: #{forward.1} parent=1 // pred_check_branch
      %96 = sbr.rel (0) target = $region21
    $region20: #{forward.1} parent=1 // pred_region
      _
    $region21: #{forward.1} parent=1 // pred_fallthru
      _
    // Predicated region
    $region22: #{forward.1} parent=1 // pred_check
      _
    $region23: #{forward.1} parent=1 // pred_check_branch
      %98 = sbr.rel (0) target = $region25
    $region24: #{forward.1} parent=1 // pred_region
      _
    $region25: #{forward.1} parent=1 // pred_fallthru
      _
    // Predicated region
    $region26: #{forward.1} parent=1 // pred_check
      _
    $region27: #{forward.1} parent=1 // pred_check_branch
      %100 = sbr.rel (0) target = $region29
    $region28: #{forward.1} parent=1 // pred_region
      %s102 = ssub.s32 256, 256
      %103 = vsyncadd [#allocation4], %s102
      %s104 = sshll.u32 [#allocation3], 4
      %s105 = int_to_ptr.vmem [resolvable:$true] %s104
      %110 = dma.hbm_to_vmem [thread:$0]  %s13, 256, %s105, [#allocation4], 128, 128, 8
    $region29: #{forward.1} parent=1 // pred_fallthru
      _
    // Predicated region
    $region30: #{forward.1} parent=1 // pred_check
      _
    $region31: #{forward.1} parent=1 // pred_check_branch
      %112 = sbr.rel (0) target = $region33
    $region32: #{forward.1} parent=1 // pred_region
      %s114 = ssub.s32 16, 16
      %115 = vsyncadd [#allocation7], %s114
      %s117 = sshll.u32 [#allocation6], 4
      %s118 = int_to_ptr.vmem [resolvable:$true] %s117
      %120 = dma.hbm_to_vmem [thread:$0]  %s15, 16, %s118, [#allocation7]
    $region33: #{forward.1} parent=1 // pred_fallthru
      _
    // Predicated region
    $region34: #{forward.1} parent=1 // pred_check
      _
    $region35: #{forward.1} parent=1 // pred_check_branch
      %122 = sbr.rel (0) target = $region37
    $region36: #{forward.1} parent=1 // pred_region
      _
    $region37: #{forward.1} parent=1 // pred_fallthru
      _
    // Predicated region
    $region38: #{forward.1} parent=1 // pred_check
      _
    $region39: #{forward.1} parent=1 // pred_check_branch
      %124 = sbr.rel (0) target = $region41
    $region40: #{forward.1} parent=1 // pred_region
      %s126 = ssub.s32 16, 16
      %127 = vsyncadd [#allocation7], %s126
      %s129 = sshll.u32 [#allocation8], 4
      %s130 = int_to_ptr.vmem [resolvable:$true] %s129
      %132 = dma.hbm_to_vmem [thread:$0]  %s19, 16, %s130, [#allocation7]
    $region41: #{forward.1} parent=1 // pred_fallthru
      _
    // Predicated region
    $region42: #{forward.1} parent=1 // pred_check
      _
    $region43: #{forward.1} parent=1 // pred_check_branch
      %134 = sbr.rel (0) target = $region45
    $region44: #{forward.1} parent=1 // pred_region
      _
    $region45: #{forward.1} parent=1 // pred_fallthru
      _
    // Predicated region
    $region46: #{forward.1} parent=1 // pred_check
      _
    $region47: #{forward.1} parent=1 // pred_check_branch
      %136 = sbr.rel (0) target = $region49
    $region48: #{forward.1} parent=1 // pred_region
      %s138 = ssub.s32 16, 16
      %139 = vsyncadd [#allocation10], %s138
      %s141 = sshll.u32 [#allocation9], 4
      %s142 = int_to_ptr.vmem [resolvable:$true] %s141
      %144 = dma.hbm_to_vmem [thread:$0]  %s23, 16, %s142, [#allocation10]
    $region49: #{forward.1} parent=1 // pred_fallthru
      _
    // Predicated region
    $region50: #{forward.1} parent=1 // pred_check
      _
    $region51: #{forward.1} parent=1 // pred_check_branch
      %146 = sbr.rel (0) target = $region53
    $region52: #{forward.1} parent=1 // pred_region
      _
    $region53: #{forward.1} parent=1 // pred_fallthru
      _
    // Predicated region
    $region54: #{forward.1} parent=1 // pred_check
      _
    $region55: #{forward.1} parent=1 // pred_check_branch
      %148 = sbr.rel (0) target = $region57
    $region56: #{forward.1} parent=1 // pred_region
      %s150 = ssub.s32 16, 16
      %151 = vsyncadd [#allocation10], %s150
      %s153 = sshll.u32 [#allocation11], 4
      %s154 = int_to_ptr.vmem [resolvable:$true] %s153
      %156 = dma.hbm_to_vmem [thread:$0]  %s27, 16, %s154, [#allocation10]
    $region57: #{forward.1} parent=1 // pred_fallthru
      _
    // Predicated region
    $region58: #{forward.1} parent=1 // pred_check
      _
    $region59: #{forward.1} parent=1 // pred_check_branch
      %158 = sbr.rel (0) target = $region61
    $region60: #{forward.1} parent=1 // pred_region
      %s160 = ssub.s32 128, 128
      %161 = vsyncadd [#allocation13], %s160
      %s163 = sshll.u32 [#allocation12], 4
      %s164 = int_to_ptr.vmem [resolvable:$true] %s163
      %166 = dma.hbm_to_vmem [thread:$0]  %s29, 128, %s164, [#allocation13]
    $region61: #{forward.1} parent=1 // pred_fallthru
      _
    // Predicated region
    $region62: #{forward.1} parent=1 // pred_check
      _
    $region63: #{forward.1} parent=1 // pred_check_branch
      %168 = sbr.rel (0) target = $region65
    $region64: #{forward.1} parent=1 // pred_region
      %s170 = ssub.s32 16, 16
      %171 = vsyncadd [#allocation13], %s170
      %s173 = sshll.u32 [#allocation14], 4
      %s174 = int_to_ptr.vmem [resolvable:$true] %s173
      %176 = dma.hbm_to_vmem [thread:$0]  %s31, 16, %s174, [#allocation13]
    $region65: #{forward.1} parent=1 // pred_fallthru
      _
    // Predicated region
    $region66: #{forward.1} parent=1 // pred_check
      _
    $region67: #{forward.1} parent=1 // pred_check_branch
      %178 = sbr.rel (0) target = $region69
    $region68: #{forward.1} parent=1 // pred_region
      _
    $region69: #{forward.1} parent=1 // pred_fallthru
      _
    // Predicated region
    $region70: #{forward.1} parent=1 // pred_check
      _
    $region71: #{forward.1} parent=1 // pred_check_branch
      %180 = sbr.rel (0) target = $region73
    $region72: #{forward.1} parent=1 // pred_region
      %s182 = ssub.s32 16, 16
      %183 = vsyncadd [#allocation16], %s182
      %s185 = sshll.u32 [#allocation15], 4
      %s186 = int_to_ptr.vmem [resolvable:$true] %s185
      %188 = dma.hbm_to_vmem [thread:$0]  %s35, 16, %s186, [#allocation16]
    $region73: #{forward.1} parent=1 // pred_fallthru
      _
    // Predicated region
    $region74: #{forward.1} parent=1 // pred_check
      _
    $region75: #{forward.1} parent=1 // pred_check_branch
      %190 = sbr.rel (0) target = $region77
    $region76: #{forward.1} parent=1 // pred_region
      _
    $region77: #{forward.1} parent=1 // pred_fallthru
      _
    // Predicated region
    $region78: #{forward.1} parent=1 // pred_check
      _
    $region79: #{forward.1} parent=1 // pred_check_branch
      %192 = sbr.rel (0) target = $region81
    $region80: #{forward.1} parent=1 // pred_region
      %s194 = ssub.s32 16, 16
      %195 = vsyncadd [#allocation16], %s194
      %s197 = sshll.u32 [#allocation17], 4
      %s198 = int_to_ptr.vmem [resolvable:$true] %s197
      %200 = dma.hbm_to_vmem [thread:$0]  %s39, 16, %s198, [#allocation16]
    $region81: #{forward.1} parent=1 // pred_fallthru
      _
    // Predicated region
    $region82: #{forward.1} parent=1 // pred_check
      _
    $region83: #{forward.1} parent=1 // pred_check_branch
      %202 = sbr.rel (0) target = $region85
    $region84: #{forward.1} parent=1 // pred_region
      _
    $region85: #{forward.1} parent=1 // pred_fallthru
      _
    // Predicated region
    $region86: #{forward.1} parent=1 // pred_check
      _
    $region87: #{forward.1} parent=1 // pred_check_branch
      %204 = sbr.rel (0) target = $region89
    $region88: #{forward.1} parent=1 // pred_region
      %s206 = ssub.s32 32, 32
      %207 = vsyncadd [#allocation19], %s206
      %s209 = sshll.u32 [#allocation18], 4
      %s210 = int_to_ptr.vmem [resolvable:$true] %s209
      %212 = dma.hbm_to_vmem [thread:$0]  %s43, 32, %s210, [#allocation19]
    $region89: #{forward.1} parent=1 // pred_fallthru
      _
    // Predicated region
    $region90: #{forward.1} parent=1 // pred_check
      _
    $region91: #{forward.1} parent=1 // pred_check_branch
      %214 = sbr.rel (0) target = $region93
    $region92: #{forward.1} parent=1 // pred_region
      %s216 = ssub.s32 16, 16
      %217 = vsyncadd [#allocation19], %s216
      %s219 = sshll.u32 [#allocation20], 4
      %s220 = int_to_ptr.vmem [resolvable:$true] %s219
      %222 = dma.hbm_to_vmem [thread:$0]  %s45, 16, %s220, [#allocation19]
    $region93: #{forward.1} parent=1 // pred_fallthru
      _
    // Predicated region
    $region94: #{forward.1} parent=1 // pred_check
      _
    $region95: #{forward.1} parent=1 // pred_check_branch
      %224 = sbr.rel (0) target = $region97
    $region96: #{forward.1} parent=1 // pred_region
      %s226 = ssub.s32 256, 256
      %227 = vsyncadd [#allocation22], %s226
      %s228 = sshll.u32 [#allocation21], 4
      %s229 = int_to_ptr.vmem [resolvable:$true] %s228
      %234 = dma.hbm_to_vmem [thread:$0]  %s47, 256, %s229, [#allocation22], 128, 128, 8
    $region97: #{forward.1} parent=1 // pred_fallthru
      _
    // Predicated region
    $region98: #{forward.1} parent=1 // pred_check
      _
    $region99: #{forward.1} parent=1 // pred_check_branch
      %236 = sbr.rel (0) target = $region101
    $region100: #{forward.1} parent=1 // pred_region
      %s238 = ssub.s32 16, 16
      %239 = vsyncadd [#allocation22], %s238
      %s241 = sshll.u32 [#allocation23], 4
      %s242 = int_to_ptr.vmem [resolvable:$true] %s241
      %244 = dma.hbm_to_vmem [thread:$0]  %s49, 16, %s242, [#allocation22]
    $region101: #{forward.1} parent=1 // pred_fallthru
      _
    // Predicated region
    $region102: #{forward.1} parent=1 // pred_check
      _
    $region103: #{forward.1} parent=1 // pred_check_branch
      %246 = sbr.rel (0) target = $region105
    $region104: #{forward.1} parent=1 // pred_region
      %s248 = ssub.s32 16, 16
      %249 = vsyncadd [#allocation25], %s248
      %s251 = sshll.u32 [#allocation24], 4
      %s252 = int_to_ptr.vmem [resolvable:$true] %s251
      %254 = dma.hbm_to_vmem [thread:$0]  %s51, 16, %s252, [#allocation25]
    $region105: #{forward.1} parent=1 // pred_fallthru
      _
    // Predicated region
    $region106: #{forward.1} parent=1 // pred_check
      _
    $region107: #{forward.1} parent=1 // pred_check_branch
      %256 = sbr.rel (0) target = $region109
    $region108: #{forward.1} parent=1 // pred_region
      _
    $region109: #{forward.1} parent=1 // pred_fallthru
      _
    // Predicated region
    $region110: #{forward.1} parent=1 // pred_check
      _
    $region111: #{forward.1} parent=1 // pred_check_branch
      %258 = sbr.rel (0) target = $region113
    $region112: #{forward.1} parent=1 // pred_region
      %s260 = ssub.s32 16, 16
      %261 = vsyncadd [#allocation25], %s260
      %s263 = sshll.u32 [#allocation26], 4
      %s264 = int_to_ptr.vmem [resolvable:$true] %s263
      %266 = dma.hbm_to_vmem [thread:$0]  %s55, 16, %s264, [#allocation25]
    $region113: #{forward.1} parent=1 // pred_fallthru
      _
    // Predicated region
    $region114: #{forward.1} parent=1 // pred_check
      _
    $region115: #{forward.1} parent=1 // pred_check_branch
      %268 = sbr.rel (0) target = $region117
    $region116: #{forward.1} parent=1 // pred_region
      _
    $region117: #{forward.1} parent=1 // pred_fallthru
      _
    // Predicated region
    $region118: #{forward.1} parent=1 // pred_check
      _
    $region119: #{forward.1} parent=1 // pred_check_branch
      %270 = sbr.rel (0) target = $region121
    $region120: #{forward.1} parent=1 // pred_region
      _
    $region121: #{forward.1} parent=1 // pred_fallthru
      _
    // Predicated region
    $region122: #{forward.1} parent=1 // pred_check
      _
    $region123: #{forward.1} parent=1 // pred_check_branch
      %272 = sbr.rel (0) target = $region125
    $region124: #{forward.1} parent=1 // pred_region
      _
    $region125: #{forward.1} parent=1 // pred_fallthru
      _
    // Predicated region
    $region126: #{forward.1} parent=1 // pred_check
      _
    $region127: #{forward.1} parent=1 // pred_check_branch
      %274 = sbr.rel (0) target = $region129
    $region128: #{forward.1} parent=1 // pred_region
      _
    $region129: #{forward.1} parent=1 // pred_fallthru
      _
    // Predicated region
    $region130: #{forward.1} parent=1 // pred_check
      _
    $region131: #{forward.1} parent=1 // pred_check_branch
      %276 = sbr.rel (0) target = $region133
    $region132: #{forward.1} parent=1 // pred_region
      _
    $region133: #{forward.1} parent=1 // pred_fallthru
      _
    // Predicated region
    $region134: #{forward.1} parent=1 // pred_check
      _
    $region135: #{forward.1} parent=1 // pred_check_branch
      %278 = sbr.rel (0) target = $region137
    $region136: #{forward.1} parent=1 // pred_region
      _
    $region137: #{forward.1} parent=1 // pred_fallthru
      _
    // Predicated region
    $region138: #{forward.1} parent=1 // pred_check
      _
    $region139: #{forward.1} parent=1 // pred_check_branch
      %280 = sbr.rel (0) target = $region141
    $region140: #{forward.1} parent=1 // pred_region
      %s282 = ssub.s32 16, 16
      %283 = vsyncadd [#allocation5], %s282
      %286 = dma.hbm_to_smem %s69, 16, [#allocation27], [#allocation5]
    $region141: #{forward.1} parent=1 // pred_fallthru
      _
    // Predicated region
    $region142: #{forward.1} parent=1 // pred_check
      _
    $region143: #{forward.1} parent=1 // pred_check_branch
      %288 = sbr.rel (0) target = $region145
    $region144: #{forward.1} parent=1 // pred_region
      %289 = dma.done [#allocation4], 256
    $region145: #{forward.1} parent=1 // pred_fallthru
      _
    // Predicated region
    $region146: #{forward.1} parent=1 // pred_check
      _
    $region147: #{forward.1} parent=1 // pred_check_branch
      %291 = sbr.rel (0) target = $region149
    $region148: #{forward.1} parent=1 // pred_region
      %292 = dma.done [#allocation7], 16
    $region149: #{forward.1} parent=1 // pred_fallthru
      _
    // Predicated region
    $region150: #{forward.1} parent=1 // pred_check
      _
    $region151: #{forward.1} parent=1 // pred_check_branch
      %294 = sbr.rel (0) target = $region153
    $region152: #{forward.1} parent=1 // pred_region
      %295 = dma.done [#allocation7], 16
    $region153: #{forward.1} parent=1 // pred_fallthru
      _
    // Predicated region
    $region154: #{forward.1} parent=1 // pred_check
      _
    $region155: #{forward.1} parent=1 // pred_check_branch
      %297 = sbr.rel (0) target = $region157
    $region156: #{forward.1} parent=1 // pred_region
      %298 = dma.done [#allocation10], 16
    $region157: #{forward.1} parent=1 // pred_fallthru
      _
    // Predicated region
    $region158: #{forward.1} parent=1 // pred_check
      _
    $region159: #{forward.1} parent=1 // pred_check_branch
      %300 = sbr.rel (0) target = $region161
    $region160: #{forward.1} parent=1 // pred_region
      %301 = dma.done [#allocation10], 16
    $region161: #{forward.1} parent=1 // pred_fallthru
      _
    // Predicated region
    $region162: #{forward.1} parent=1 // pred_check
      _
    $region163: #{forward.1} parent=1 // pred_check_branch
      %303 = sbr.rel (0) target = $region165
    $region164: #{forward.1} parent=1 // pred_region
      %304 = dma.done [#allocation13], 128
    $region165: #{forward.1} parent=1 // pred_fallthru
      _
    // Predicated region
    $region166: #{forward.1} parent=1 // pred_check
      _
    $region167: #{forward.1} parent=1 // pred_check_branch
      %306 = sbr.rel (0) target = $region169
    $region168: #{forward.1} parent=1 // pred_region
      %307 = dma.done [#allocation13], 16
    $region169: #{forward.1} parent=1 // pred_fallthru
      _
    // Predicated region
    $region170: #{forward.1} parent=1 // pred_check
      _
    $region171: #{forward.1} parent=1 // pred_check_branch
      %309 = sbr.rel (0) target = $region173
    $region172: #{forward.1} parent=1 // pred_region
      %310 = dma.done [#allocation16], 16
    $region173: #{forward.1} parent=1 // pred_fallthru
      _
    // Predicated region
    $region174: #{forward.1} parent=1 // pred_check
      _
    $region175: #{forward.1} parent=1 // pred_check_branch
      %312 = sbr.rel (0) target = $region177
    $region176: #{forward.1} parent=1 // pred_region
      %313 = dma.done [#allocation16], 16
    $region177: #{forward.1} parent=1 // pred_fallthru
      _
    // Predicated region
    $region178: #{forward.1} parent=1 // pred_check
      _
    $region179: #{forward.1} parent=1 // pred_check_branch
      %315 = sbr.rel (0) target = $region181
    $region180: #{forward.1} parent=1 // pred_region
      %316 = dma.done [#allocation19], 32
    $region181: #{forward.1} parent=1 // pred_fallthru
      _
    // Predicated region
    $region182: #{forward.1} parent=1 // pred_check
      _
    $region183: #{forward.1} parent=1 // pred_check_branch
      %318 = sbr.rel (0) target = $region185
    $region184: #{forward.1} parent=1 // pred_region
      %319 = dma.done [#allocation19], 16
    $region185: #{forward.1} parent=1 // pred_fallthru
      _
    // Predicated region
    $region186: #{forward.1} parent=1 // pred_check
      _
    $region187: #{forward.1} parent=1 // pred_check_branch
      %321 = sbr.rel (0) target = $region189
    $region188: #{forward.1} parent=1 // pred_region
      %322 = dma.done [#allocation22], 256
    $region189: #{forward.1} parent=1 // pred_fallthru
      _
    // Predicated region
    $region190: #{forward.1} parent=1 // pred_check
      _
    $region191: #{forward.1} parent=1 // pred_check_branch
      %324 = sbr.rel (0) target = $region193
    $region192: #{forward.1} parent=1 // pred_region
      %325 = dma.done [#allocation22], 16
    $region193: #{forward.1} parent=1 // pred_fallthru
      _
    // Predicated region
    $region194: #{forward.1} parent=1 // pred_check
      _
    $region195: #{forward.1} parent=1 // pred_check_branch
      %327 = sbr.rel (0) target = $region197
    $region196: #{forward.1} parent=1 // pred_region
      %328 = dma.done [#allocation25], 16
    $region197: #{forward.1} parent=1 // pred_fallthru
      _
    // Predicated region
    $region198: #{forward.1} parent=1 // pred_check
      _
    $region199: #{forward.1} parent=1 // pred_check_branch
      %330 = sbr.rel (0) target = $region201
    $region200: #{forward.1} parent=1 // pred_region
      %331 = dma.done [#allocation25], 16
    $region201: #{forward.1} parent=1 // pred_fallthru
      _
    // Predicated region
    $region202: #{forward.1} parent=1 // pred_check
      _
    $region203: #{forward.1} parent=1 // pred_check_branch
      %333 = sbr.rel (0) target = $region205
    $region204: #{forward.1} parent=1 // pred_region
      %334 = dma.done [#allocation5], 16
    $region205: #{forward.1} parent=1 // pred_fallthru
      _
    %335 = sfence
    %v336 = vld [vmem:[%s1] sm:$0xff]
    %v337 = vld [vmem:[#allocation3] sm:$0xff]
    %v338 = vld [vmem:[#allocation3 + $0x8] sm:$0xff]
    %v339 = vld [vmem:[#allocation6] sm:$0x1]
    %v341 = vlaneseq
    %v342 = vshrl.u32 %v341, 7
    %v343 = vsub.s32 0, %v342
    %v344 = vrot.slane %v339, %v343
    %vm346 = vcmask 130048
    %v348 = vsel %vm346, %v336, 0
    %350 = vmatprep.subr.mxu0 0.0
    %351 = vmatpush1.msra.mxu0 %v337
    %352 = vmatprep.subr.mxu0 0.0
    %353 = vmatpush1.msra.mxu0 %v338
    %354 = vmatprep.subr.mxu0 0.0
    %355 = vmatpush1.msra.mxu0 0.0
    %356 = vmatprep.subr.mxu0 0.0
    %357 = vmatpush1.msra.mxu0 0.0
    %358 = vmatprep.subr.mxu0 0.0
    %359 = vmatpush1.msra.mxu0 0.0
    %360 = vmatprep.subr.mxu0 0.0
    %361 = vmatpush1.msra.mxu0 0.0
    %362 = vmatprep.subr.mxu0 0.0
    %363 = vmatpush1.msra.mxu0 0.0
    %364 = vmatprep.subr.mxu0 0.0
    %365 = vmatpush1.msra.mxu0 0.0
    %366 = vmatprep.subr.mxu0 0.0
    %367 = vmatpush1.msra.mxu0 0.0
    %368 = vmatprep.subr.mxu0 0.0
    %369 = vmatpush1.msra.mxu0 0.0
    %370 = vmatprep.subr.mxu0 0.0
    %371 = vmatpush1.msra.mxu0 0.0
    %372 = vmatprep.subr.mxu0 0.0
    %373 = vmatpush1.msra.mxu0 0.0
    %374 = vmatprep.subr.mxu0 0.0
    %375 = vmatpush1.msra.mxu0 0.0
    %376 = vmatprep.subr.mxu0 0.0
    %377 = vmatpush1.msra.mxu0 0.0
    %378 = vmatprep.subr.mxu0 0.0
    %379 = vmatpush1.msra.mxu0 0.0
    %380 = vmatprep.subr.mxu0 0.0
    %381 = vmatpush1.msra.mxu0 0.0
    %382 = vmatprep.subr.mxu0 0.0
    %383 = vmatpush1.msra.mxu0 0.0
    %384 = vmatprep.subr.mxu0 0.0
    %385 = vmatpush1.msra.mxu0 0.0
    %386 = vmatprep.subr.mxu0 0.0
    %387 = vmatpush1.msra.mxu0 0.0
    %388 = vmatprep.subr.mxu0 0.0
    %389 = vmatpush1.msra.mxu0 0.0
    %390 = vmatprep.subr.mxu0 0.0
    %391 = vmatpush1.msra.mxu0 0.0
    %392 = vmatprep.subr.mxu0 0.0
    %393 = vmatpush1.msra.mxu0 0.0
    %394 = vmatprep.subr.mxu0 0.0
    %395 = vmatpush1.msra.mxu0 0.0
    %396 = vmatprep.subr.mxu0 0.0
    %397 = vmatpush1.msra.mxu0 0.0
    %398 = vmatprep.subr.mxu0 0.0
    %399 = vmatpush1.msra.mxu0 0.0
    %400 = vmatprep.subr.mxu0 0.0
    %401 = vmatpush1.msra.mxu0 0.0
    %402 = vmatprep.subr.mxu0 0.0
    %403 = vmatpush1.msra.mxu0 0.0
    %404 = vmatprep.subr.mxu0 0.0
    %405 = vmatpush1.msra.mxu0 0.0
    %406 = vmatprep.subr.mxu0 0.0
    %407 = vmatpush1.msra.mxu0 0.0
    %408 = vmatprep.subr.mxu0 0.0
    %409 = vmatpush1.msra.mxu0 0.0
    %410 = vmatprep.subr.mxu0 0.0
    %411 = vmatpush1.msra.mxu0 0.0
    %412 = vmatprep.subr.mxu0 0.0
    %413 = vmatpush1.msra.mxu0 0.0
    %414 = vmatprep.mubr.f32.mxu0 0.0
    %415 = vmatmul.mubr.f32.gmra.mrb[0].mxu0 %v348
    %v416 = vpop.f32.mrb[0].mxu0
    %v417 = vadd.f32 %v344, %v416
    %v418 = vpop.f32.mrb[0].mxu0
    %419 = vdwg.mxu0
    %v420 = vmax.f32 %v417, 0.0
    %v421 = vld [vmem:[%s17] sm:$0xff]
    %v422 = vld [vmem:[%s17 + $0x8] sm:$0xff]
    %v423 = vld [vmem:[%s17 + $0x10] sm:$0xff]
    %v424 = vld [vmem:[%s17 + $0x18] sm:$0xff]
    %v425 = vld [vmem:[#allocation8] sm:$0x1]
    %v427 = vlaneseq
    %v428 = vshrl.u32 %v427, 7
    %v429 = vsub.s32 0, %v428
    %v430 = vrot.slane %v425, %v429
    %vm432 = vcmask 261120
    %v434 = vsel %vm432, %v420, 0
    %436 = vmatprep.subr.mxu0 0.0
    %437 = vmatpush1.msra.mxu0 %v421
    %438 = vmatprep.subr.mxu0 0.0
    %439 = vmatpush1.msra.mxu0 %v422
    %440 = vmatprep.subr.mxu0 0.0
    %441 = vmatpush1.msra.mxu0 %v423
    %442 = vmatprep.subr.mxu0 0.0
    %443 = vmatpush1.msra.mxu0 %v424
    %444 = vmatprep.subr.mxu0 0.0
    %445 = vmatpush1.msra.mxu0 0.0
    %446 = vmatprep.subr.mxu0 0.0
    %447 = vmatpush1.msra.mxu0 0.0
    %448 = vmatprep.subr.mxu0 0.0
    %449 = vmatpush1.msra.mxu0 0.0
    %450 = vmatprep.subr.mxu0 0.0
    %451 = vmatpush1.msra.mxu0 0.0
    %452 = vmatprep.subr.mxu0 0.0
    %453 = vmatpush1.msra.mxu0 0.0
    %454 = vmatprep.subr.mxu0 0.0
    %455 = vmatpush1.msra.mxu0 0.0
    %456 = vmatprep.subr.mxu0 0.0
    %457 = vmatpush1.msra.mxu0 0.0
    %458 = vmatprep.subr.mxu0 0.0
    %459 = vmatpush1.msra.mxu0 0.0
    %460 = vmatprep.subr.mxu0 0.0
    %461 = vmatpush1.msra.mxu0 0.0
    %462 = vmatprep.subr.mxu0 0.0
    %463 = vmatpush1.msra.mxu0 0.0
    %464 = vmatprep.subr.mxu0 0.0
    %465 = vmatpush1.msra.mxu0 0.0
    %466 = vmatprep.subr.mxu0 0.0
    %467 = vmatpush1.msra.mxu0 0.0
    %468 = vmatprep.subr.mxu0 0.0
    %469 = vmatpush1.msra.mxu0 0.0
    %470 = vmatprep.subr.mxu0 0.0
    %471 = vmatpush1.msra.mxu0 0.0
    %472 = vmatprep.subr.mxu0 0.0
    %473 = vmatpush1.msra.mxu0 0.0
    %474 = vmatprep.subr.mxu0 0.0
    %475 = vmatpush1.msra.mxu0 0.0
    %476 = vmatprep.subr.mxu0 0.0
    %477 = vmatpush1.msra.mxu0 0.0
    %478 = vmatprep.subr.mxu0 0.0
    %479 = vmatpush1.msra.mxu0 0.0
    %480 = vmatprep.subr.mxu0 0.0
    %481 = vmatpush1.msra.mxu0 0.0
    %482 = vmatprep.subr.mxu0 0.0
    %483 = vmatpush1.msra.mxu0 0.0
    %484 = vmatprep.subr.mxu0 0.0
    %485 = vmatpush1.msra.mxu0 0.0
    %486 = vmatprep.subr.mxu0 0.0
    %487 = vmatpush1.msra.mxu0 0.0
    %488 = vmatprep.subr.mxu0 0.0
    %489 = vmatpush1.msra.mxu0 0.0
    %490 = vmatprep.subr.mxu0 0.0
    %491 = vmatpush1.msra.mxu0 0.0
    %492 = vmatprep.subr.mxu0 0.0
    %493 = vmatpush1.msra.mxu0 0.0
    %494 = vmatprep.subr.mxu0 0.0
    %495 = vmatpush1.msra.mxu0 0.0
    %496 = vmatprep.subr.mxu0 0.0
    %497 = vmatpush1.msra.mxu0 0.0
    %498 = vmatprep.subr.mxu0 0.0
    %499 = vmatpush1.msra.mxu0 0.0
    %500 = vmatprep.mubr.f32.mxu0 0.0
    %501 = vmatmul.mubr.f32.gmra.mrb[0].mxu0 %v434
    %v502 = vpop.f32.mrb[0].mxu0
    %v503 = vadd.f32 %v430, %v502
    %v504 = vpop.f32.mrb[0].mxu0
    %505 = vdwg.mxu0
    %v506 = vmax.f32 %v503, 0.0
    %v507 = vld [vmem:[%s21] sm:$0xff]
    %v508 = vld [vmem:[%s21 + $0x8] sm:$0xff]
    %v509 = vld [vmem:[%s21 + $0x10] sm:$0xff]
    %v510 = vld [vmem:[%s21 + $0x18] sm:$0xff]
    %v511 = vld [vmem:[#allocation9] sm:$0x1]
    %v513 = vlaneseq
    %v514 = vshrl.u32 %v513, 7
    %v515 = vsub.s32 0, %v514
    %v516 = vrot.slane %v511, %v515
    %v519 = vsel %vm432, %v506, 0
    %521 = vmatprep.subr.mxu0 0.0
    %522 = vmatpush1.msra.mxu0 %v507
    %523 = vmatprep.subr.mxu0 0.0
    %524 = vmatpush1.msra.mxu0 %v508
    %525 = vmatprep.subr.mxu0 0.0
    %526 = vmatpush1.msra.mxu0 %v509
    %527 = vmatprep.subr.mxu0 0.0
    %528 = vmatpush1.msra.mxu0 %v510
    %529 = vmatprep.subr.mxu0 0.0
    %530 = vmatpush1.msra.mxu0 0.0
    %531 = vmatprep.subr.mxu0 0.0
    %532 = vmatpush1.msra.mxu0 0.0
    %533 = vmatprep.subr.mxu0 0.0
    %534 = vmatpush1.msra.mxu0 0.0
    %535 = vmatprep.subr.mxu0 0.0
    %536 = vmatpush1.msra.mxu0 0.0
    %537 = vmatprep.subr.mxu0 0.0
    %538 = vmatpush1.msra.mxu0 0.0
    %539 = vmatprep.subr.mxu0 0.0
    %540 = vmatpush1.msra.mxu0 0.0
    %541 = vmatprep.subr.mxu0 0.0
    %542 = vmatpush1.msra.mxu0 0.0
    %543 = vmatprep.subr.mxu0 0.0
    %544 = vmatpush1.msra.mxu0 0.0
    %545 = vmatprep.subr.mxu0 0.0
    %546 = vmatpush1.msra.mxu0 0.0
    %547 = vmatprep.subr.mxu0 0.0
    %548 = vmatpush1.msra.mxu0 0.0
    %549 = vmatprep.subr.mxu0 0.0
    %550 = vmatpush1.msra.mxu0 0.0
    %551 = vmatprep.subr.mxu0 0.0
    %552 = vmatpush1.msra.mxu0 0.0
    %553 = vmatprep.subr.mxu0 0.0
    %554 = vmatpush1.msra.mxu0 0.0
    %555 = vmatprep.subr.mxu0 0.0
    %556 = vmatpush1.msra.mxu0 0.0
    %557 = vmatprep.subr.mxu0 0.0
    %558 = vmatpush1.msra.mxu0 0.0
    %559 = vmatprep.subr.mxu0 0.0
    %560 = vmatpush1.msra.mxu0 0.0
    %561 = vmatprep.subr.mxu0 0.0
    %562 = vmatpush1.msra.mxu0 0.0
    %563 = vmatprep.subr.mxu0 0.0
    %564 = vmatpush1.msra.mxu0 0.0
    %565 = vmatprep.subr.mxu0 0.0
    %566 = vmatpush1.msra.mxu0 0.0
    %567 = vmatprep.subr.mxu0 0.0
    %568 = vmatpush1.msra.mxu0 0.0
    %569 = vmatprep.subr.mxu0 0.0
    %570 = vmatpush1.msra.mxu0 0.0
    %571 = vmatprep.subr.mxu0 0.0
    %572 = vmatpush1.msra.mxu0 0.0
    %573 = vmatprep.subr.mxu0 0.0
    %574 = vmatpush1.msra.mxu0 0.0
    %575 = vmatprep.subr.mxu0 0.0
    %576 = vmatpush1.msra.mxu0 0.0
    %577 = vmatprep.subr.mxu0 0.0
    %578 = vmatpush1.msra.mxu0 0.0
    %579 = vmatprep.subr.mxu0 0.0
    %580 = vmatpush1.msra.mxu0 0.0
    %581 = vmatprep.subr.mxu0 0.0
    %582 = vmatpush1.msra.mxu0 0.0
    %583 = vmatprep.subr.mxu0 0.0
    %584 = vmatpush1.msra.mxu0 0.0
    %585 = vmatprep.mubr.f32.mxu0 0.0
    %586 = vmatmul.mubr.f32.gmra.mrb[0].mxu0 %v519
    %v587 = vpop.f32.mrb[0].mxu0
    %v588 = vadd.f32 %v516, %v587
    %v589 = vpop.f32.mrb[0].mxu0
    %590 = vdwg.mxu0
    %v591 = vmax.f32 %v588, 0.0
    %v592 = vld [vmem:[%s25] sm:$0xff]
    %v593 = vld [vmem:[%s25 + $0x8] sm:$0xff]
    %v594 = vld [vmem:[%s25 + $0x10] sm:$0xff]
    %v595 = vld [vmem:[%s25 + $0x18] sm:$0xff]
    %v596 = vld [vmem:[#allocation11] sm:$0x1]
    %v598 = vlaneseq
    %v599 = vshrl.u32 %v598, 7
    %v600 = vsub.s32 0, %v599
    %v601 = vrot.slane %v596, %v600
    %v604 = vsel %vm432, %v591, 0
    %606 = vmatprep.subr.mxu0 0.0
    %607 = vmatpush1.msra.mxu0 %v592
    %608 = vmatprep.subr.mxu0 0.0
    %609 = vmatpush1.msra.mxu0 %v593
    %610 = vmatprep.subr.mxu0 0.0
    %611 = vmatpush1.msra.mxu0 %v594
    %612 = vmatprep.subr.mxu0 0.0
    %613 = vmatpush1.msra.mxu0 %v595
    %614 = vmatprep.subr.mxu0 0.0
    %615 = vmatpush1.msra.mxu0 0.0
    %616 = vmatprep.subr.mxu0 0.0
    %617 = vmatpush1.msra.mxu0 0.0
    %618 = vmatprep.subr.mxu0 0.0
    %619 = vmatpush1.msra.mxu0 0.0
    %620 = vmatprep.subr.mxu0 0.0
    %621 = vmatpush1.msra.mxu0 0.0
    %622 = vmatprep.subr.mxu0 0.0
    %623 = vmatpush1.msra.mxu0 0.0
    %624 = vmatprep.subr.mxu0 0.0
    %625 = vmatpush1.msra.mxu0 0.0
    %626 = vmatprep.subr.mxu0 0.0
    %627 = vmatpush1.msra.mxu0 0.0
    %628 = vmatprep.subr.mxu0 0.0
    %629 = vmatpush1.msra.mxu0 0.0
    %630 = vmatprep.subr.mxu0 0.0
    %631 = vmatpush1.msra.mxu0 0.0
    %632 = vmatprep.subr.mxu0 0.0
    %633 = vmatpush1.msra.mxu0 0.0
    %634 = vmatprep.subr.mxu0 0.0
    %635 = vmatpush1.msra.mxu0 0.0
    %636 = vmatprep.subr.mxu0 0.0
    %637 = vmatpush1.msra.mxu0 0.0
    %638 = vmatprep.subr.mxu0 0.0
    %639 = vmatpush1.msra.mxu0 0.0
    %640 = vmatprep.subr.mxu0 0.0
    %641 = vmatpush1.msra.mxu0 0.0
    %642 = vmatprep.subr.mxu0 0.0
    %643 = vmatpush1.msra.mxu0 0.0
    %644 = vmatprep.subr.mxu0 0.0
    %645 = vmatpush1.msra.mxu0 0.0
    %646 = vmatprep.subr.mxu0 0.0
    %647 = vmatpush1.msra.mxu0 0.0
    %648 = vmatprep.subr.mxu0 0.0
    %649 = vmatpush1.msra.mxu0 0.0
    %650 = vmatprep.subr.mxu0 0.0
    %651 = vmatpush1.msra.mxu0 0.0
    %652 = vmatprep.subr.mxu0 0.0
    %653 = vmatpush1.msra.mxu0 0.0
    %654 = vmatprep.subr.mxu0 0.0
    %655 = vmatpush1.msra.mxu0 0.0
    %656 = vmatprep.subr.mxu0 0.0
    %657 = vmatpush1.msra.mxu0 0.0
    %658 = vmatprep.subr.mxu0 0.0
    %659 = vmatpush1.msra.mxu0 0.0
    %660 = vmatprep.subr.mxu0 0.0
    %661 = vmatpush1.msra.mxu0 0.0
    %662 = vmatprep.subr.mxu0 0.0
    %663 = vmatpush1.msra.mxu0 0.0
    %664 = vmatprep.subr.mxu0 0.0
    %665 = vmatpush1.msra.mxu0 0.0
    %666 = vmatprep.subr.mxu0 0.0
    %667 = vmatpush1.msra.mxu0 0.0
    %668 = vmatprep.subr.mxu0 0.0
    %669 = vmatpush1.msra.mxu0 0.0
    %670 = vmatprep.mubr.f32.mxu0 0.0
    %671 = vmatmul.mubr.f32.gmra.mrb[0].mxu0 %v604
    %v672 = vpop.f32.mrb[0].mxu0
    %v673 = vadd.f32 %v601, %v672
    %v674 = vpop.f32.mrb[0].mxu0
    %675 = vdwg.mxu0
    %v676 = vtanh.pop %v673
    %v677 = vld [vmem:[%s3] sm:$0xff]
    %v678 = vld [vmem:[%s3 + $0x8] sm:$0xff]
    %v679 = vld [vmem:[#allocation12] sm:$0xff]
    %v680 = vld [vmem:[#allocation14] sm:$0x1]
    %v682 = vlaneseq
    %v683 = vshrl.u32 %v682, 7
    %v684 = vsub.s32 0, %v683
    %v685 = vrot.slane %v680, %v684
    %vm687 = vcmask 64512
    %v689 = vsel %vm687, %v677, 0
    %v692 = vsel %vm687, %v678, 0
    %694 = vmatprep.subr.mxu0 0.0
    %695 = vmatpush1.msra.mxu0 %v679
    %696 = vmatprep.subr.mxu0 0.0
    %697 = vmatpush1.msra.mxu0 0.0
    %698 = vmatprep.subr.mxu0 0.0
    %699 = vmatpush1.msra.mxu0 0.0
    %700 = vmatprep.subr.mxu0 0.0
    %701 = vmatpush1.msra.mxu0 0.0
    %702 = vmatprep.subr.mxu0 0.0
    %703 = vmatpush1.msra.mxu0 0.0
    %704 = vmatprep.subr.mxu0 0.0
    %705 = vmatpush1.msra.mxu0 0.0
    %706 = vmatprep.subr.mxu0 0.0
    %707 = vmatpush1.msra.mxu0 0.0
    %708 = vmatprep.subr.mxu0 0.0
    %709 = vmatpush1.msra.mxu0 0.0
    %710 = vmatprep.subr.mxu0 0.0
    %711 = vmatpush1.msra.mxu0 0.0
    %712 = vmatprep.subr.mxu0 0.0
    %713 = vmatpush1.msra.mxu0 0.0
    %714 = vmatprep.subr.mxu0 0.0
    %715 = vmatpush1.msra.mxu0 0.0
    %716 = vmatprep.subr.mxu0 0.0
    %717 = vmatpush1.msra.mxu0 0.0
    %718 = vmatprep.subr.mxu0 0.0
    %719 = vmatpush1.msra.mxu0 0.0
    %720 = vmatprep.subr.mxu0 0.0
    %721 = vmatpush1.msra.mxu0 0.0
    %722 = vmatprep.subr.mxu0 0.0
    %723 = vmatpush1.msra.mxu0 0.0
    %724 = vmatprep.subr.mxu0 0.0
    %725 = vmatpush1.msra.mxu0 0.0
    %726 = vmatprep.subr.mxu0 0.0
    %727 = vmatpush1.msra.mxu0 0.0
    %728 = vmatprep.subr.mxu0 0.0
    %729 = vmatpush1.msra.mxu0 0.0
    %730 = vmatprep.subr.mxu0 0.0
    %731 = vmatpush1.msra.mxu0 0.0
    %732 = vmatprep.subr.mxu0 0.0
    %733 = vmatpush1.msra.mxu0 0.0
    %734 = vmatprep.subr.mxu0 0.0
    %735 = vmatpush1.msra.mxu0 0.0
    %736 = vmatprep.subr.mxu0 0.0
    %737 = vmatpush1.msra.mxu0 0.0
    %738 = vmatprep.subr.mxu0 0.0
    %739 = vmatpush1.msra.mxu0 0.0
    %740 = vmatprep.subr.mxu0 0.0
    %741 = vmatpush1.msra.mxu0 0.0
    %742 = vmatprep.subr.mxu0 0.0
    %743 = vmatpush1.msra.mxu0 0.0
    %744 = vmatprep.subr.mxu0 0.0
    %745 = vmatpush1.msra.mxu0 0.0
    %746 = vmatprep.subr.mxu0 0.0
    %747 = vmatpush1.msra.mxu0 0.0
    %748 = vmatprep.subr.mxu0 0.0
    %749 = vmatpush1.msra.mxu0 0.0
    %750 = vmatprep.subr.mxu0 0.0
    %751 = vmatpush1.msra.mxu0 0.0
    %752 = vmatprep.subr.mxu0 0.0
    %753 = vmatpush1.msra.mxu0 0.0
    %754 = vmatprep.subr.mxu0 0.0
    %755 = vmatpush1.msra.mxu0 0.0
    %756 = vmatprep.subr.mxu0 0.0
    %757 = vmatpush1.msra.mxu0 0.0
    %758 = vmatprep.mubr.f32.mxu0 0.0
    %759 = vmatmul.mubr.f32.gmra.mrb[0].mxu0 %v689
    %v760 = vpop.f32.mrb[0].mxu0
    %v761 = vadd.f32 %v685, %v760
    %v762 = vpop.f32.mrb[0].mxu0
    %763 = vmatprep.mubr.f32.mxu0 0.0
    %764 = vmatmul.mubr.f32.gmra.mrb[0].mxu0 %v692
    %v765 = vpop.f32.mrb[0].mxu0
    %v766 = vadd.f32 %v685, %v765
    %v767 = vpop.f32.mrb[0].mxu0
    %768 = vdwg.mxu0
    %v769 = vmax.f32 %v761, 0.0
    %v770 = vmax.f32 %v766, 0.0
    %v771 = vld [vmem:[%s33] sm:$0xff]
    %v772 = vld [vmem:[%s33 + $0x8] sm:$0xff]
    %v773 = vld [vmem:[%s33 + $0x10] sm:$0xff]
    %v774 = vld [vmem:[%s33 + $0x18] sm:$0xff]
    %v775 = vld [vmem:[#allocation15] sm:$0x1]
    %v777 = vlaneseq
    %v778 = vshrl.u32 %v777, 7
    %v779 = vsub.s32 0, %v778
    %v780 = vrot.slane %v775, %v779
    %v783 = vsel %vm432, %v769, 0
    %v786 = vsel %vm432, %v770, 0
    %788 = vmatprep.subr.mxu0 0.0
    %789 = vmatpush1.msra.mxu0 %v771
    %790 = vmatprep.subr.mxu0 0.0
    %791 = vmatpush1.msra.mxu0 %v772
    %792 = vmatprep.subr.mxu0 0.0
    %793 = vmatpush1.msra.mxu0 %v773
    %794 = vmatprep.subr.mxu0 0.0
    %795 = vmatpush1.msra.mxu0 %v774
    %796 = vmatprep.subr.mxu0 0.0
    %797 = vmatpush1.msra.mxu0 0.0
    %798 = vmatprep.subr.mxu0 0.0
    %799 = vmatpush1.msra.mxu0 0.0
    %800 = vmatprep.subr.mxu0 0.0
    %801 = vmatpush1.msra.mxu0 0.0
    %802 = vmatprep.subr.mxu0 0.0
    %803 = vmatpush1.msra.mxu0 0.0
    %804 = vmatprep.subr.mxu0 0.0
    %805 = vmatpush1.msra.mxu0 0.0
    %806 = vmatprep.subr.mxu0 0.0
    %807 = vmatpush1.msra.mxu0 0.0
    %808 = vmatprep.subr.mxu0 0.0
    %809 = vmatpush1.msra.mxu0 0.0
    %810 = vmatprep.subr.mxu0 0.0
    %811 = vmatpush1.msra.mxu0 0.0
    %812 = vmatprep.subr.mxu0 0.0
    %813 = vmatpush1.msra.mxu0 0.0
    %814 = vmatprep.subr.mxu0 0.0
    %815 = vmatpush1.msra.mxu0 0.0
    %816 = vmatprep.subr.mxu0 0.0
    %817 = vmatpush1.msra.mxu0 0.0
    %818 = vmatprep.subr.mxu0 0.0
    %819 = vmatpush1.msra.mxu0 0.0
    %820 = vmatprep.subr.mxu0 0.0
    %821 = vmatpush1.msra.mxu0 0.0
    %822 = vmatprep.subr.mxu0 0.0
    %823 = vmatpush1.msra.mxu0 0.0
    %824 = vmatprep.subr.mxu0 0.0
    %825 = vmatpush1.msra.mxu0 0.0
    %826 = vmatprep.subr.mxu0 0.0
    %827 = vmatpush1.msra.mxu0 0.0
    %828 = vmatprep.subr.mxu0 0.0
    %829 = vmatpush1.msra.mxu0 0.0
    %830 = vmatprep.subr.mxu0 0.0
    %831 = vmatpush1.msra.mxu0 0.0
    %832 = vmatprep.subr.mxu0 0.0
    %833 = vmatpush1.msra.mxu0 0.0
    %834 = vmatprep.subr.mxu0 0.0
    %835 = vmatpush1.msra.mxu0 0.0
    %836 = vmatprep.subr.mxu0 0.0
    %837 = vmatpush1.msra.mxu0 0.0
    %838 = vmatprep.subr.mxu0 0.0
    %839 = vmatpush1.msra.mxu0 0.0
    %840 = vmatprep.subr.mxu0 0.0
    %841 = vmatpush1.msra.mxu0 0.0
    %842 = vmatprep.subr.mxu0 0.0
    %843 = vmatpush1.msra.mxu0 0.0
    %844 = vmatprep.subr.mxu0 0.0
    %845 = vmatpush1.msra.mxu0 0.0
    %846 = vmatprep.subr.mxu0 0.0
    %847 = vmatpush1.msra.mxu0 0.0
    %848 = vmatprep.subr.mxu0 0.0
    %849 = vmatpush1.msra.mxu0 0.0
    %850 = vmatprep.subr.mxu0 0.0
    %851 = vmatpush1.msra.mxu0 0.0
    %852 = vmatprep.mubr.f32.mxu0 0.0
    %853 = vmatmul.mubr.f32.gmra.mrb[0].mxu0 %v783
    %v854 = vpop.f32.mrb[0].mxu0
    %v855 = vadd.f32 %v780, %v854
    %v856 = vpop.f32.mrb[0].mxu0
    %857 = vmatprep.mubr.f32.mxu0 0.0
    %858 = vmatmul.mubr.f32.gmra.mrb[0].mxu0 %v786
    %v859 = vpop.f32.mrb[0].mxu0
    %v860 = vadd.f32 %v780, %v859
    %v861 = vpop.f32.mrb[0].mxu0
    %862 = vdwg.mxu0
    %v863 = vmax.f32 %v855, 0.0
    %v864 = vmax.f32 %v860, 0.0
    %v865 = vld [vmem:[%s37] sm:$0xff]
    %v866 = vld [vmem:[%s37 + $0x8] sm:$0xff]
    %v867 = vld [vmem:[%s37 + $0x10] sm:$0xff]
    %v868 = vld [vmem:[%s37 + $0x18] sm:$0xff]
    %v869 = vld [vmem:[#allocation17] sm:$0x1]
    %v871 = vlaneseq
    %v872 = vshrl.u32 %v871, 7
    %v873 = vsub.s32 0, %v872
    %v874 = vrot.slane %v869, %v873
    %v877 = vsel %vm432, %v863, 0
    %v880 = vsel %vm432, %v864, 0
    %882 = vmatprep.subr.mxu0 0.0
    %883 = vmatpush1.msra.mxu0 %v865
    %884 = vmatprep.subr.mxu0 0.0
    %885 = vmatpush1.msra.mxu0 %v866
    %886 = vmatprep.subr.mxu0 0.0
    %887 = vmatpush1.msra.mxu0 %v867
    %888 = vmatprep.subr.mxu0 0.0
    %889 = vmatpush1.msra.mxu0 %v868
    %890 = vmatprep.subr.mxu0 0.0
    %891 = vmatpush1.msra.mxu0 0.0
    %892 = vmatprep.subr.mxu0 0.0
    %893 = vmatpush1.msra.mxu0 0.0
    %894 = vmatprep.subr.mxu0 0.0
    %895 = vmatpush1.msra.mxu0 0.0
    %896 = vmatprep.subr.mxu0 0.0
    %897 = vmatpush1.msra.mxu0 0.0
    %898 = vmatprep.subr.mxu0 0.0
    %899 = vmatpush1.msra.mxu0 0.0
    %900 = vmatprep.subr.mxu0 0.0
    %901 = vmatpush1.msra.mxu0 0.0
    %902 = vmatprep.subr.mxu0 0.0
    %903 = vmatpush1.msra.mxu0 0.0
    %904 = vmatprep.subr.mxu0 0.0
    %905 = vmatpush1.msra.mxu0 0.0
    %906 = vmatprep.subr.mxu0 0.0
    %907 = vmatpush1.msra.mxu0 0.0
    %908 = vmatprep.subr.mxu0 0.0
    %909 = vmatpush1.msra.mxu0 0.0
    %910 = vmatprep.subr.mxu0 0.0
    %911 = vmatpush1.msra.mxu0 0.0
    %912 = vmatprep.subr.mxu0 0.0
    %913 = vmatpush1.msra.mxu0 0.0
    %914 = vmatprep.subr.mxu0 0.0
    %915 = vmatpush1.msra.mxu0 0.0
    %916 = vmatprep.subr.mxu0 0.0
    %917 = vmatpush1.msra.mxu0 0.0
    %918 = vmatprep.subr.mxu0 0.0
    %919 = vmatpush1.msra.mxu0 0.0
    %920 = vmatprep.subr.mxu0 0.0
    %921 = vmatpush1.msra.mxu0 0.0
    %922 = vmatprep.subr.mxu0 0.0
    %923 = vmatpush1.msra.mxu0 0.0
    %924 = vmatprep.subr.mxu0 0.0
    %925 = vmatpush1.msra.mxu0 0.0
    %926 = vmatprep.subr.mxu0 0.0
    %927 = vmatpush1.msra.mxu0 0.0
    %928 = vmatprep.subr.mxu0 0.0
    %929 = vmatpush1.msra.mxu0 0.0
    %930 = vmatprep.subr.mxu0 0.0
    %931 = vmatpush1.msra.mxu0 0.0
    %932 = vmatprep.subr.mxu0 0.0
    %933 = vmatpush1.msra.mxu0 0.0
    %934 = vmatprep.subr.mxu0 0.0
    %935 = vmatpush1.msra.mxu0 0.0
    %936 = vmatprep.subr.mxu0 0.0
    %937 = vmatpush1.msra.mxu0 0.0
    %938 = vmatprep.subr.mxu0 0.0
    %939 = vmatpush1.msra.mxu0 0.0
    %940 = vmatprep.subr.mxu0 0.0
    %941 = vmatpush1.msra.mxu0 0.0
    %942 = vmatprep.subr.mxu0 0.0
    %943 = vmatpush1.msra.mxu0 0.0
    %944 = vmatprep.subr.mxu0 0.0
    %945 = vmatpush1.msra.mxu0 0.0
    %946 = vmatprep.mubr.f32.mxu0 0.0
    %947 = vmatmul.mubr.f32.gmra.mrb[0].mxu0 %v877
    %v948 = vpop.f32.mrb[0].mxu0
    %v949 = vadd.f32 %v874, %v948
    %v950 = vpop.f32.mrb[0].mxu0
    %951 = vmatprep.mubr.f32.mxu0 0.0
    %952 = vmatmul.mubr.f32.gmra.mrb[0].mxu0 %v880
    %v953 = vpop.f32.mrb[0].mxu0
    %v954 = vadd.f32 %v874, %v953
    %v955 = vpop.f32.mrb[0].mxu0
    %956 = vdwg.mxu0
    %v957 = vmax.f32 %v949, 0.0
    %v958 = vmax.f32 %v954, 0.0
    %v959 = vld [vmem:[%s41] sm:$0xff]
    %v960 = vld [vmem:[%s41 + $0x8] sm:$0xff]
    %v961 = vld [vmem:[%s41 + $0x10] sm:$0xff]
    %v962 = vld [vmem:[%s41 + $0x18] sm:$0xff]
    %v963 = vld [vmem:[%s41 + $0x20] sm:$0xff]
    %v964 = vld [vmem:[%s41 + $0x28] sm:$0xff]
    %v965 = vld [vmem:[%s41 + $0x30] sm:$0xff]
    %v966 = vld [vmem:[%s41 + $0x38] sm:$0xff]
    %v967 = vld [vmem:[#allocation18] sm:$0x3]
    %v969 = vlaneseq
    %v970 = vshrl.u32 %v969, 7
    %v971 = vsub.s32 0, %v970
    %v972 = vrot.slane %v967, %v971
    %v973 = vlaneseq
    %v974 = vshrl.u32 %v973, 7
    %v975 = vsub.s32 1, %v974
    %v976 = vrot.slane %v967, %v975
    %v980 = vsel %vm432, %v957, 0
    %v983 = vsel %vm432, %v958, 0
    %985 = vmatprep.subr.mxu0 %v960
    %986 = vmatpush1.msra.mxu0 %v959
    %987 = vmatprep.subr.mxu0 %v962
    %988 = vmatpush1.msra.mxu0 %v961
    %989 = vmatprep.subr.mxu0 %v964
    %990 = vmatpush1.msra.mxu0 %v963
    %991 = vmatprep.subr.mxu0 %v966
    %992 = vmatpush1.msra.mxu0 %v965
    %993 = vmatprep.subr.mxu0 0.0
    %994 = vmatpush1.msra.mxu0 0.0
    %995 = vmatprep.subr.mxu0 0.0
    %996 = vmatpush1.msra.mxu0 0.0
    %997 = vmatprep.subr.mxu0 0.0
    %998 = vmatpush1.msra.mxu0 0.0
    %999 = vmatprep.subr.mxu0 0.0
    %1000 = vmatpush1.msra.mxu0 0.0
    %1001 = vmatprep.subr.mxu0 0.0
    %1002 = vmatpush1.msra.mxu0 0.0
    %1003 = vmatprep.subr.mxu0 0.0
    %1004 = vmatpush1.msra.mxu0 0.0
    %1005 = vmatprep.subr.mxu0 0.0
    %1006 = vmatpush1.msra.mxu0 0.0
    %1007 = vmatprep.subr.mxu0 0.0
    %1008 = vmatpush1.msra.mxu0 0.0
    %1009 = vmatprep.subr.mxu0 0.0
    %1010 = vmatpush1.msra.mxu0 0.0
    %1011 = vmatprep.subr.mxu0 0.0
    %1012 = vmatpush1.msra.mxu0 0.0
    %1013 = vmatprep.subr.mxu0 0.0
    %1014 = vmatpush1.msra.mxu0 0.0
    %1015 = vmatprep.subr.mxu0 0.0
    %1016 = vmatpush1.msra.mxu0 0.0
    %1017 = vmatprep.subr.mxu0 0.0
    %1018 = vmatpush1.msra.mxu0 0.0
    %1019 = vmatprep.subr.mxu0 0.0
    %1020 = vmatpush1.msra.mxu0 0.0
    %1021 = vmatprep.subr.mxu0 0.0
    %1022 = vmatpush1.msra.mxu0 0.0
    %1023 = vmatprep.subr.mxu0 0.0
    %1024 = vmatpush1.msra.mxu0 0.0
    %1025 = vmatprep.subr.mxu0 0.0
    %1026 = vmatpush1.msra.mxu0 0.0
    %1027 = vmatprep.subr.mxu0 0.0
    %1028 = vmatpush1.msra.mxu0 0.0
    %1029 = vmatprep.subr.mxu0 0.0
    %1030 = vmatpush1.msra.mxu0 0.0
    %1031 = vmatprep.subr.mxu0 0.0
    %1032 = vmatpush1.msra.mxu0 0.0
    %1033 = vmatprep.subr.mxu0 0.0
    %1034 = vmatpush1.msra.mxu0 0.0
    %1035 = vmatprep.subr.mxu0 0.0
    %1036 = vmatpush1.msra.mxu0 0.0
    %1037 = vmatprep.subr.mxu0 0.0
    %1038 = vmatpush1.msra.mxu0 0.0
    %1039 = vmatprep.subr.mxu0 0.0
    %1040 = vmatpush1.msra.mxu0 0.0
    %1041 = vmatprep.subr.mxu0 0.0
    %1042 = vmatpush1.msra.mxu0 0.0
    %1043 = vmatprep.subr.mxu0 0.0
    %1044 = vmatpush1.msra.mxu0 0.0
    %1045 = vmatprep.subr.mxu0 0.0
    %1046 = vmatpush1.msra.mxu0 0.0
    %1047 = vmatprep.subr.mxu0 0.0
    %1048 = vmatpush1.msra.mxu0 0.0
    %1049 = vmatprep.mubr.f32.mxu0 0.0
    %1050 = vmatmul.mubr.f32.gmra.mrb[0].mxu0 %v980
    %v1051 = vpop.f32.mrb[0].mxu0
    %v1052 = vadd.f32 %v972, %v1051
    %v1053 = vpop.f32.mrb[0].mxu0
    %v1054 = vadd.f32 %v976, %v1053
    %1055 = vmatprep.mubr.f32.mxu0 0.0
    %1056 = vmatmul.mubr.f32.gmra.mrb[0].mxu0 %v983
    %v1057 = vpop.f32.mrb[0].mxu0
    %v1058 = vadd.f32 %v972, %v1057
    %v1059 = vpop.f32.mrb[0].mxu0
    %v1060 = vadd.f32 %v976, %v1059
    %1061 = vdwg.mxu0
    %v1062 = vmax.f32 %v1052, 0.0
    %v1063 = vmax.f32 %v1054, 0.0
    %v1064 = vmax.f32 %v1058, 0.0
    %v1065 = vmax.f32 %v1060, 0.0
    %1068 = vrot.lane.b32.xlu0 %v1062, 112
    %v1069 = vpop.permute.xlu0 %1068
    %1070 = vrot.lane.b32.xlu0 %v1064, 112
    %v1071 = vpop.permute.xlu0 %1070
    %1074 = vrot.lane.b32.xlu0 %v1062, 96
    %v1075 = vpop.permute.xlu0 %1074
    %1076 = vrot.lane.b32.xlu0 %v1064, 96
    %v1077 = vpop.permute.xlu0 %1076
    %1080 = vrot.lane.b32.xlu0 %v1062, 80
    %v1081 = vpop.permute.xlu0 %1080
    %1082 = vrot.lane.b32.xlu0 %v1064, 80
    %v1083 = vpop.permute.xlu0 %1082
    %1086 = vrot.lane.b32.xlu0 %v1062, 64
    %v1087 = vpop.permute.xlu0 %1086
    %1088 = vrot.lane.b32.xlu0 %v1064, 64
    %v1089 = vpop.permute.xlu0 %1088
    %1092 = vrot.lane.b32.xlu0 %v1062, 48
    %v1093 = vpop.permute.xlu0 %1092
    %1094 = vrot.lane.b32.xlu0 %v1064, 48
    %v1095 = vpop.permute.xlu0 %1094
    %1098 = vrot.lane.b32.xlu0 %v1062, 32
    %v1099 = vpop.permute.xlu0 %1098
    %1100 = vrot.lane.b32.xlu0 %v1064, 32
    %v1101 = vpop.permute.xlu0 %1100
    %1104 = vrot.lane.b32.xlu0 %v1062, 16
    %v1105 = vpop.permute.xlu0 %1104
    %1106 = vrot.lane.b32.xlu0 %v1064, 16
    %v1107 = vpop.permute.xlu0 %1106
    %1112 = vrot.lane.b32.xlu0 %v1063, 112
    %v1113 = vpop.permute.xlu0 %1112
    %1114 = vrot.lane.b32.xlu0 %v1065, 112
    %v1115 = vpop.permute.xlu0 %1114
    %1118 = vrot.lane.b32.xlu0 %v1063, 96
    %v1119 = vpop.permute.xlu0 %1118
    %1120 = vrot.lane.b32.xlu0 %v1065, 96
    %v1121 = vpop.permute.xlu0 %1120
    %1124 = vrot.lane.b32.xlu0 %v1063, 80
    %v1125 = vpop.permute.xlu0 %1124
    %1126 = vrot.lane.b32.xlu0 %v1065, 80
    %v1127 = vpop.permute.xlu0 %1126
    %1130 = vrot.lane.b32.xlu0 %v1063, 64
    %v1131 = vpop.permute.xlu0 %1130
    %1132 = vrot.lane.b32.xlu0 %v1065, 64
    %v1133 = vpop.permute.xlu0 %1132
    %1136 = vrot.lane.b32.xlu0 %v1063, 48
    %v1137 = vpop.permute.xlu0 %1136
    %1138 = vrot.lane.b32.xlu0 %v1065, 48
    %v1139 = vpop.permute.xlu0 %1138
    %1142 = vrot.lane.b32.xlu0 %v1063, 32
    %v1143 = vpop.permute.xlu0 %1142
    %1144 = vrot.lane.b32.xlu0 %v1065, 32
    %v1145 = vpop.permute.xlu0 %1144
    %1148 = vrot.lane.b32.xlu0 %v1063, 16
    %v1149 = vpop.permute.xlu0 %1148
    %1150 = vrot.lane.b32.xlu0 %v1065, 16
    %v1151 = vpop.permute.xlu0 %1150
    %v1154 = vld [vmem:[%s5] sm:$0xff]
    %v1155 = vld [vmem:[%s5 + $0x8] sm:$0xff]
    %v1156 = vld [vmem:[%s7] sm:$0xff]
    %v1157 = vld [vmem:[%s9] sm:$0xff]
    %v1158 = vld [vmem:[%s9 + $0x8] sm:$0xff]
    %v1159 = vld [vmem:[%s9 + $0x10] sm:$0xff]
    %v1160 = vld [vmem:[%s9 + $0x18] sm:$0xff]
    %v1161 = vld [vmem:[%s11] sm:$0xff]
    %v1162 = vld [vmem:[%s11 + $0x8] sm:$0xff]
    %v1163 = vld [vmem:[%s11 + $0x10] sm:$0xff]
    %v1164 = vld [vmem:[%s11 + $0x18] sm:$0xff]
    %v1165 = vld [vmem:[#allocation20] sm:$0x1]
    %v1166 = vld [vmem:[#allocation21] sm:$0xff]
    %v1167 = vld [vmem:[#allocation21 + $0x8] sm:$0xff]
    %v1168 = vld [vmem:[#allocation23] sm:$0x1]
    %v1169 = vld [vmem:[#allocation24] sm:$0x1]
    %v1171 = vsel %vm687, %v1154, 0
    %v1174 = vsel %vm687, %v1155, 0
    %1176 = vmatprep.subr.mxu0 0.0
    %1177 = vmatpush1.msra.mxu0 %v676
    %1178 = vmatprep.subr.mxu0 0.0
    %1179 = vmatpush1.msra.mxu0 0.0
    %1180 = vmatprep.subr.mxu0 0.0
    %1181 = vmatpush1.msra.mxu0 0.0
    %1182 = vmatprep.subr.mxu0 0.0
    %1183 = vmatpush1.msra.mxu0 0.0
    %1184 = vmatprep.subr.mxu0 0.0
    %1185 = vmatpush1.msra.mxu0 0.0
    %1186 = vmatprep.subr.mxu0 0.0
    %1187 = vmatpush1.msra.mxu0 0.0
    %1188 = vmatprep.subr.mxu0 0.0
    %1189 = vmatpush1.msra.mxu0 0.0
    %1190 = vmatprep.subr.mxu0 0.0
    %1191 = vmatpush1.msra.mxu0 0.0
    %1192 = vmatprep.subr.mxu0 0.0
    %1193 = vmatpush1.msra.mxu0 0.0
    %1194 = vmatprep.subr.mxu0 0.0
    %1195 = vmatpush1.msra.mxu0 0.0
    %1196 = vmatprep.subr.mxu0 0.0
    %1197 = vmatpush1.msra.mxu0 0.0
    %1198 = vmatprep.subr.mxu0 0.0
    %1199 = vmatpush1.msra.mxu0 0.0
    %1200 = vmatprep.subr.mxu0 0.0
    %1201 = vmatpush1.msra.mxu0 0.0
    %1202 = vmatprep.subr.mxu0 0.0
    %1203 = vmatpush1.msra.mxu0 0.0
    %1204 = vmatprep.subr.mxu0 0.0
    %1205 = vmatpush1.msra.mxu0 0.0
    %1206 = vmatprep.subr.mxu0 0.0
    %1207 = vmatpush1.msra.mxu0 0.0
    %1208 = vmatprep.subr.mxu0 0.0
    %1209 = vmatpush1.msra.mxu0 0.0
    %1210 = vmatprep.subr.mxu0 0.0
    %1211 = vmatpush1.msra.mxu0 0.0
    %1212 = vmatprep.subr.mxu0 0.0
    %1213 = vmatpush1.msra.mxu0 0.0
    %1214 = vmatprep.subr.mxu0 0.0
    %1215 = vmatpush1.msra.mxu0 0.0
    %1216 = vmatprep.subr.mxu0 0.0
    %1217 = vmatpush1.msra.mxu0 0.0
    %1218 = vmatprep.subr.mxu0 0.0
    %1219 = vmatpush1.msra.mxu0 0.0
    %1220 = vmatprep.subr.mxu0 0.0
    %1221 = vmatpush1.msra.mxu0 0.0
    %1222 = vmatprep.subr.mxu0 0.0
    %1223 = vmatpush1.msra.mxu0 0.0
    %1224 = vmatprep.subr.mxu0 0.0
    %1225 = vmatpush1.msra.mxu0 0.0
    %1226 = vmatprep.subr.mxu0 0.0
    %1227 = vmatpush1.msra.mxu0 0.0
    %1228 = vmatprep.subr.mxu0 0.0
    %1229 = vmatpush1.msra.mxu0 0.0
    %1230 = vmatprep.subr.mxu0 0.0
    %1231 = vmatpush1.msra.mxu0 0.0
    %1232 = vmatprep.subr.mxu0 0.0
    %1233 = vmatpush1.msra.mxu0 0.0
    %1234 = vmatprep.subr.mxu0 0.0
    %1235 = vmatpush1.msra.mxu0 0.0
    %1236 = vmatprep.subr.mxu0 0.0
    %1237 = vmatpush1.msra.mxu0 0.0
    %1238 = vmatprep.subr.mxu0 0.0
    %1239 = vmatpush1.msra.mxu0 0.0
    %1240 = vmatprep.mubr.f32.mxu0 0.0
    %1241 = vmatmul.mubr.f32.gmra.mrb[0].mxu0 %v1171
    %v1242 = vpop.f32.mrb[0].mxu0
    %v1243 = vadd.f32 0.0, %v1242
    %v1244 = vpop.f32.mrb[0].mxu0
    %1245 = vmatprep.mubr.f32.mxu0 0.0
    %1246 = vmatmul.mubr.f32.gmra.mrb[0].mxu0 %v1174
    %v1247 = vpop.f32.mrb[0].mxu0
    %v1248 = vadd.f32 0.0, %v1247
    %v1249 = vpop.f32.mrb[0].mxu0
    %1250 = vdwg.mxu0
    %v1252 = vsel %vm346, %v1243, 0
    %v1255 = vsel %vm346, %v1248, 0
    %1257 = vmatprep.subr.mxu0 %v1158
    %1258 = vmatpush1.msra.mxu0 %v1157
    %1259 = vmatprep.subr.mxu0 %v1160
    %1260 = vmatpush1.msra.mxu0 %v1159
    %1261 = vmatprep.subr.mxu0 0.0
    %1262 = vmatpush1.msra.mxu0 0.0
    %1263 = vmatprep.subr.mxu0 0.0
    %1264 = vmatpush1.msra.mxu0 0.0
    %1265 = vmatprep.subr.mxu0 0.0
    %1266 = vmatpush1.msra.mxu0 0.0
    %1267 = vmatprep.subr.mxu0 0.0
    %1268 = vmatpush1.msra.mxu0 0.0
    %1269 = vmatprep.subr.mxu0 0.0
    %1270 = vmatpush1.msra.mxu0 0.0
    %1271 = vmatprep.subr.mxu0 0.0
    %1272 = vmatpush1.msra.mxu0 0.0
    %1273 = vmatprep.subr.mxu0 0.0
    %1274 = vmatpush1.msra.mxu0 0.0
    %1275 = vmatprep.subr.mxu0 0.0
    %1276 = vmatpush1.msra.mxu0 0.0
    %1277 = vmatprep.subr.mxu0 0.0
    %1278 = vmatpush1.msra.mxu0 0.0
    %1279 = vmatprep.subr.mxu0 0.0
    %1280 = vmatpush1.msra.mxu0 0.0
    %1281 = vmatprep.subr.mxu0 0.0
    %1282 = vmatpush1.msra.mxu0 0.0
    %1283 = vmatprep.subr.mxu0 0.0
    %1284 = vmatpush1.msra.mxu0 0.0
    %1285 = vmatprep.subr.mxu0 0.0
    %1286 = vmatpush1.msra.mxu0 0.0
    %1287 = vmatprep.subr.mxu0 0.0
    %1288 = vmatpush1.msra.mxu0 0.0
    %1289 = vmatprep.subr.mxu0 0.0
    %1290 = vmatpush1.msra.mxu0 0.0
    %1291 = vmatprep.subr.mxu0 0.0
    %1292 = vmatpush1.msra.mxu0 0.0
    %1293 = vmatprep.subr.mxu0 0.0
    %1294 = vmatpush1.msra.mxu0 0.0
    %1295 = vmatprep.subr.mxu0 0.0
    %1296 = vmatpush1.msra.mxu0 0.0
    %1297 = vmatprep.subr.mxu0 0.0
    %1298 = vmatpush1.msra.mxu0 0.0
    %1299 = vmatprep.subr.mxu0 0.0
    %1300 = vmatpush1.msra.mxu0 0.0
    %1301 = vmatprep.subr.mxu0 0.0
    %1302 = vmatpush1.msra.mxu0 0.0
    %1303 = vmatprep.subr.mxu0 0.0
    %1304 = vmatpush1.msra.mxu0 0.0
    %1305 = vmatprep.subr.mxu0 0.0
    %1306 = vmatpush1.msra.mxu0 0.0
    %1307 = vmatprep.subr.mxu0 0.0
    %1308 = vmatpush1.msra.mxu0 0.0
    %1309 = vmatprep.subr.mxu0 0.0
    %1310 = vmatpush1.msra.mxu0 0.0
    %1311 = vmatprep.subr.mxu0 0.0
    %1312 = vmatpush1.msra.mxu0 0.0
    %1313 = vmatprep.subr.mxu0 0.0
    %1314 = vmatpush1.msra.mxu0 0.0
    %1315 = vmatprep.subr.mxu0 0.0
    %1316 = vmatpush1.msra.mxu0 0.0
    %1317 = vmatprep.subr.mxu0 0.0
    %1318 = vmatpush1.msra.mxu0 0.0
    %1319 = vmatprep.subr.mxu0 0.0
    %1320 = vmatpush1.msra.mxu0 0.0
    %1321 = vmatprep.mubr.f32.mxu0 0.0
    %1322 = vmatmul.mubr.f32.gmra.mrb[0].mxu0 %v1252
    %v1323 = vpop.f32.mrb[0].mxu0
    %v1324 = vadd.f32 0.0, %v1323
    %v1325 = vpop.f32.mrb[0].mxu0
    %v1326 = vadd.f32 0.0, %v1325
    %1327 = vmatprep.mubr.f32.mxu0 0.0
    %1328 = vmatmul.mubr.f32.gmra.mrb[0].mxu0 %v1255
    %v1329 = vpop.f32.mrb[0].mxu0
    %v1330 = vadd.f32 0.0, %v1329
    %v1331 = vpop.f32.mrb[0].mxu0
    %v1332 = vadd.f32 0.0, %v1331
    %1333 = vdwg.mxu0
    %v1334 = vmul.f32 %v1324, %v1161
    %v1335 = vmul.f32 %v1326, %v1162
    %v1336 = vmul.f32 %v1330, %v1163
    %v1337 = vmul.f32 %v1332, %v1164
    %1338 = vmatprep.subr.mxu0 0.0
    %1339 = vmatpush1.msra.mxu0 %v1062
    %1340 = vmatprep.subr.mxu0 0.0
    %1341 = vmatpush1.msra.mxu0 %v1064
    %1342 = vmatprep.subr.mxu0 0.0
    %1343 = vmatpush1.msra.mxu0 %v1069
    %1344 = vmatprep.subr.mxu0 0.0
    %1345 = vmatpush1.msra.mxu0 %v1071
    %1346 = vmatprep.subr.mxu0 0.0
    %1347 = vmatpush1.msra.mxu0 %v1075
    %1348 = vmatprep.subr.mxu0 0.0
    %1349 = vmatpush1.msra.mxu0 %v1077
    %1350 = vmatprep.subr.mxu0 0.0
    %1351 = vmatpush1.msra.mxu0 %v1081
    %1352 = vmatprep.subr.mxu0 0.0
    %1353 = vmatpush1.msra.mxu0 %v1083
    %1354 = vmatprep.subr.mxu0 0.0
    %1355 = vmatpush1.msra.mxu0 %v1087
    %1356 = vmatprep.subr.mxu0 0.0
    %1357 = vmatpush1.msra.mxu0 %v1089
    %1358 = vmatprep.subr.mxu0 0.0
    %1359 = vmatpush1.msra.mxu0 %v1093
    %1360 = vmatprep.subr.mxu0 0.0
    %1361 = vmatpush1.msra.mxu0 %v1095
    %1362 = vmatprep.subr.mxu0 0.0
    %1363 = vmatpush1.msra.mxu0 %v1099
    %1364 = vmatprep.subr.mxu0 0.0
    %1365 = vmatpush1.msra.mxu0 %v1101
    %1366 = vmatprep.subr.mxu0 0.0
    %1367 = vmatpush1.msra.mxu0 %v1105
    %1368 = vmatprep.subr.mxu0 0.0
    %1369 = vmatpush1.msra.mxu0 %v1107
    %1370 = vmatprep.subr.mxu0 0.0
    %1371 = vmatpush1.msra.mxu0 %v1063
    %1372 = vmatprep.subr.mxu0 0.0
    %1373 = vmatpush1.msra.mxu0 %v1065
    %1374 = vmatprep.subr.mxu0 0.0
    %1375 = vmatpush1.msra.mxu0 %v1113
    %1376 = vmatprep.subr.mxu0 0.0
    %1377 = vmatpush1.msra.mxu0 %v1115
    %1378 = vmatprep.subr.mxu0 0.0
    %1379 = vmatpush1.msra.mxu0 %v1119
    %1380 = vmatprep.subr.mxu0 0.0
    %1381 = vmatpush1.msra.mxu0 %v1121
    %1382 = vmatprep.subr.mxu0 0.0
    %1383 = vmatpush1.msra.mxu0 %v1125
    %1384 = vmatprep.subr.mxu0 0.0
    %1385 = vmatpush1.msra.mxu0 %v1127
    %1386 = vmatprep.subr.mxu0 0.0
    %1387 = vmatpush1.msra.mxu0 %v1131
    %1388 = vmatprep.subr.mxu0 0.0
    %1389 = vmatpush1.msra.mxu0 %v1133
    %1390 = vmatprep.subr.mxu0 0.0
    %1391 = vmatpush1.msra.mxu0 %v1137
    %1392 = vmatprep.subr.mxu0 0.0
    %1393 = vmatpush1.msra.mxu0 %v1139
    %1394 = vmatprep.subr.mxu0 0.0
    %1395 = vmatpush1.msra.mxu0 %v1143
    %1396 = vmatprep.subr.mxu0 0.0
    %1397 = vmatpush1.msra.mxu0 %v1145
    %1398 = vmatprep.subr.mxu0 0.0
    %1399 = vmatpush1.msra.mxu0 %v1149
    %1400 = vmatprep.subr.mxu0 0.0
    %1401 = vmatpush1.msra.mxu0 %v1151
    %1402 = vmatprep.mubr.f32.mxu0 %v1335
    %1403 = vmatmul.mubr.f32.gmra.mrb[0].mxu0 %v1334
    %v1404 = vpop.f32.mrb[0].mxu0
    %v1405 = vadd.f32 0.0, %v1404
    %v1406 = vpop.f32.mrb[0].mxu0
    %1407 = vmatprep.mubr.f32.mxu0 %v1337
    %1408 = vmatmul.mubr.f32.gmra.mrb[0].mxu0 %v1336
    %v1409 = vpop.f32.mrb[0].mxu0
    %v1410 = vadd.f32 0.0, %v1409
    %v1411 = vpop.f32.mrb[0].mxu0
    %1412 = vdwg.mxu0
    %v1414 = vlaneseq
    %v1415 = vshrl.u32 %v1414, 7
    %v1416 = vsub.s32 0, %v1415
    %v1417 = vrot.slane %v1165, %v1416
    %v1420 = vsel %vm346, %v1156, 0
    %1422 = vmatprep.subr.mxu0 0.0
    %1423 = vmatpush1.msra.mxu0 %v1405
    %1424 = vmatprep.subr.mxu0 0.0
    %1425 = vmatpush1.msra.mxu0 %v1410
    %1426 = vmatprep.subr.mxu0 0.0
    %1427 = vmatpush1.msra.mxu0 0.0
    %1428 = vmatprep.subr.mxu0 0.0
    %1429 = vmatpush1.msra.mxu0 0.0
    %1430 = vmatprep.subr.mxu0 0.0
    %1431 = vmatpush1.msra.mxu0 0.0
    %1432 = vmatprep.subr.mxu0 0.0
    %1433 = vmatpush1.msra.mxu0 0.0
    %1434 = vmatprep.subr.mxu0 0.0
    %1435 = vmatpush1.msra.mxu0 0.0
    %1436 = vmatprep.subr.mxu0 0.0
    %1437 = vmatpush1.msra.mxu0 0.0
    %1438 = vmatprep.subr.mxu0 0.0
    %1439 = vmatpush1.msra.mxu0 0.0
    %1440 = vmatprep.subr.mxu0 0.0
    %1441 = vmatpush1.msra.mxu0 0.0
    %1442 = vmatprep.subr.mxu0 0.0
    %1443 = vmatpush1.msra.mxu0 0.0
    %1444 = vmatprep.subr.mxu0 0.0
    %1445 = vmatpush1.msra.mxu0 0.0
    %1446 = vmatprep.subr.mxu0 0.0
    %1447 = vmatpush1.msra.mxu0 0.0
    %1448 = vmatprep.subr.mxu0 0.0
    %1449 = vmatpush1.msra.mxu0 0.0
    %1450 = vmatprep.subr.mxu0 0.0
    %1451 = vmatpush1.msra.mxu0 0.0
    %1452 = vmatprep.subr.mxu0 0.0
    %1453 = vmatpush1.msra.mxu0 0.0
    %1454 = vmatprep.subr.mxu0 0.0
    %1455 = vmatpush1.msra.mxu0 0.0
    %1456 = vmatprep.subr.mxu0 0.0
    %1457 = vmatpush1.msra.mxu0 0.0
    %1458 = vmatprep.subr.mxu0 0.0
    %1459 = vmatpush1.msra.mxu0 0.0
    %1460 = vmatprep.subr.mxu0 0.0
    %1461 = vmatpush1.msra.mxu0 0.0
    %1462 = vmatprep.subr.mxu0 0.0
    %1463 = vmatpush1.msra.mxu0 0.0
    %1464 = vmatprep.subr.mxu0 0.0
    %1465 = vmatpush1.msra.mxu0 0.0
    %1466 = vmatprep.subr.mxu0 0.0
    %1467 = vmatpush1.msra.mxu0 0.0
    %1468 = vmatprep.subr.mxu0 0.0
    %1469 = vmatpush1.msra.mxu0 0.0
    %1470 = vmatprep.subr.mxu0 0.0
    %1471 = vmatpush1.msra.mxu0 0.0
    %1472 = vmatprep.subr.mxu0 0.0
    %1473 = vmatpush1.msra.mxu0 0.0
    %1474 = vmatprep.subr.mxu0 0.0
    %1475 = vmatpush1.msra.mxu0 0.0
    %1476 = vmatprep.subr.mxu0 0.0
    %1477 = vmatpush1.msra.mxu0 0.0
    %1478 = vmatprep.subr.mxu0 0.0
    %1479 = vmatpush1.msra.mxu0 0.0
    %1480 = vmatprep.subr.mxu0 0.0
    %1481 = vmatpush1.msra.mxu0 0.0
    %1482 = vmatprep.subr.mxu0 0.0
    %1483 = vmatpush1.msra.mxu0 0.0
    %1484 = vmatprep.subr.mxu0 0.0
    %1485 = vmatpush1.msra.mxu0 0.0
    %1486 = vmatprep.mubr.f32.mxu0 0.0
    %1487 = vmatmul.mubr.f32.gmra.mrb[0].mxu0 %v1420
    %v1488 = vpop.f32.mrb[0].mxu0
    %v1489 = vadd.f32 %v1417, %v1488
    %v1490 = vpop.f32.mrb[0].mxu0
    %1491 = vdwg.mxu0
    %v1493 = vsel %vm346, %v1489, 0
    %v1496 = vsel %vm346, %v676, 0
    %1498 = vmatprep.subr.mxu0 0.0
    %1499 = vmatpush1.msra.mxu0 %v1166
    %1500 = vmatprep.subr.mxu0 0.0
    %1501 = vmatpush1.msra.mxu0 %v1167
    %1502 = vmatprep.subr.mxu0 0.0
    %1503 = vmatpush1.msra.mxu0 0.0
    %1504 = vmatprep.subr.mxu0 0.0
    %1505 = vmatpush1.msra.mxu0 0.0
    %1506 = vmatprep.subr.mxu0 0.0
    %1507 = vmatpush1.msra.mxu0 0.0
    %1508 = vmatprep.subr.mxu0 0.0
    %1509 = vmatpush1.msra.mxu0 0.0
    %1510 = vmatprep.subr.mxu0 0.0
    %1511 = vmatpush1.msra.mxu0 0.0
    %1512 = vmatprep.subr.mxu0 0.0
    %1513 = vmatpush1.msra.mxu0 0.0
    %1514 = vmatprep.subr.mxu0 0.0
    %1515 = vmatpush1.msra.mxu0 0.0
    %1516 = vmatprep.subr.mxu0 0.0
    %1517 = vmatpush1.msra.mxu0 0.0
    %1518 = vmatprep.subr.mxu0 0.0
    %1519 = vmatpush1.msra.mxu0 0.0
    %1520 = vmatprep.subr.mxu0 0.0
    %1521 = vmatpush1.msra.mxu0 0.0
    %1522 = vmatprep.subr.mxu0 0.0
    %1523 = vmatpush1.msra.mxu0 0.0
    %1524 = vmatprep.subr.mxu0 0.0
    %1525 = vmatpush1.msra.mxu0 0.0
    %1526 = vmatprep.subr.mxu0 0.0
    %1527 = vmatpush1.msra.mxu0 0.0
    %1528 = vmatprep.subr.mxu0 0.0
    %1529 = vmatpush1.msra.mxu0 0.0
    %1530 = vmatprep.subr.mxu0 0.0
    %1531 = vmatpush1.msra.mxu0 0.0
    %1532 = vmatprep.subr.mxu0 0.0
    %1533 = vmatpush1.msra.mxu0 0.0
    %1534 = vmatprep.subr.mxu0 0.0
    %1535 = vmatpush1.msra.mxu0 0.0
    %1536 = vmatprep.subr.mxu0 0.0
    %1537 = vmatpush1.msra.mxu0 0.0
    %1538 = vmatprep.subr.mxu0 0.0
    %1539 = vmatpush1.msra.mxu0 0.0
    %1540 = vmatprep.subr.mxu0 0.0
    %1541 = vmatpush1.msra.mxu0 0.0
    %1542 = vmatprep.subr.mxu0 0.0
    %1543 = vmatpush1.msra.mxu0 0.0
    %1544 = vmatprep.subr.mxu0 0.0
    %1545 = vmatpush1.msra.mxu0 0.0
    %1546 = vmatprep.subr.mxu0 0.0
    %1547 = vmatpush1.msra.mxu0 0.0
    %1548 = vmatprep.subr.mxu0 0.0
    %1549 = vmatpush1.msra.mxu0 0.0
    %1550 = vmatprep.subr.mxu0 0.0
    %1551 = vmatpush1.msra.mxu0 0.0
    %1552 = vmatprep.subr.mxu0 0.0
    %1553 = vmatpush1.msra.mxu0 0.0
    %1554 = vmatprep.subr.mxu0 0.0
    %1555 = vmatpush1.msra.mxu0 0.0
    %1556 = vmatprep.subr.mxu0 0.0
    %1557 = vmatpush1.msra.mxu0 0.0
    %1558 = vmatprep.subr.mxu0 0.0
    %1559 = vmatpush1.msra.mxu0 0.0
    %1560 = vmatprep.subr.mxu0 0.0
    %1561 = vmatpush1.msra.mxu0 0.0
    %1562 = vmatprep.mubr.f32.mxu0 0.0
    %1563 = vmatmul.mubr.f32.gmra.mrb[0].mxu0 %v1493
    %v1564 = vpop.f32.mrb[0].mxu0
    %v1565 = vadd.f32 0.0, %v1564
    %v1566 = vpop.f32.mrb[0].mxu0
    %1567 = vmatprep.mubr.f32.mxu0 0.0
    %1568 = vmatmul.mubr.f32.gmra.mrb[0].mxu0 %v1496
    %v1569 = vpop.f32.mrb[0].mxu0
    %v1570 = vadd.f32 0.0, %v1569
    %v1571 = vpop.f32.mrb[0].mxu0
    %1572 = vdwg.mxu0
    %v1574 = vlaneseq
    %v1575 = vshrl.u32 %v1574, 7
    %v1576 = vsub.s32 0, %v1575
    %v1577 = vrot.slane %v1168, %v1576
    %v1579 = vadd.f32 %v1565, %v1577
    %v1581 = vlaneseq
    %v1582 = vshrl.u32 %v1581, 7
    %v1583 = vsub.s32 0, %v1582
    %v1584 = vrot.slane %v1169, %v1583
    %1585 = vrot.lane.b32.xlu0 %v1584, 48
    %v1586 = vpop.permute.xlu0 %1585
    %v1588 = vadd.f32 %v1570, %v1586
    %1590 = vrot.lane.b32.xlu0 %v1588, 80
    %v1591 = vpop.permute.xlu0 %1590
    %v1593 = vadd.f32 %v1579, %v1591
    %v1594 = vxor.u32 %v1593, 2147483648
    %v1595 = vmul.f32 %v1594, 1.442695
    %v1596 = vpow.pop %v1595
    %v1597 = vadd.f32 %v1596, 1.0
    %v1598 = vrcp.pop %v1597
    %v1599 = vmul.f32 1.0, %v1598
    %1600 = vrot.lane.b32.xlu0 %v1588, 48
    %v1601 = vpop.permute.xlu0 %1600
    %v1603 = vmul.f32 %v1599, %v1601
    %1605 = vrot.lane.b32.xlu0 %v1603, 32
    %v1606 = vpop.permute.xlu0 %1605
    %v1608 = vadd.f32 %v1579, %v1606
    %v1609 = vtanh.pop %v1608
    %v1610 = vsub.f32 1.0, %v1599
    %1612 = vrot.lane.b32.xlu0 %v1609, 112
    %v1613 = vpop.permute.xlu0 %1612
    %v1615 = vmul.f32 %v1610, %v1613
    %1616 = vrot.lane.b32.xlu0 %v676, 16
    %v1617 = vpop.permute.xlu0 %1616
    %v1619 = vmul.f32 %v1599, %v1617
    %v1620 = vadd.f32 %v1615, %v1619
    %1622 = vrot.lane.b32.xlu0 %v1620, 112
    %v1623 = vpop.permute.xlu0 %1622
    %1625 = vmatprep.subr.mxu0 0.0
    %1626 = vmatpush1.msra.mxu0 %v1623
    %1627 = vmatprep.subr.mxu0 0.0
    %1628 = vmatpush1.msra.mxu0 0.0
    %1629 = vmatprep.subr.mxu0 0.0
    %1630 = vmatpush1.msra.mxu0 0.0
    %1631 = vmatprep.subr.mxu0 0.0
    %1632 = vmatpush1.msra.mxu0 0.0
    %1633 = vmatprep.subr.mxu0 0.0
    %1634 = vmatpush1.msra.mxu0 0.0
    %1635 = vmatprep.subr.mxu0 0.0
    %1636 = vmatpush1.msra.mxu0 0.0
    %1637 = vmatprep.subr.mxu0 0.0
    %1638 = vmatpush1.msra.mxu0 0.0
    %1639 = vmatprep.subr.mxu0 0.0
    %1640 = vmatpush1.msra.mxu0 0.0
    %1641 = vmatprep.subr.mxu0 0.0
    %1642 = vmatpush1.msra.mxu0 0.0
    %1643 = vmatprep.subr.mxu0 0.0
    %1644 = vmatpush1.msra.mxu0 0.0
    %1645 = vmatprep.subr.mxu0 0.0
    %1646 = vmatpush1.msra.mxu0 0.0
    %1647 = vmatprep.subr.mxu0 0.0
    %1648 = vmatpush1.msra.mxu0 0.0
    %1649 = vmatprep.subr.mxu0 0.0
    %1650 = vmatpush1.msra.mxu0 0.0
    %1651 = vmatprep.subr.mxu0 0.0
    %1652 = vmatpush1.msra.mxu0 0.0
    %1653 = vmatprep.subr.mxu0 0.0
    %1654 = vmatpush1.msra.mxu0 0.0
    %1655 = vmatprep.subr.mxu0 0.0
    %1656 = vmatpush1.msra.mxu0 0.0
    %1657 = vmatprep.subr.mxu0 0.0
    %1658 = vmatpush1.msra.mxu0 0.0
    %1659 = vmatprep.subr.mxu0 0.0
    %1660 = vmatpush1.msra.mxu0 0.0
    %1661 = vmatprep.subr.mxu0 0.0
    %1662 = vmatpush1.msra.mxu0 0.0
    %1663 = vmatprep.subr.mxu0 0.0
    %1664 = vmatpush1.msra.mxu0 0.0
    %1665 = vmatprep.subr.mxu0 0.0
    %1666 = vmatpush1.msra.mxu0 0.0
    %1667 = vmatprep.subr.mxu0 0.0
    %1668 = vmatpush1.msra.mxu0 0.0
    %1669 = vmatprep.subr.mxu0 0.0
    %1670 = vmatpush1.msra.mxu0 0.0
    %1671 = vmatprep.subr.mxu0 0.0
    %1672 = vmatpush1.msra.mxu0 0.0
    %1673 = vmatprep.subr.mxu0 0.0
    %1674 = vmatpush1.msra.mxu0 0.0
    %1675 = vmatprep.subr.mxu0 0.0
    %1676 = vmatpush1.msra.mxu0 0.0
    %1677 = vmatprep.subr.mxu0 0.0
    %1678 = vmatpush1.msra.mxu0 0.0
    %1679 = vmatprep.subr.mxu0 0.0
    %1680 = vmatpush1.msra.mxu0 0.0
    %1681 = vmatprep.subr.mxu0 0.0
    %1682 = vmatpush1.msra.mxu0 0.0
    %1683 = vmatprep.subr.mxu0 0.0
    %1684 = vmatpush1.msra.mxu0 0.0
    %1685 = vmatprep.subr.mxu0 0.0
    %1686 = vmatpush1.msra.mxu0 0.0
    %1687 = vmatprep.subr.mxu0 0.0
    %1688 = vmatpush1.msra.mxu0 0.0
    %1689 = vmatprep.mubr.f32.mxu0 0.0
    %1690 = vmatmul.mubr.f32.gmra.mrb[0].mxu0 %v1171
    %v1691 = vpop.f32.mrb[0].mxu0
    %v1692 = vadd.f32 0.0, %v1691
    %v1693 = vpop.f32.mrb[0].mxu0
    %1694 = vmatprep.mubr.f32.mxu0 0.0
    %1695 = vmatmul.mubr.f32.gmra.mrb[0].mxu0 %v1174
    %v1696 = vpop.f32.mrb[0].mxu0
    %v1697 = vadd.f32 0.0, %v1696
    %v1698 = vpop.f32.mrb[0].mxu0
    %1699 = vdwg.mxu0
    %v1701 = vsel %vm346, %v1692, 0
    %v1704 = vsel %vm346, %v1697, 0
    %1706 = vmatprep.subr.mxu0 %v1158
    %1707 = vmatpush1.msra.mxu0 %v1157
    %1708 = vmatprep.subr.mxu0 %v1160
    %1709 = vmatpush1.msra.mxu0 %v1159
    %1710 = vmatprep.subr.mxu0 0.0
    %1711 = vmatpush1.msra.mxu0 0.0
    %1712 = vmatprep.subr.mxu0 0.0
    %1713 = vmatpush1.msra.mxu0 0.0
    %1714 = vmatprep.subr.mxu0 0.0
    %1715 = vmatpush1.msra.mxu0 0.0
    %1716 = vmatprep.subr.mxu0 0.0
    %1717 = vmatpush1.msra.mxu0 0.0
    %1718 = vmatprep.subr.mxu0 0.0
    %1719 = vmatpush1.msra.mxu0 0.0
    %1720 = vmatprep.subr.mxu0 0.0
    %1721 = vmatpush1.msra.mxu0 0.0
    %1722 = vmatprep.subr.mxu0 0.0
    %1723 = vmatpush1.msra.mxu0 0.0
    %1724 = vmatprep.subr.mxu0 0.0
    %1725 = vmatpush1.msra.mxu0 0.0
    %1726 = vmatprep.subr.mxu0 0.0
    %1727 = vmatpush1.msra.mxu0 0.0
    %1728 = vmatprep.subr.mxu0 0.0
    %1729 = vmatpush1.msra.mxu0 0.0
    %1730 = vmatprep.subr.mxu0 0.0
    %1731 = vmatpush1.msra.mxu0 0.0
    %1732 = vmatprep.subr.mxu0 0.0
    %1733 = vmatpush1.msra.mxu0 0.0
    %1734 = vmatprep.subr.mxu0 0.0
    %1735 = vmatpush1.msra.mxu0 0.0
    %1736 = vmatprep.subr.mxu0 0.0
    %1737 = vmatpush1.msra.mxu0 0.0
    %1738 = vmatprep.subr.mxu0 0.0
    %1739 = vmatpush1.msra.mxu0 0.0
    %1740 = vmatprep.subr.mxu0 0.0
    %1741 = vmatpush1.msra.mxu0 0.0
    %1742 = vmatprep.subr.mxu0 0.0
    %1743 = vmatpush1.msra.mxu0 0.0
    %1744 = vmatprep.subr.mxu0 0.0
    %1745 = vmatpush1.msra.mxu0 0.0
    %1746 = vmatprep.subr.mxu0 0.0
    %1747 = vmatpush1.msra.mxu0 0.0
    %1748 = vmatprep.subr.mxu0 0.0
    %1749 = vmatpush1.msra.mxu0 0.0
    %1750 = vmatprep.subr.mxu0 0.0
    %1751 = vmatpush1.msra.mxu0 0.0
    %1752 = vmatprep.subr.mxu0 0.0
    %1753 = vmatpush1.msra.mxu0 0.0
    %1754 = vmatprep.subr.mxu0 0.0
    %1755 = vmatpush1.msra.mxu0 0.0
    %1756 = vmatprep.subr.mxu0 0.0
    %1757 = vmatpush1.msra.mxu0 0.0
    %1758 = vmatprep.subr.mxu0 0.0
    %1759 = vmatpush1.msra.mxu0 0.0
    %1760 = vmatprep.subr.mxu0 0.0
    %1761 = vmatpush1.msra.mxu0 0.0
    %1762 = vmatprep.subr.mxu0 0.0
    %1763 = vmatpush1.msra.mxu0 0.0
    %1764 = vmatprep.subr.mxu0 0.0
    %1765 = vmatpush1.msra.mxu0 0.0
    %1766 = vmatprep.subr.mxu0 0.0
    %1767 = vmatpush1.msra.mxu0 0.0
    %1768 = vmatprep.subr.mxu0 0.0
    %1769 = vmatpush1.msra.mxu0 0.0
    %1770 = vmatprep.mubr.f32.mxu0 0.0
    %1771 = vmatmul.mubr.f32.gmra.mrb[0].mxu0 %v1701
    %v1772 = vpop.f32.mrb[0].mxu0
    %v1773 = vadd.f32 0.0, %v1772
    %v1774 = vpop.f32.mrb[0].mxu0
    %v1775 = vadd.f32 0.0, %v1774
    %1776 = vmatprep.mubr.f32.mxu0 0.0
    %1777 = vmatmul.mubr.f32.gmra.mrb[0].mxu0 %v1704
    %v1778 = vpop.f32.mrb[0].mxu0
    %v1779 = vadd.f32 0.0, %v1778
    %v1780 = vpop.f32.mrb[0].mxu0
    %v1781 = vadd.f32 0.0, %v1780
    %1782 = vdwg.mxu0
    %v1783 = vmul.f32 %v1773, %v1161
    %v1784 = vmul.f32 %v1775, %v1162
    %v1785 = vmul.f32 %v1779, %v1163
    %v1786 = vmul.f32 %v1781, %v1164
    %1787 = vmatprep.subr.mxu0 0.0
    %1788 = vmatpush1.msra.mxu0 %v1062
    %1789 = vmatprep.subr.mxu0 0.0
    %1790 = vmatpush1.msra.mxu0 %v1064
    %1791 = vmatprep.subr.mxu0 0.0
    %1792 = vmatpush1.msra.mxu0 %v1069
    %1793 = vmatprep.subr.mxu0 0.0
    %1794 = vmatpush1.msra.mxu0 %v1071
    %1795 = vmatprep.subr.mxu0 0.0
    %1796 = vmatpush1.msra.mxu0 %v1075
    %1797 = vmatprep.subr.mxu0 0.0
    %1798 = vmatpush1.msra.mxu0 %v1077
    %1799 = vmatprep.subr.mxu0 0.0
    %1800 = vmatpush1.msra.mxu0 %v1081
    %1801 = vmatprep.subr.mxu0 0.0
    %1802 = vmatpush1.msra.mxu0 %v1083
    %1803 = vmatprep.subr.mxu0 0.0
    %1804 = vmatpush1.msra.mxu0 %v1087
    %1805 = vmatprep.subr.mxu0 0.0
    %1806 = vmatpush1.msra.mxu0 %v1089
    %1807 = vmatprep.subr.mxu0 0.0
    %1808 = vmatpush1.msra.mxu0 %v1093
    %1809 = vmatprep.subr.mxu0 0.0
    %1810 = vmatpush1.msra.mxu0 %v1095
    %1811 = vmatprep.subr.mxu0 0.0
    %1812 = vmatpush1.msra.mxu0 %v1099
    %1813 = vmatprep.subr.mxu0 0.0
    %1814 = vmatpush1.msra.mxu0 %v1101
    %1815 = vmatprep.subr.mxu0 0.0
    %1816 = vmatpush1.msra.mxu0 %v1105
    %1817 = vmatprep.subr.mxu0 0.0
    %1818 = vmatpush1.msra.mxu0 %v1107
    %1819 = vmatprep.subr.mxu0 0.0
    %1820 = vmatpush1.msra.mxu0 %v1063
    %1821 = vmatprep.subr.mxu0 0.0
    %1822 = vmatpush1.msra.mxu0 %v1065
    %1823 = vmatprep.subr.mxu0 0.0
    %1824 = vmatpush1.msra.mxu0 %v1113
    %1825 = vmatprep.subr.mxu0 0.0
    %1826 = vmatpush1.msra.mxu0 %v1115
    %1827 = vmatprep.subr.mxu0 0.0
    %1828 = vmatpush1.msra.mxu0 %v1119
    %1829 = vmatprep.subr.mxu0 0.0
    %1830 = vmatpush1.msra.mxu0 %v1121
    %1831 = vmatprep.subr.mxu0 0.0
    %1832 = vmatpush1.msra.mxu0 %v1125
    %1833 = vmatprep.subr.mxu0 0.0
    %1834 = vmatpush1.msra.mxu0 %v1127
    %1835 = vmatprep.subr.mxu0 0.0
    %1836 = vmatpush1.msra.mxu0 %v1131
    %1837 = vmatprep.subr.mxu0 0.0
    %1838 = vmatpush1.msra.mxu0 %v1133
    %1839 = vmatprep.subr.mxu0 0.0
    %1840 = vmatpush1.msra.mxu0 %v1137
    %1841 = vmatprep.subr.mxu0 0.0
    %1842 = vmatpush1.msra.mxu0 %v1139
    %1843 = vmatprep.subr.mxu0 0.0
    %1844 = vmatpush1.msra.mxu0 %v1143
    %1845 = vmatprep.subr.mxu0 0.0
    %1846 = vmatpush1.msra.mxu0 %v1145
    %1847 = vmatprep.subr.mxu0 0.0
    %1848 = vmatpush1.msra.mxu0 %v1149
    %1849 = vmatprep.subr.mxu0 0.0
    %1850 = vmatpush1.msra.mxu0 %v1151
    %1851 = vmatprep.mubr.f32.mxu0 %v1784
    %1852 = vmatmul.mubr.f32.gmra.mrb[0].mxu0 %v1783
    %v1853 = vpop.f32.mrb[0].mxu0
    %v1854 = vadd.f32 0.0, %v1853
    %v1855 = vpop.f32.mrb[0].mxu0
    %1856 = vmatprep.mubr.f32.mxu0 %v1786
    %1857 = vmatmul.mubr.f32.gmra.mrb[0].mxu0 %v1785
    %v1858 = vpop.f32.mrb[0].mxu0
    %v1859 = vadd.f32 0.0, %v1858
    %v1860 = vpop.f32.mrb[0].mxu0
    %1861 = vdwg.mxu0
    %1862 = vmatprep.subr.mxu0 0.0
    %1863 = vmatpush1.msra.mxu0 %v1854
    %1864 = vmatprep.subr.mxu0 0.0
    %1865 = vmatpush1.msra.mxu0 %v1859
    %1866 = vmatprep.subr.mxu0 0.0
    %1867 = vmatpush1.msra.mxu0 0.0
    %1868 = vmatprep.subr.mxu0 0.0
    %1869 = vmatpush1.msra.mxu0 0.0
    %1870 = vmatprep.subr.mxu0 0.0
    %1871 = vmatpush1.msra.mxu0 0.0
    %1872 = vmatprep.subr.mxu0 0.0
    %1873 = vmatpush1.msra.mxu0 0.0
    %1874 = vmatprep.subr.mxu0 0.0
    %1875 = vmatpush1.msra.mxu0 0.0
    %1876 = vmatprep.subr.mxu0 0.0
    %1877 = vmatpush1.msra.mxu0 0.0
    %1878 = vmatprep.subr.mxu0 0.0
    %1879 = vmatpush1.msra.mxu0 0.0
    %1880 = vmatprep.subr.mxu0 0.0
    %1881 = vmatpush1.msra.mxu0 0.0
    %1882 = vmatprep.subr.mxu0 0.0
    %1883 = vmatpush1.msra.mxu0 0.0
    %1884 = vmatprep.subr.mxu0 0.0
    %1885 = vmatpush1.msra.mxu0 0.0
    %1886 = vmatprep.subr.mxu0 0.0
    %1887 = vmatpush1.msra.mxu0 0.0
    %1888 = vmatprep.subr.mxu0 0.0
    %1889 = vmatpush1.msra.mxu0 0.0
    %1890 = vmatprep.subr.mxu0 0.0
    %1891 = vmatpush1.msra.mxu0 0.0
    %1892 = vmatprep.subr.mxu0 0.0
    %1893 = vmatpush1.msra.mxu0 0.0
    %1894 = vmatprep.subr.mxu0 0.0
    %1895 = vmatpush1.msra.mxu0 0.0
    %1896 = vmatprep.subr.mxu0 0.0
    %1897 = vmatpush1.msra.mxu0 0.0
    %1898 = vmatprep.subr.mxu0 0.0
    %1899 = vmatpush1.msra.mxu0 0.0
    %1900 = vmatprep.subr.mxu0 0.0
    %1901 = vmatpush1.msra.mxu0 0.0
    %1902 = vmatprep.subr.mxu0 0.0
    %1903 = vmatpush1.msra.mxu0 0.0
    %1904 = vmatprep.subr.mxu0 0.0
    %1905 = vmatpush1.msra.mxu0 0.0
    %1906 = vmatprep.subr.mxu0 0.0
    %1907 = vmatpush1.msra.mxu0 0.0
    %1908 = vmatprep.subr.mxu0 0.0
    %1909 = vmatpush1.msra.mxu0 0.0
    %1910 = vmatprep.subr.mxu0 0.0
    %1911 = vmatpush1.msra.mxu0 0.0
    %1912 = vmatprep.subr.mxu0 0.0
    %1913 = vmatpush1.msra.mxu0 0.0
    %1914 = vmatprep.subr.mxu0 0.0
    %1915 = vmatpush1.msra.mxu0 0.0
    %1916 = vmatprep.subr.mxu0 0.0
    %1917 = vmatpush1.msra.mxu0 0.0
    %1918 = vmatprep.subr.mxu0 0.0
    %1919 = vmatpush1.msra.mxu0 0.0
    %1920 = vmatprep.subr.mxu0 0.0
    %1921 = vmatpush1.msra.mxu0 0.0
    %1922 = vmatprep.subr.mxu0 0.0
    %1923 = vmatpush1.msra.mxu0 0.0
    %1924 = vmatprep.subr.mxu0 0.0
    %1925 = vmatpush1.msra.mxu0 0.0
    %1926 = vmatprep.mubr.f32.mxu0 0.0
    %1927 = vmatmul.mubr.f32.gmra.mrb[0].mxu0 %v1420
    %v1928 = vpop.f32.mrb[0].mxu0
    %v1929 = vadd.f32 %v1417, %v1928
    %v1930 = vpop.f32.mrb[0].mxu0
    %1931 = vdwg.mxu0
    %v1933 = vsel %vm346, %v1929, 0
    %v1935 = vsel %vm346, %v1623, 0
    %1937 = vmatprep.subr.mxu0 0.0
    %1938 = vmatpush1.msra.mxu0 %v1166
    %1939 = vmatprep.subr.mxu0 0.0
    %1940 = vmatpush1.msra.mxu0 %v1167
    %1941 = vmatprep.subr.mxu0 0.0
    %1942 = vmatpush1.msra.mxu0 0.0
    %1943 = vmatprep.subr.mxu0 0.0
    %1944 = vmatpush1.msra.mxu0 0.0
    %1945 = vmatprep.subr.mxu0 0.0
    %1946 = vmatpush1.msra.mxu0 0.0
    %1947 = vmatprep.subr.mxu0 0.0
    %1948 = vmatpush1.msra.mxu0 0.0
    %1949 = vmatprep.subr.mxu0 0.0
    %1950 = vmatpush1.msra.mxu0 0.0
    %1951 = vmatprep.subr.mxu0 0.0
    %1952 = vmatpush1.msra.mxu0 0.0
    %1953 = vmatprep.subr.mxu0 0.0
    %1954 = vmatpush1.msra.mxu0 0.0
    %1955 = vmatprep.subr.mxu0 0.0
    %1956 = vmatpush1.msra.mxu0 0.0
    %1957 = vmatprep.subr.mxu0 0.0
    %1958 = vmatpush1.msra.mxu0 0.0
    %1959 = vmatprep.subr.mxu0 0.0
    %1960 = vmatpush1.msra.mxu0 0.0
    %1961 = vmatprep.subr.mxu0 0.0
    %1962 = vmatpush1.msra.mxu0 0.0
    %1963 = vmatprep.subr.mxu0 0.0
    %1964 = vmatpush1.msra.mxu0 0.0
    %1965 = vmatprep.subr.mxu0 0.0
    %1966 = vmatpush1.msra.mxu0 0.0
    %1967 = vmatprep.subr.mxu0 0.0
    %1968 = vmatpush1.msra.mxu0 0.0
    %1969 = vmatprep.subr.mxu0 0.0
    %1970 = vmatpush1.msra.mxu0 0.0
    %1971 = vmatprep.subr.mxu0 0.0
    %1972 = vmatpush1.msra.mxu0 0.0
    %1973 = vmatprep.subr.mxu0 0.0
    %1974 = vmatpush1.msra.mxu0 0.0
    %1975 = vmatprep.subr.mxu0 0.0
    %1976 = vmatpush1.msra.mxu0 0.0
    %1977 = vmatprep.subr.mxu0 0.0
    %1978 = vmatpush1.msra.mxu0 0.0
    %1979 = vmatprep.subr.mxu0 0.0
    %1980 = vmatpush1.msra.mxu0 0.0
    %1981 = vmatprep.subr.mxu0 0.0
    %1982 = vmatpush1.msra.mxu0 0.0
    %1983 = vmatprep.subr.mxu0 0.0
    %1984 = vmatpush1.msra.mxu0 0.0
    %1985 = vmatprep.subr.mxu0 0.0
    %1986 = vmatpush1.msra.mxu0 0.0
    %1987 = vmatprep.subr.mxu0 0.0
    %1988 = vmatpush1.msra.mxu0 0.0
    %1989 = vmatprep.subr.mxu0 0.0
    %1990 = vmatpush1.msra.mxu0 0.0
    %1991 = vmatprep.subr.mxu0 0.0
    %1992 = vmatpush1.msra.mxu0 0.0
    %1993 = vmatprep.subr.mxu0 0.0
    %1994 = vmatpush1.msra.mxu0 0.0
    %1995 = vmatprep.subr.mxu0 0.0
    %1996 = vmatpush1.msra.mxu0 0.0
    %1997 = vmatprep.subr.mxu0 0.0
    %1998 = vmatpush1.msra.mxu0 0.0
    %1999 = vmatprep.subr.mxu0 0.0
    %2000 = vmatpush1.msra.mxu0 0.0
    %2001 = vmatprep.mubr.f32.mxu0 0.0
    %2002 = vmatmul.mubr.f32.gmra.mrb[0].mxu0 %v1933
    %v2003 = vpop.f32.mrb[0].mxu0
    %v2004 = vadd.f32 0.0, %v2003
    %v2005 = vpop.f32.mrb[0].mxu0
    %2006 = vmatprep.mubr.f32.mxu0 0.0
    %2007 = vmatmul.mubr.f32.gmra.mrb[0].mxu0 %v1935
    %v2008 = vpop.f32.mrb[0].mxu0
    %v2009 = vadd.f32 0.0, %v2008
    %v2010 = vpop.f32.mrb[0].mxu0
    %2011 = vdwg.mxu0
    %v2012 = vadd.f32 %v2004, %v1577
    %v2013 = vadd.f32 %v2009, %v1586
    %2015 = vrot.lane.b32.xlu0 %v2013, 80
    %v2016 = vpop.permute.xlu0 %2015
    %v2018 = vadd.f32 %v2012, %v2016
    %v2019 = vxor.u32 %v2018, 2147483648
    %v2020 = vmul.f32 %v2019, 1.442695
    %v2021 = vpow.pop %v2020
    %v2022 = vadd.f32 %v2021, 1.0
    %v2023 = vrcp.pop %v2022
    %v2024 = vmul.f32 1.0, %v2023
    %2025 = vrot.lane.b32.xlu0 %v2013, 48
    %v2026 = vpop.permute.xlu0 %2025
    %v2028 = vmul.f32 %v2024, %v2026
    %2030 = vrot.lane.b32.xlu0 %v2028, 32
    %v2031 = vpop.permute.xlu0 %2030
    %v2033 = vadd.f32 %v2012, %v2031
    %v2034 = vtanh.pop %v2033
    %v2035 = vsub.f32 1.0, %v2024
    %2037 = vrot.lane.b32.xlu0 %v2034, 112
    %v2038 = vpop.permute.xlu0 %2037
    %v2040 = vmul.f32 %v2035, %v2038
    %v2041 = vmul.f32 %v2024, %v1620
    %v2042 = vadd.f32 %v2040, %v2041
    %2044 = vrot.lane.b32.xlu0 %v2042, 112
    %v2045 = vpop.permute.xlu0 %2044
    %2047 = vmatprep.subr.mxu0 0.0
    %2048 = vmatpush1.msra.mxu0 %v2045
    %2049 = vmatprep.subr.mxu0 0.0
    %2050 = vmatpush1.msra.mxu0 0.0
    %2051 = vmatprep.subr.mxu0 0.0
    %2052 = vmatpush1.msra.mxu0 0.0
    %2053 = vmatprep.subr.mxu0 0.0
    %2054 = vmatpush1.msra.mxu0 0.0
    %2055 = vmatprep.subr.mxu0 0.0
    %2056 = vmatpush1.msra.mxu0 0.0
    %2057 = vmatprep.subr.mxu0 0.0
    %2058 = vmatpush1.msra.mxu0 0.0
    %2059 = vmatprep.subr.mxu0 0.0
    %2060 = vmatpush1.msra.mxu0 0.0
    %2061 = vmatprep.subr.mxu0 0.0
    %2062 = vmatpush1.msra.mxu0 0.0
    %2063 = vmatprep.subr.mxu0 0.0
    %2064 = vmatpush1.msra.mxu0 0.0
    %2065 = vmatprep.subr.mxu0 0.0
    %2066 = vmatpush1.msra.mxu0 0.0
    %2067 = vmatprep.subr.mxu0 0.0
    %2068 = vmatpush1.msra.mxu0 0.0
    %2069 = vmatprep.subr.mxu0 0.0
    %2070 = vmatpush1.msra.mxu0 0.0
    %2071 = vmatprep.subr.mxu0 0.0
    %2072 = vmatpush1.msra.mxu0 0.0
    %2073 = vmatprep.subr.mxu0 0.0
    %2074 = vmatpush1.msra.mxu0 0.0
    %2075 = vmatprep.subr.mxu0 0.0
    %2076 = vmatpush1.msra.mxu0 0.0
    %2077 = vmatprep.subr.mxu0 0.0
    %2078 = vmatpush1.msra.mxu0 0.0
    %2079 = vmatprep.subr.mxu0 0.0
    %2080 = vmatpush1.msra.mxu0 0.0
    %2081 = vmatprep.subr.mxu0 0.0
    %2082 = vmatpush1.msra.mxu0 0.0
    %2083 = vmatprep.subr.mxu0 0.0
    %2084 = vmatpush1.msra.mxu0 0.0
    %2085 = vmatprep.subr.mxu0 0.0
    %2086 = vmatpush1.msra.mxu0 0.0
    %2087 = vmatprep.subr.mxu0 0.0
    %2088 = vmatpush1.msra.mxu0 0.0
    %2089 = vmatprep.subr.mxu0 0.0
    %2090 = vmatpush1.msra.mxu0 0.0
    %2091 = vmatprep.subr.mxu0 0.0
    %2092 = vmatpush1.msra.mxu0 0.0
    %2093 = vmatprep.subr.mxu0 0.0
    %2094 = vmatpush1.msra.mxu0 0.0
    %2095 = vmatprep.subr.mxu0 0.0
    %2096 = vmatpush1.msra.mxu0 0.0
    %2097 = vmatprep.subr.mxu0 0.0
    %2098 = vmatpush1.msra.mxu0 0.0
    %2099 = vmatprep.subr.mxu0 0.0
    %2100 = vmatpush1.msra.mxu0 0.0
    %2101 = vmatprep.subr.mxu0 0.0
    %2102 = vmatpush1.msra.mxu0 0.0
    %2103 = vmatprep.subr.mxu0 0.0
    %2104 = vmatpush1.msra.mxu0 0.0
    %2105 = vmatprep.subr.mxu0 0.0
    %2106 = vmatpush1.msra.mxu0 0.0
    %2107 = vmatprep.subr.mxu0 0.0
    %2108 = vmatpush1.msra.mxu0 0.0
    %2109 = vmatprep.subr.mxu0 0.0
    %2110 = vmatpush1.msra.mxu0 0.0
    %2111 = vmatprep.mubr.f32.mxu0 0.0
    %2112 = vmatmul.mubr.f32.gmra.mrb[0].mxu0 %v1171
    %v2113 = vpop.f32.mrb[0].mxu0
    %v2114 = vadd.f32 0.0, %v2113
    %v2115 = vpop.f32.mrb[0].mxu0
    %2116 = vmatprep.mubr.f32.mxu0 0.0
    %2117 = vmatmul.mubr.f32.gmra.mrb[0].mxu0 %v1174
    %v2118 = vpop.f32.mrb[0].mxu0
    %v2119 = vadd.f32 0.0, %v2118
    %v2120 = vpop.f32.mrb[0].mxu0
    %2121 = vdwg.mxu0
    %v2123 = vsel %vm346, %v2114, 0
    %v2126 = vsel %vm346, %v2119, 0
    %2128 = vmatprep.subr.mxu0 %v1158
    %2129 = vmatpush1.msra.mxu0 %v1157
    %2130 = vmatprep.subr.mxu0 %v1160
    %2131 = vmatpush1.msra.mxu0 %v1159
    %2132 = vmatprep.subr.mxu0 0.0
    %2133 = vmatpush1.msra.mxu0 0.0
    %2134 = vmatprep.subr.mxu0 0.0
    %2135 = vmatpush1.msra.mxu0 0.0
    %2136 = vmatprep.subr.mxu0 0.0
    %2137 = vmatpush1.msra.mxu0 0.0
    %2138 = vmatprep.subr.mxu0 0.0
    %2139 = vmatpush1.msra.mxu0 0.0
    %2140 = vmatprep.subr.mxu0 0.0
    %2141 = vmatpush1.msra.mxu0 0.0
    %2142 = vmatprep.subr.mxu0 0.0
    %2143 = vmatpush1.msra.mxu0 0.0
    %2144 = vmatprep.subr.mxu0 0.0
    %2145 = vmatpush1.msra.mxu0 0.0
    %2146 = vmatprep.subr.mxu0 0.0
    %2147 = vmatpush1.msra.mxu0 0.0
    %2148 = vmatprep.subr.mxu0 0.0
    %2149 = vmatpush1.msra.mxu0 0.0
    %2150 = vmatprep.subr.mxu0 0.0
    %2151 = vmatpush1.msra.mxu0 0.0
    %2152 = vmatprep.subr.mxu0 0.0
    %2153 = vmatpush1.msra.mxu0 0.0
    %2154 = vmatprep.subr.mxu0 0.0
    %2155 = vmatpush1.msra.mxu0 0.0
    %2156 = vmatprep.subr.mxu0 0.0
    %2157 = vmatpush1.msra.mxu0 0.0
    %2158 = vmatprep.subr.mxu0 0.0
    %2159 = vmatpush1.msra.mxu0 0.0
    %2160 = vmatprep.subr.mxu0 0.0
    %2161 = vmatpush1.msra.mxu0 0.0
    %2162 = vmatprep.subr.mxu0 0.0
    %2163 = vmatpush1.msra.mxu0 0.0
    %2164 = vmatprep.subr.mxu0 0.0
    %2165 = vmatpush1.msra.mxu0 0.0
    %2166 = vmatprep.subr.mxu0 0.0
    %2167 = vmatpush1.msra.mxu0 0.0
    %2168 = vmatprep.subr.mxu0 0.0
    %2169 = vmatpush1.msra.mxu0 0.0
    %2170 = vmatprep.subr.mxu0 0.0
    %2171 = vmatpush1.msra.mxu0 0.0
    %2172 = vmatprep.subr.mxu0 0.0
    %2173 = vmatpush1.msra.mxu0 0.0
    %2174 = vmatprep.subr.mxu0 0.0
    %2175 = vmatpush1.msra.mxu0 0.0
    %2176 = vmatprep.subr.mxu0 0.0
    %2177 = vmatpush1.msra.mxu0 0.0
    %2178 = vmatprep.subr.mxu0 0.0
    %2179 = vmatpush1.msra.mxu0 0.0
    %2180 = vmatprep.subr.mxu0 0.0
    %2181 = vmatpush1.msra.mxu0 0.0
    %2182 = vmatprep.subr.mxu0 0.0
    %2183 = vmatpush1.msra.mxu0 0.0
    %2184 = vmatprep.subr.mxu0 0.0
    %2185 = vmatpush1.msra.mxu0 0.0
    %2186 = vmatprep.subr.mxu0 0.0
    %2187 = vmatpush1.msra.mxu0 0.0
    %2188 = vmatprep.subr.mxu0 0.0
    %2189 = vmatpush1.msra.mxu0 0.0
    %2190 = vmatprep.subr.mxu0 0.0
    %2191 = vmatpush1.msra.mxu0 0.0
    %2192 = vmatprep.mubr.f32.mxu0 0.0
    %2193 = vmatmul.mubr.f32.gmra.mrb[0].mxu0 %v2123
    %v2194 = vpop.f32.mrb[0].mxu0
    %v2195 = vadd.f32 0.0, %v2194
    %v2196 = vpop.f32.mrb[0].mxu0
    %v2197 = vadd.f32 0.0, %v2196
    %2198 = vmatprep.mubr.f32.mxu0 0.0
    %2199 = vmatmul.mubr.f32.gmra.mrb[0].mxu0 %v2126
    %v2200 = vpop.f32.mrb[0].mxu0
    %v2201 = vadd.f32 0.0, %v2200
    %v2202 = vpop.f32.mrb[0].mxu0
    %v2203 = vadd.f32 0.0, %v2202
    %2204 = vdwg.mxu0
    %v2205 = vmul.f32 %v2195, %v1161
    %v2206 = vmul.f32 %v2197, %v1162
    %v2207 = vmul.f32 %v2201, %v1163
    %v2208 = vmul.f32 %v2203, %v1164
    %2209 = vmatprep.subr.mxu0 0.0
    %2210 = vmatpush1.msra.mxu0 %v1062
    %2211 = vmatprep.subr.mxu0 0.0
    %2212 = vmatpush1.msra.mxu0 %v1064
    %2213 = vmatprep.subr.mxu0 0.0
    %2214 = vmatpush1.msra.mxu0 %v1069
    %2215 = vmatprep.subr.mxu0 0.0
    %2216 = vmatpush1.msra.mxu0 %v1071
    %2217 = vmatprep.subr.mxu0 0.0
    %2218 = vmatpush1.msra.mxu0 %v1075
    %2219 = vmatprep.subr.mxu0 0.0
    %2220 = vmatpush1.msra.mxu0 %v1077
    %2221 = vmatprep.subr.mxu0 0.0
    %2222 = vmatpush1.msra.mxu0 %v1081
    %2223 = vmatprep.subr.mxu0 0.0
    %2224 = vmatpush1.msra.mxu0 %v1083
    %2225 = vmatprep.subr.mxu0 0.0
    %2226 = vmatpush1.msra.mxu0 %v1087
    %2227 = vmatprep.subr.mxu0 0.0
    %2228 = vmatpush1.msra.mxu0 %v1089
    %2229 = vmatprep.subr.mxu0 0.0
    %2230 = vmatpush1.msra.mxu0 %v1093
    %2231 = vmatprep.subr.mxu0 0.0
    %2232 = vmatpush1.msra.mxu0 %v1095
    %2233 = vmatprep.subr.mxu0 0.0
    %2234 = vmatpush1.msra.mxu0 %v1099
    %2235 = vmatprep.subr.mxu0 0.0
    %2236 = vmatpush1.msra.mxu0 %v1101
    %2237 = vmatprep.subr.mxu0 0.0
    %2238 = vmatpush1.msra.mxu0 %v1105
    %2239 = vmatprep.subr.mxu0 0.0
    %2240 = vmatpush1.msra.mxu0 %v1107
    %2241 = vmatprep.subr.mxu0 0.0
    %2242 = vmatpush1.msra.mxu0 %v1063
    %2243 = vmatprep.subr.mxu0 0.0
    %2244 = vmatpush1.msra.mxu0 %v1065
    %2245 = vmatprep.subr.mxu0 0.0
    %2246 = vmatpush1.msra.mxu0 %v1113
    %2247 = vmatprep.subr.mxu0 0.0
    %2248 = vmatpush1.msra.mxu0 %v1115
    %2249 = vmatprep.subr.mxu0 0.0
    %2250 = vmatpush1.msra.mxu0 %v1119
    %2251 = vmatprep.subr.mxu0 0.0
    %2252 = vmatpush1.msra.mxu0 %v1121
    %2253 = vmatprep.subr.mxu0 0.0
    %2254 = vmatpush1.msra.mxu0 %v1125
    %2255 = vmatprep.subr.mxu0 0.0
    %2256 = vmatpush1.msra.mxu0 %v1127
    %2257 = vmatprep.subr.mxu0 0.0
    %2258 = vmatpush1.msra.mxu0 %v1131
    %2259 = vmatprep.subr.mxu0 0.0
    %2260 = vmatpush1.msra.mxu0 %v1133
    %2261 = vmatprep.subr.mxu0 0.0
    %2262 = vmatpush1.msra.mxu0 %v1137
    %2263 = vmatprep.subr.mxu0 0.0
    %2264 = vmatpush1.msra.mxu0 %v1139
    %2265 = vmatprep.subr.mxu0 0.0
    %2266 = vmatpush1.msra.mxu0 %v1143
    %2267 = vmatprep.subr.mxu0 0.0
    %2268 = vmatpush1.msra.mxu0 %v1145
    %2269 = vmatprep.subr.mxu0 0.0
    %2270 = vmatpush1.msra.mxu0 %v1149
    %2271 = vmatprep.subr.mxu0 0.0
    %2272 = vmatpush1.msra.mxu0 %v1151
    %2273 = vmatprep.mubr.f32.mxu0 %v2206
    %2274 = vmatmul.mubr.f32.gmra.mrb[0].mxu0 %v2205
    %v2275 = vpop.f32.mrb[0].mxu0
    %v2276 = vadd.f32 0.0, %v2275
    %v2277 = vpop.f32.mrb[0].mxu0
    %2278 = vmatprep.mubr.f32.mxu0 %v2208
    %2279 = vmatmul.mubr.f32.gmra.mrb[0].mxu0 %v2207
    %v2280 = vpop.f32.mrb[0].mxu0
    %v2281 = vadd.f32 0.0, %v2280
    %v2282 = vpop.f32.mrb[0].mxu0
    %2283 = vdwg.mxu0
    %2284 = vmatprep.subr.mxu0 0.0
    %2285 = vmatpush1.msra.mxu0 %v2276
    %2286 = vmatprep.subr.mxu0 0.0
    %2287 = vmatpush1.msra.mxu0 %v2281
    %2288 = vmatprep.subr.mxu0 0.0
    %2289 = vmatpush1.msra.mxu0 0.0
    %2290 = vmatprep.subr.mxu0 0.0
    %2291 = vmatpush1.msra.mxu0 0.0
    %2292 = vmatprep.subr.mxu0 0.0
    %2293 = vmatpush1.msra.mxu0 0.0
    %2294 = vmatprep.subr.mxu0 0.0
    %2295 = vmatpush1.msra.mxu0 0.0
    %2296 = vmatprep.subr.mxu0 0.0
    %2297 = vmatpush1.msra.mxu0 0.0
    %2298 = vmatprep.subr.mxu0 0.0
    %2299 = vmatpush1.msra.mxu0 0.0
    %2300 = vmatprep.subr.mxu0 0.0
    %2301 = vmatpush1.msra.mxu0 0.0
    %2302 = vmatprep.subr.mxu0 0.0
    %2303 = vmatpush1.msra.mxu0 0.0
    %2304 = vmatprep.subr.mxu0 0.0
    %2305 = vmatpush1.msra.mxu0 0.0
    %2306 = vmatprep.subr.mxu0 0.0
    %2307 = vmatpush1.msra.mxu0 0.0
    %2308 = vmatprep.subr.mxu0 0.0
    %2309 = vmatpush1.msra.mxu0 0.0
    %2310 = vmatprep.subr.mxu0 0.0
    %2311 = vmatpush1.msra.mxu0 0.0
    %2312 = vmatprep.subr.mxu0 0.0
    %2313 = vmatpush1.msra.mxu0 0.0
    %2314 = vmatprep.subr.mxu0 0.0
    %2315 = vmatpush1.msra.mxu0 0.0
    %2316 = vmatprep.subr.mxu0 0.0
    %2317 = vmatpush1.msra.mxu0 0.0
    %2318 = vmatprep.subr.mxu0 0.0
    %2319 = vmatpush1.msra.mxu0 0.0
    %2320 = vmatprep.subr.mxu0 0.0
    %2321 = vmatpush1.msra.mxu0 0.0
    %2322 = vmatprep.subr.mxu0 0.0
    %2323 = vmatpush1.msra.mxu0 0.0
    %2324 = vmatprep.subr.mxu0 0.0
    %2325 = vmatpush1.msra.mxu0 0.0
    %2326 = vmatprep.subr.mxu0 0.0
    %2327 = vmatpush1.msra.mxu0 0.0
    %2328 = vmatprep.subr.mxu0 0.0
    %2329 = vmatpush1.msra.mxu0 0.0
    %2330 = vmatprep.subr.mxu0 0.0
    %2331 = vmatpush1.msra.mxu0 0.0
    %2332 = vmatprep.subr.mxu0 0.0
    %2333 = vmatpush1.msra.mxu0 0.0
    %2334 = vmatprep.subr.mxu0 0.0
    %2335 = vmatpush1.msra.mxu0 0.0
    %2336 = vmatprep.subr.mxu0 0.0
    %2337 = vmatpush1.msra.mxu0 0.0
    %2338 = vmatprep.subr.mxu0 0.0
    %2339 = vmatpush1.msra.mxu0 0.0
    %2340 = vmatprep.subr.mxu0 0.0
    %2341 = vmatpush1.msra.mxu0 0.0
    %2342 = vmatprep.subr.mxu0 0.0
    %2343 = vmatpush1.msra.mxu0 0.0
    %2344 = vmatprep.subr.mxu0 0.0
    %2345 = vmatpush1.msra.mxu0 0.0
    %2346 = vmatprep.subr.mxu0 0.0
    %2347 = vmatpush1.msra.mxu0 0.0
    %2348 = vmatprep.mubr.f32.mxu0 0.0
    %2349 = vmatmul.mubr.f32.gmra.mrb[0].mxu0 %v1420
    %v2350 = vpop.f32.mrb[0].mxu0
    %v2351 = vadd.f32 %v1417, %v2350
    %v2352 = vpop.f32.mrb[0].mxu0
    %2353 = vdwg.mxu0
    %v2355 = vsel %vm346, %v2351, 0
    %v2357 = vsel %vm346, %v2045, 0
    %2359 = vmatprep.subr.mxu0 0.0
    %2360 = vmatpush1.msra.mxu0 %v1166
    %2361 = vmatprep.subr.mxu0 0.0
    %2362 = vmatpush1.msra.mxu0 %v1167
    %2363 = vmatprep.subr.mxu0 0.0
    %2364 = vmatpush1.msra.mxu0 0.0
    %2365 = vmatprep.subr.mxu0 0.0
    %2366 = vmatpush1.msra.mxu0 0.0
    %2367 = vmatprep.subr.mxu0 0.0
    %2368 = vmatpush1.msra.mxu0 0.0
    %2369 = vmatprep.subr.mxu0 0.0
    %2370 = vmatpush1.msra.mxu0 0.0
    %2371 = vmatprep.subr.mxu0 0.0
    %2372 = vmatpush1.msra.mxu0 0.0
    %2373 = vmatprep.subr.mxu0 0.0
    %2374 = vmatpush1.msra.mxu0 0.0
    %2375 = vmatprep.subr.mxu0 0.0
    %2376 = vmatpush1.msra.mxu0 0.0
    %2377 = vmatprep.subr.mxu0 0.0
    %2378 = vmatpush1.msra.mxu0 0.0
    %2379 = vmatprep.subr.mxu0 0.0
    %2380 = vmatpush1.msra.mxu0 0.0
    %2381 = vmatprep.subr.mxu0 0.0
    %2382 = vmatpush1.msra.mxu0 0.0
    %2383 = vmatprep.subr.mxu0 0.0
    %2384 = vmatpush1.msra.mxu0 0.0
    %2385 = vmatprep.subr.mxu0 0.0
    %2386 = vmatpush1.msra.mxu0 0.0
    %2387 = vmatprep.subr.mxu0 0.0
    %2388 = vmatpush1.msra.mxu0 0.0
    %2389 = vmatprep.subr.mxu0 0.0
    %2390 = vmatpush1.msra.mxu0 0.0
    %2391 = vmatprep.subr.mxu0 0.0
    %2392 = vmatpush1.msra.mxu0 0.0
    %2393 = vmatprep.subr.mxu0 0.0
    %2394 = vmatpush1.msra.mxu0 0.0
    %2395 = vmatprep.subr.mxu0 0.0
    %2396 = vmatpush1.msra.mxu0 0.0
    %2397 = vmatprep.subr.mxu0 0.0
    %2398 = vmatpush1.msra.mxu0 0.0
    %2399 = vmatprep.subr.mxu0 0.0
    %2400 = vmatpush1.msra.mxu0 0.0
    %2401 = vmatprep.subr.mxu0 0.0
    %2402 = vmatpush1.msra.mxu0 0.0
    %2403 = vmatprep.subr.mxu0 0.0
    %2404 = vmatpush1.msra.mxu0 0.0
    %2405 = vmatprep.subr.mxu0 0.0
    %2406 = vmatpush1.msra.mxu0 0.0
    %2407 = vmatprep.subr.mxu0 0.0
    %2408 = vmatpush1.msra.mxu0 0.0
    %2409 = vmatprep.subr.mxu0 0.0
    %2410 = vmatpush1.msra.mxu0 0.0
    %2411 = vmatprep.subr.mxu0 0.0
    %2412 = vmatpush1.msra.mxu0 0.0
    %2413 = vmatprep.subr.mxu0 0.0
    %2414 = vmatpush1.msra.mxu0 0.0
    %2415 = vmatprep.subr.mxu0 0.0
    %2416 = vmatpush1.msra.mxu0 0.0
    %2417 = vmatprep.subr.mxu0 0.0
    %2418 = vmatpush1.msra.mxu0 0.0
    %2419 = vmatprep.subr.mxu0 0.0
    %2420 = vmatpush1.msra.mxu0 0.0
    %2421 = vmatprep.subr.mxu0 0.0
    %2422 = vmatpush1.msra.mxu0 0.0
    %2423 = vmatprep.mubr.f32.mxu0 0.0
    %2424 = vmatmul.mubr.f32.gmra.mrb[0].mxu0 %v2355
    %v2425 = vpop.f32.mrb[0].mxu0
    %v2426 = vadd.f32 0.0, %v2425
    %v2427 = vpop.f32.mrb[0].mxu0
    %2428 = vmatprep.mubr.f32.mxu0 0.0
    %2429 = vmatmul.mubr.f32.gmra.mrb[0].mxu0 %v2357
    %v2430 = vpop.f32.mrb[0].mxu0
    %v2431 = vadd.f32 0.0, %v2430
    %v2432 = vpop.f32.mrb[0].mxu0
    %2433 = vdwg.mxu0
    %v2434 = vadd.f32 %v2426, %v1577
    %v2435 = vadd.f32 %v2431, %v1586
    %2437 = vrot.lane.b32.xlu0 %v2435, 80
    %v2438 = vpop.permute.xlu0 %2437
    %v2440 = vadd.f32 %v2434, %v2438
    %v2441 = vxor.u32 %v2440, 2147483648
    %v2442 = vmul.f32 %v2441, 1.442695
    %v2443 = vpow.pop %v2442
    %v2444 = vadd.f32 %v2443, 1.0
    %v2445 = vrcp.pop %v2444
    %v2446 = vmul.f32 1.0, %v2445
    %2447 = vrot.lane.b32.xlu0 %v2435, 48
    %v2448 = vpop.permute.xlu0 %2447
    %v2450 = vmul.f32 %v2446, %v2448
    %2452 = vrot.lane.b32.xlu0 %v2450, 32
    %v2453 = vpop.permute.xlu0 %2452
    %v2455 = vadd.f32 %v2434, %v2453
    %v2456 = vtanh.pop %v2455
    %v2457 = vsub.f32 1.0, %v2446
    %2459 = vrot.lane.b32.xlu0 %v2456, 112
    %v2460 = vpop.permute.xlu0 %2459
    %v2462 = vmul.f32 %v2457, %v2460
    %v2463 = vmul.f32 %v2446, %v2042
    %v2464 = vadd.f32 %v2462, %v2463
    %2466 = vrot.lane.b32.xlu0 %v2464, 112
    %v2467 = vpop.permute.xlu0 %2466
    %2469 = vmatprep.subr.mxu0 0.0
    %2470 = vmatpush1.msra.mxu0 %v2467
    %2471 = vmatprep.subr.mxu0 0.0
    %2472 = vmatpush1.msra.mxu0 0.0
    %2473 = vmatprep.subr.mxu0 0.0
    %2474 = vmatpush1.msra.mxu0 0.0
    %2475 = vmatprep.subr.mxu0 0.0
    %2476 = vmatpush1.msra.mxu0 0.0
    %2477 = vmatprep.subr.mxu0 0.0
    %2478 = vmatpush1.msra.mxu0 0.0
    %2479 = vmatprep.subr.mxu0 0.0
    %2480 = vmatpush1.msra.mxu0 0.0
    %2481 = vmatprep.subr.mxu0 0.0
    %2482 = vmatpush1.msra.mxu0 0.0
    %2483 = vmatprep.subr.mxu0 0.0
    %2484 = vmatpush1.msra.mxu0 0.0
    %2485 = vmatprep.subr.mxu0 0.0
    %2486 = vmatpush1.msra.mxu0 0.0
    %2487 = vmatprep.subr.mxu0 0.0
    %2488 = vmatpush1.msra.mxu0 0.0
    %2489 = vmatprep.subr.mxu0 0.0
    %2490 = vmatpush1.msra.mxu0 0.0
    %2491 = vmatprep.subr.mxu0 0.0
    %2492 = vmatpush1.msra.mxu0 0.0
    %2493 = vmatprep.subr.mxu0 0.0
    %2494 = vmatpush1.msra.mxu0 0.0
    %2495 = vmatprep.subr.mxu0 0.0
    %2496 = vmatpush1.msra.mxu0 0.0
    %2497 = vmatprep.subr.mxu0 0.0
    %2498 = vmatpush1.msra.mxu0 0.0
    %2499 = vmatprep.subr.mxu0 0.0
    %2500 = vmatpush1.msra.mxu0 0.0
    %2501 = vmatprep.subr.mxu0 0.0
    %2502 = vmatpush1.msra.mxu0 0.0
    %2503 = vmatprep.subr.mxu0 0.0
    %2504 = vmatpush1.msra.mxu0 0.0
    %2505 = vmatprep.subr.mxu0 0.0
    %2506 = vmatpush1.msra.mxu0 0.0
    %2507 = vmatprep.subr.mxu0 0.0
    %2508 = vmatpush1.msra.mxu0 0.0
    %2509 = vmatprep.subr.mxu0 0.0
    %2510 = vmatpush1.msra.mxu0 0.0
    %2511 = vmatprep.subr.mxu0 0.0
    %2512 = vmatpush1.msra.mxu0 0.0
    %2513 = vmatprep.subr.mxu0 0.0
    %2514 = vmatpush1.msra.mxu0 0.0
    %2515 = vmatprep.subr.mxu0 0.0
    %2516 = vmatpush1.msra.mxu0 0.0
    %2517 = vmatprep.subr.mxu0 0.0
    %2518 = vmatpush1.msra.mxu0 0.0
    %2519 = vmatprep.subr.mxu0 0.0
    %2520 = vmatpush1.msra.mxu0 0.0
    %2521 = vmatprep.subr.mxu0 0.0
    %2522 = vmatpush1.msra.mxu0 0.0
    %2523 = vmatprep.subr.mxu0 0.0
    %2524 = vmatpush1.msra.mxu0 0.0
    %2525 = vmatprep.subr.mxu0 0.0
    %2526 = vmatpush1.msra.mxu0 0.0
    %2527 = vmatprep.subr.mxu0 0.0
    %2528 = vmatpush1.msra.mxu0 0.0
    %2529 = vmatprep.subr.mxu0 0.0
    %2530 = vmatpush1.msra.mxu0 0.0
    %2531 = vmatprep.subr.mxu0 0.0
    %2532 = vmatpush1.msra.mxu0 0.0
    %2533 = vmatprep.mubr.f32.mxu0 0.0
    %2534 = vmatmul.mubr.f32.gmra.mrb[0].mxu0 %v1171
    %v2535 = vpop.f32.mrb[0].mxu0
    %v2536 = vadd.f32 0.0, %v2535
    %v2537 = vpop.f32.mrb[0].mxu0
    %2538 = vmatprep.mubr.f32.mxu0 0.0
    %2539 = vmatmul.mubr.f32.gmra.mrb[0].mxu0 %v1174
    %v2540 = vpop.f32.mrb[0].mxu0
    %v2541 = vadd.f32 0.0, %v2540
    %v2542 = vpop.f32.mrb[0].mxu0
    %2543 = vdwg.mxu0
    %v2545 = vsel %vm346, %v2536, 0
    %v2548 = vsel %vm346, %v2541, 0
    %2550 = vmatprep.subr.mxu0 %v1158
    %2551 = vmatpush1.msra.mxu0 %v1157
    %2552 = vmatprep.subr.mxu0 %v1160
    %2553 = vmatpush1.msra.mxu0 %v1159
    %2554 = vmatprep.subr.mxu0 0.0
    %2555 = vmatpush1.msra.mxu0 0.0
    %2556 = vmatprep.subr.mxu0 0.0
    %2557 = vmatpush1.msra.mxu0 0.0
    %2558 = vmatprep.subr.mxu0 0.0
    %2559 = vmatpush1.msra.mxu0 0.0
    %2560 = vmatprep.subr.mxu0 0.0
    %2561 = vmatpush1.msra.mxu0 0.0
    %2562 = vmatprep.subr.mxu0 0.0
    %2563 = vmatpush1.msra.mxu0 0.0
    %2564 = vmatprep.subr.mxu0 0.0
    %2565 = vmatpush1.msra.mxu0 0.0
    %2566 = vmatprep.subr.mxu0 0.0
    %2567 = vmatpush1.msra.mxu0 0.0
    %2568 = vmatprep.subr.mxu0 0.0
    %2569 = vmatpush1.msra.mxu0 0.0
    %2570 = vmatprep.subr.mxu0 0.0
    %2571 = vmatpush1.msra.mxu0 0.0
    %2572 = vmatprep.subr.mxu0 0.0
    %2573 = vmatpush1.msra.mxu0 0.0
    %2574 = vmatprep.subr.mxu0 0.0
    %2575 = vmatpush1.msra.mxu0 0.0
    %2576 = vmatprep.subr.mxu0 0.0
    %2577 = vmatpush1.msra.mxu0 0.0
    %2578 = vmatprep.subr.mxu0 0.0
    %2579 = vmatpush1.msra.mxu0 0.0
    %2580 = vmatprep.subr.mxu0 0.0
    %2581 = vmatpush1.msra.mxu0 0.0
    %2582 = vmatprep.subr.mxu0 0.0
    %2583 = vmatpush1.msra.mxu0 0.0
    %2584 = vmatprep.subr.mxu0 0.0
    %2585 = vmatpush1.msra.mxu0 0.0
    %2586 = vmatprep.subr.mxu0 0.0
    %2587 = vmatpush1.msra.mxu0 0.0
    %2588 = vmatprep.subr.mxu0 0.0
    %2589 = vmatpush1.msra.mxu0 0.0
    %2590 = vmatprep.subr.mxu0 0.0
    %2591 = vmatpush1.msra.mxu0 0.0
    %2592 = vmatprep.subr.mxu0 0.0
    %2593 = vmatpush1.msra.mxu0 0.0
    %2594 = vmatprep.subr.mxu0 0.0
    %2595 = vmatpush1.msra.mxu0 0.0
    %2596 = vmatprep.subr.mxu0 0.0
    %2597 = vmatpush1.msra.mxu0 0.0
    %2598 = vmatprep.subr.mxu0 0.0
    %2599 = vmatpush1.msra.mxu0 0.0
    %2600 = vmatprep.subr.mxu0 0.0
    %2601 = vmatpush1.msra.mxu0 0.0
    %2602 = vmatprep.subr.mxu0 0.0
    %2603 = vmatpush1.msra.mxu0 0.0
    %2604 = vmatprep.subr.mxu0 0.0
    %2605 = vmatpush1.msra.mxu0 0.0
    %2606 = vmatprep.subr.mxu0 0.0
    %2607 = vmatpush1.msra.mxu0 0.0
    %2608 = vmatprep.subr.mxu0 0.0
    %2609 = vmatpush1.msra.mxu0 0.0
    %2610 = vmatprep.subr.mxu0 0.0
    %2611 = vmatpush1.msra.mxu0 0.0
    %2612 = vmatprep.subr.mxu0 0.0
    %2613 = vmatpush1.msra.mxu0 0.0
    %2614 = vmatprep.mubr.f32.mxu0 0.0
    %2615 = vmatmul.mubr.f32.gmra.mrb[0].mxu0 %v2545
    %v2616 = vpop.f32.mrb[0].mxu0
    %v2617 = vadd.f32 0.0, %v2616
    %v2618 = vpop.f32.mrb[0].mxu0
    %v2619 = vadd.f32 0.0, %v2618
    %2620 = vmatprep.mubr.f32.mxu0 0.0
    %2621 = vmatmul.mubr.f32.gmra.mrb[0].mxu0 %v2548
    %v2622 = vpop.f32.mrb[0].mxu0
    %v2623 = vadd.f32 0.0, %v2622
    %v2624 = vpop.f32.mrb[0].mxu0
    %v2625 = vadd.f32 0.0, %v2624
    %2626 = vdwg.mxu0
    %v2627 = vmul.f32 %v2617, %v1161
    %v2628 = vmul.f32 %v2619, %v1162
    %v2629 = vmul.f32 %v2623, %v1163
    %v2630 = vmul.f32 %v2625, %v1164
    %2631 = vmatprep.subr.mxu0 0.0
    %2632 = vmatpush1.msra.mxu0 %v1062
    %2633 = vmatprep.subr.mxu0 0.0
    %2634 = vmatpush1.msra.mxu0 %v1064
    %2635 = vmatprep.subr.mxu0 0.0
    %2636 = vmatpush1.msra.mxu0 %v1069
    %2637 = vmatprep.subr.mxu0 0.0
    %2638 = vmatpush1.msra.mxu0 %v1071
    %2639 = vmatprep.subr.mxu0 0.0
    %2640 = vmatpush1.msra.mxu0 %v1075
    %2641 = vmatprep.subr.mxu0 0.0
    %2642 = vmatpush1.msra.mxu0 %v1077
    %2643 = vmatprep.subr.mxu0 0.0
    %2644 = vmatpush1.msra.mxu0 %v1081
    %2645 = vmatprep.subr.mxu0 0.0
    %2646 = vmatpush1.msra.mxu0 %v1083
    %2647 = vmatprep.subr.mxu0 0.0
    %2648 = vmatpush1.msra.mxu0 %v1087
    %2649 = vmatprep.subr.mxu0 0.0
    %2650 = vmatpush1.msra.mxu0 %v1089
    %2651 = vmatprep.subr.mxu0 0.0
    %2652 = vmatpush1.msra.mxu0 %v1093
    %2653 = vmatprep.subr.mxu0 0.0
    %2654 = vmatpush1.msra.mxu0 %v1095
    %2655 = vmatprep.subr.mxu0 0.0
    %2656 = vmatpush1.msra.mxu0 %v1099
    %2657 = vmatprep.subr.mxu0 0.0
    %2658 = vmatpush1.msra.mxu0 %v1101
    %2659 = vmatprep.subr.mxu0 0.0
    %2660 = vmatpush1.msra.mxu0 %v1105
    %2661 = vmatprep.subr.mxu0 0.0
    %2662 = vmatpush1.msra.mxu0 %v1107
    %2663 = vmatprep.subr.mxu0 0.0
    %2664 = vmatpush1.msra.mxu0 %v1063
    %2665 = vmatprep.subr.mxu0 0.0
    %2666 = vmatpush1.msra.mxu0 %v1065
    %2667 = vmatprep.subr.mxu0 0.0
    %2668 = vmatpush1.msra.mxu0 %v1113
    %2669 = vmatprep.subr.mxu0 0.0
    %2670 = vmatpush1.msra.mxu0 %v1115
    %2671 = vmatprep.subr.mxu0 0.0
    %2672 = vmatpush1.msra.mxu0 %v1119
    %2673 = vmatprep.subr.mxu0 0.0
    %2674 = vmatpush1.msra.mxu0 %v1121
    %2675 = vmatprep.subr.mxu0 0.0
    %2676 = vmatpush1.msra.mxu0 %v1125
    %2677 = vmatprep.subr.mxu0 0.0
    %2678 = vmatpush1.msra.mxu0 %v1127
    %2679 = vmatprep.subr.mxu0 0.0
    %2680 = vmatpush1.msra.mxu0 %v1131
    %2681 = vmatprep.subr.mxu0 0.0
    %2682 = vmatpush1.msra.mxu0 %v1133
    %2683 = vmatprep.subr.mxu0 0.0
    %2684 = vmatpush1.msra.mxu0 %v1137
    %2685 = vmatprep.subr.mxu0 0.0
    %2686 = vmatpush1.msra.mxu0 %v1139
    %2687 = vmatprep.subr.mxu0 0.0
    %2688 = vmatpush1.msra.mxu0 %v1143
    %2689 = vmatprep.subr.mxu0 0.0
    %2690 = vmatpush1.msra.mxu0 %v1145
    %2691 = vmatprep.subr.mxu0 0.0
    %2692 = vmatpush1.msra.mxu0 %v1149
    %2693 = vmatprep.subr.mxu0 0.0
    %2694 = vmatpush1.msra.mxu0 %v1151
    %2695 = vmatprep.mubr.f32.mxu0 %v2628
    %2696 = vmatmul.mubr.f32.gmra.mrb[0].mxu0 %v2627
    %v2697 = vpop.f32.mrb[0].mxu0
    %v2698 = vadd.f32 0.0, %v2697
    %v2699 = vpop.f32.mrb[0].mxu0
    %2700 = vmatprep.mubr.f32.mxu0 %v2630
    %2701 = vmatmul.mubr.f32.gmra.mrb[0].mxu0 %v2629
    %v2702 = vpop.f32.mrb[0].mxu0
    %v2703 = vadd.f32 0.0, %v2702
    %v2704 = vpop.f32.mrb[0].mxu0
    %2705 = vdwg.mxu0
    %2706 = vmatprep.subr.mxu0 0.0
    %2707 = vmatpush1.msra.mxu0 %v2698
    %2708 = vmatprep.subr.mxu0 0.0
    %2709 = vmatpush1.msra.mxu0 %v2703
    %2710 = vmatprep.subr.mxu0 0.0
    %2711 = vmatpush1.msra.mxu0 0.0
    %2712 = vmatprep.subr.mxu0 0.0
    %2713 = vmatpush1.msra.mxu0 0.0
    %2714 = vmatprep.subr.mxu0 0.0
    %2715 = vmatpush1.msra.mxu0 0.0
    %2716 = vmatprep.subr.mxu0 0.0
    %2717 = vmatpush1.msra.mxu0 0.0
    %2718 = vmatprep.subr.mxu0 0.0
    %2719 = vmatpush1.msra.mxu0 0.0
    %2720 = vmatprep.subr.mxu0 0.0
    %2721 = vmatpush1.msra.mxu0 0.0
    %2722 = vmatprep.subr.mxu0 0.0
    %2723 = vmatpush1.msra.mxu0 0.0
    %2724 = vmatprep.subr.mxu0 0.0
    %2725 = vmatpush1.msra.mxu0 0.0
    %2726 = vmatprep.subr.mxu0 0.0
    %2727 = vmatpush1.msra.mxu0 0.0
    %2728 = vmatprep.subr.mxu0 0.0
    %2729 = vmatpush1.msra.mxu0 0.0
    %2730 = vmatprep.subr.mxu0 0.0
    %2731 = vmatpush1.msra.mxu0 0.0
    %2732 = vmatprep.subr.mxu0 0.0
    %2733 = vmatpush1.msra.mxu0 0.0
    %2734 = vmatprep.subr.mxu0 0.0
    %2735 = vmatpush1.msra.mxu0 0.0
    %2736 = vmatprep.subr.mxu0 0.0
    %2737 = vmatpush1.msra.mxu0 0.0
    %2738 = vmatprep.subr.mxu0 0.0
    %2739 = vmatpush1.msra.mxu0 0.0
    %2740 = vmatprep.subr.mxu0 0.0
    %2741 = vmatpush1.msra.mxu0 0.0
    %2742 = vmatprep.subr.mxu0 0.0
    %2743 = vmatpush1.msra.mxu0 0.0
    %2744 = vmatprep.subr.mxu0 0.0
    %2745 = vmatpush1.msra.mxu0 0.0
    %2746 = vmatprep.subr.mxu0 0.0
    %2747 = vmatpush1.msra.mxu0 0.0
    %2748 = vmatprep.subr.mxu0 0.0
    %2749 = vmatpush1.msra.mxu0 0.0
    %2750 = vmatprep.subr.mxu0 0.0
    %2751 = vmatpush1.msra.mxu0 0.0
    %2752 = vmatprep.subr.mxu0 0.0
    %2753 = vmatpush1.msra.mxu0 0.0
    %2754 = vmatprep.subr.mxu0 0.0
    %2755 = vmatpush1.msra.mxu0 0.0
    %2756 = vmatprep.subr.mxu0 0.0
    %2757 = vmatpush1.msra.mxu0 0.0
    %2758 = vmatprep.subr.mxu0 0.0
    %2759 = vmatpush1.msra.mxu0 0.0
    %2760 = vmatprep.subr.mxu0 0.0
    %2761 = vmatpush1.msra.mxu0 0.0
    %2762 = vmatprep.subr.mxu0 0.0
    %2763 = vmatpush1.msra.mxu0 0.0
    %2764 = vmatprep.subr.mxu0 0.0
    %2765 = vmatpush1.msra.mxu0 0.0
    %2766 = vmatprep.subr.mxu0 0.0
    %2767 = vmatpush1.msra.mxu0 0.0
    %2768 = vmatprep.subr.mxu0 0.0
    %2769 = vmatpush1.msra.mxu0 0.0
    %2770 = vmatprep.mubr.f32.mxu0 0.0
    %2771 = vmatmul.mubr.f32.gmra.mrb[0].mxu0 %v1420
    %v2772 = vpop.f32.mrb[0].mxu0
    %v2773 = vadd.f32 %v1417, %v2772
    %v2774 = vpop.f32.mrb[0].mxu0
    %2775 = vdwg.mxu0
    %v2777 = vsel %vm346, %v2773, 0
    %v2779 = vsel %vm346, %v2467, 0
    %2781 = vmatprep.subr.mxu0 0.0
    %2782 = vmatpush1.msra.mxu0 %v1166
    %2783 = vmatprep.subr.mxu0 0.0
    %2784 = vmatpush1.msra.mxu0 %v1167
    %2785 = vmatprep.subr.mxu0 0.0
    %2786 = vmatpush1.msra.mxu0 0.0
    %2787 = vmatprep.subr.mxu0 0.0
    %2788 = vmatpush1.msra.mxu0 0.0
    %2789 = vmatprep.subr.mxu0 0.0
    %2790 = vmatpush1.msra.mxu0 0.0
    %2791 = vmatprep.subr.mxu0 0.0
    %2792 = vmatpush1.msra.mxu0 0.0
    %2793 = vmatprep.subr.mxu0 0.0
    %2794 = vmatpush1.msra.mxu0 0.0
    %2795 = vmatprep.subr.mxu0 0.0
    %2796 = vmatpush1.msra.mxu0 0.0
    %2797 = vmatprep.subr.mxu0 0.0
    %2798 = vmatpush1.msra.mxu0 0.0
    %2799 = vmatprep.subr.mxu0 0.0
    %2800 = vmatpush1.msra.mxu0 0.0
    %2801 = vmatprep.subr.mxu0 0.0
    %2802 = vmatpush1.msra.mxu0 0.0
    %2803 = vmatprep.subr.mxu0 0.0
    %2804 = vmatpush1.msra.mxu0 0.0
    %2805 = vmatprep.subr.mxu0 0.0
    %2806 = vmatpush1.msra.mxu0 0.0
    %2807 = vmatprep.subr.mxu0 0.0
    %2808 = vmatpush1.msra.mxu0 0.0
    %2809 = vmatprep.subr.mxu0 0.0
    %2810 = vmatpush1.msra.mxu0 0.0
    %2811 = vmatprep.subr.mxu0 0.0
    %2812 = vmatpush1.msra.mxu0 0.0
    %2813 = vmatprep.subr.mxu0 0.0
    %2814 = vmatpush1.msra.mxu0 0.0
    %2815 = vmatprep.subr.mxu0 0.0
    %2816 = vmatpush1.msra.mxu0 0.0
    %2817 = vmatprep.subr.mxu0 0.0
    %2818 = vmatpush1.msra.mxu0 0.0
    %2819 = vmatprep.subr.mxu0 0.0
    %2820 = vmatpush1.msra.mxu0 0.0
    %2821 = vmatprep.subr.mxu0 0.0
    %2822 = vmatpush1.msra.mxu0 0.0
    %2823 = vmatprep.subr.mxu0 0.0
    %2824 = vmatpush1.msra.mxu0 0.0
    %2825 = vmatprep.subr.mxu0 0.0
    %2826 = vmatpush1.msra.mxu0 0.0
    %2827 = vmatprep.subr.mxu0 0.0
    %2828 = vmatpush1.msra.mxu0 0.0
    %2829 = vmatprep.subr.mxu0 0.0
    %2830 = vmatpush1.msra.mxu0 0.0
    %2831 = vmatprep.subr.mxu0 0.0
    %2832 = vmatpush1.msra.mxu0 0.0
    %2833 = vmatprep.subr.mxu0 0.0
    %2834 = vmatpush1.msra.mxu0 0.0
    %2835 = vmatprep.subr.mxu0 0.0
    %2836 = vmatpush1.msra.mxu0 0.0
    %2837 = vmatprep.subr.mxu0 0.0
    %2838 = vmatpush1.msra.mxu0 0.0
    %2839 = vmatprep.subr.mxu0 0.0
    %2840 = vmatpush1.msra.mxu0 0.0
    %2841 = vmatprep.subr.mxu0 0.0
    %2842 = vmatpush1.msra.mxu0 0.0
    %2843 = vmatprep.subr.mxu0 0.0
    %2844 = vmatpush1.msra.mxu0 0.0
    %2845 = vmatprep.mubr.f32.mxu0 0.0
    %2846 = vmatmul.mubr.f32.gmra.mrb[0].mxu0 %v2777
    %v2847 = vpop.f32.mrb[0].mxu0
    %v2848 = vadd.f32 0.0, %v2847
    %v2849 = vpop.f32.mrb[0].mxu0
    %2850 = vmatprep.mubr.f32.mxu0 0.0
    %2851 = vmatmul.mubr.f32.gmra.mrb[0].mxu0 %v2779
    %v2852 = vpop.f32.mrb[0].mxu0
    %v2853 = vadd.f32 0.0, %v2852
    %v2854 = vpop.f32.mrb[0].mxu0
    %2855 = vdwg.mxu0
    %v2856 = vadd.f32 %v2848, %v1577
    %v2857 = vadd.f32 %v2853, %v1586
    %2859 = vrot.lane.b32.xlu0 %v2857, 80
    %v2860 = vpop.permute.xlu0 %2859
    %v2862 = vadd.f32 %v2856, %v2860
    %v2863 = vxor.u32 %v2862, 2147483648
    %v2864 = vmul.f32 %v2863, 1.442695
    %v2865 = vpow.pop %v2864
    %v2866 = vadd.f32 %v2865, 1.0
    %v2867 = vrcp.pop %v2866
    %v2868 = vmul.f32 1.0, %v2867
    %2869 = vrot.lane.b32.xlu0 %v2857, 48
    %v2870 = vpop.permute.xlu0 %2869
    %v2872 = vmul.f32 %v2868, %v2870
    %2874 = vrot.lane.b32.xlu0 %v2872, 32
    %v2875 = vpop.permute.xlu0 %2874
    %v2877 = vadd.f32 %v2856, %v2875
    %v2878 = vtanh.pop %v2877
    %v2879 = vsub.f32 1.0, %v2868
    %2881 = vrot.lane.b32.xlu0 %v2878, 112
    %v2882 = vpop.permute.xlu0 %2881
    %v2884 = vmul.f32 %v2879, %v2882
    %v2885 = vmul.f32 %v2868, %v2464
    %v2886 = vadd.f32 %v2884, %v2885
    %2888 = vrot.lane.b32.xlu0 %v2886, 112
    %v2889 = vpop.permute.xlu0 %2888
    %2891 = vmatprep.subr.mxu0 0.0
    %2892 = vmatpush1.msra.mxu0 %v2889
    %2893 = vmatprep.subr.mxu0 0.0
    %2894 = vmatpush1.msra.mxu0 0.0
    %2895 = vmatprep.subr.mxu0 0.0
    %2896 = vmatpush1.msra.mxu0 0.0
    %2897 = vmatprep.subr.mxu0 0.0
    %2898 = vmatpush1.msra.mxu0 0.0
    %2899 = vmatprep.subr.mxu0 0.0
    %2900 = vmatpush1.msra.mxu0 0.0
    %2901 = vmatprep.subr.mxu0 0.0
    %2902 = vmatpush1.msra.mxu0 0.0
    %2903 = vmatprep.subr.mxu0 0.0
    %2904 = vmatpush1.msra.mxu0 0.0
    %2905 = vmatprep.subr.mxu0 0.0
    %2906 = vmatpush1.msra.mxu0 0.0
    %2907 = vmatprep.subr.mxu0 0.0
    %2908 = vmatpush1.msra.mxu0 0.0
    %2909 = vmatprep.subr.mxu0 0.0
    %2910 = vmatpush1.msra.mxu0 0.0
    %2911 = vmatprep.subr.mxu0 0.0
    %2912 = vmatpush1.msra.mxu0 0.0
    %2913 = vmatprep.subr.mxu0 0.0
    %2914 = vmatpush1.msra.mxu0 0.0
    %2915 = vmatprep.subr.mxu0 0.0
    %2916 = vmatpush1.msra.mxu0 0.0
    %2917 = vmatprep.subr.mxu0 0.0
    %2918 = vmatpush1.msra.mxu0 0.0
    %2919 = vmatprep.subr.mxu0 0.0
    %2920 = vmatpush1.msra.mxu0 0.0
    %2921 = vmatprep.subr.mxu0 0.0
    %2922 = vmatpush1.msra.mxu0 0.0
    %2923 = vmatprep.subr.mxu0 0.0
    %2924 = vmatpush1.msra.mxu0 0.0
    %2925 = vmatprep.subr.mxu0 0.0
    %2926 = vmatpush1.msra.mxu0 0.0
    %2927 = vmatprep.subr.mxu0 0.0
    %2928 = vmatpush1.msra.mxu0 0.0
    %2929 = vmatprep.subr.mxu0 0.0
    %2930 = vmatpush1.msra.mxu0 0.0
    %2931 = vmatprep.subr.mxu0 0.0
    %2932 = vmatpush1.msra.mxu0 0.0
    %2933 = vmatprep.subr.mxu0 0.0
    %2934 = vmatpush1.msra.mxu0 0.0
    %2935 = vmatprep.subr.mxu0 0.0
    %2936 = vmatpush1.msra.mxu0 0.0
    %2937 = vmatprep.subr.mxu0 0.0
    %2938 = vmatpush1.msra.mxu0 0.0
    %2939 = vmatprep.subr.mxu0 0.0
    %2940 = vmatpush1.msra.mxu0 0.0
    %2941 = vmatprep.subr.mxu0 0.0
    %2942 = vmatpush1.msra.mxu0 0.0
    %2943 = vmatprep.subr.mxu0 0.0
    %2944 = vmatpush1.msra.mxu0 0.0
    %2945 = vmatprep.subr.mxu0 0.0
    %2946 = vmatpush1.msra.mxu0 0.0
    %2947 = vmatprep.subr.mxu0 0.0
    %2948 = vmatpush1.msra.mxu0 0.0
    %2949 = vmatprep.subr.mxu0 0.0
    %2950 = vmatpush1.msra.mxu0 0.0
    %2951 = vmatprep.subr.mxu0 0.0
    %2952 = vmatpush1.msra.mxu0 0.0
    %2953 = vmatprep.subr.mxu0 0.0
    %2954 = vmatpush1.msra.mxu0 0.0
    %2955 = vmatprep.mubr.f32.mxu0 0.0
    %2956 = vmatmul.mubr.f32.gmra.mrb[0].mxu0 %v1171
    %v2957 = vpop.f32.mrb[0].mxu0
    %v2958 = vadd.f32 0.0, %v2957
    %v2959 = vpop.f32.mrb[0].mxu0
    %2960 = vmatprep.mubr.f32.mxu0 0.0
    %2961 = vmatmul.mubr.f32.gmra.mrb[0].mxu0 %v1174
    %v2962 = vpop.f32.mrb[0].mxu0
    %v2963 = vadd.f32 0.0, %v2962
    %v2964 = vpop.f32.mrb[0].mxu0
    %2965 = vdwg.mxu0
    %v2967 = vsel %vm346, %v2958, 0
    %v2970 = vsel %vm346, %v2963, 0
    %2972 = vmatprep.subr.mxu0 %v1158
    %2973 = vmatpush1.msra.mxu0 %v1157
    %2974 = vmatprep.subr.mxu0 %v1160
    %2975 = vmatpush1.msra.mxu0 %v1159
    %2976 = vmatprep.subr.mxu0 0.0
    %2977 = vmatpush1.msra.mxu0 0.0
    %2978 = vmatprep.subr.mxu0 0.0
    %2979 = vmatpush1.msra.mxu0 0.0
    %2980 = vmatprep.subr.mxu0 0.0
    %2981 = vmatpush1.msra.mxu0 0.0
    %2982 = vmatprep.subr.mxu0 0.0
    %2983 = vmatpush1.msra.mxu0 0.0
    %2984 = vmatprep.subr.mxu0 0.0
    %2985 = vmatpush1.msra.mxu0 0.0
    %2986 = vmatprep.subr.mxu0 0.0
    %2987 = vmatpush1.msra.mxu0 0.0
    %2988 = vmatprep.subr.mxu0 0.0
    %2989 = vmatpush1.msra.mxu0 0.0
    %2990 = vmatprep.subr.mxu0 0.0
    %2991 = vmatpush1.msra.mxu0 0.0
    %2992 = vmatprep.subr.mxu0 0.0
    %2993 = vmatpush1.msra.mxu0 0.0
    %2994 = vmatprep.subr.mxu0 0.0
    %2995 = vmatpush1.msra.mxu0 0.0
    %2996 = vmatprep.subr.mxu0 0.0
    %2997 = vmatpush1.msra.mxu0 0.0
    %2998 = vmatprep.subr.mxu0 0.0
    %2999 = vmatpush1.msra.mxu0 0.0
    %3000 = vmatprep.subr.mxu0 0.0
    %3001 = vmatpush1.msra.mxu0 0.0
    %3002 = vmatprep.subr.mxu0 0.0
    %3003 = vmatpush1.msra.mxu0 0.0
    %3004 = vmatprep.subr.mxu0 0.0
    %3005 = vmatpush1.msra.mxu0 0.0
    %3006 = vmatprep.subr.mxu0 0.0
    %3007 = vmatpush1.msra.mxu0 0.0
    %3008 = vmatprep.subr.mxu0 0.0
    %3009 = vmatpush1.msra.mxu0 0.0
    %3010 = vmatprep.subr.mxu0 0.0
    %3011 = vmatpush1.msra.mxu0 0.0
    %3012 = vmatprep.subr.mxu0 0.0
    %3013 = vmatpush1.msra.mxu0 0.0
    %3014 = vmatprep.subr.mxu0 0.0
    %3015 = vmatpush1.msra.mxu0 0.0
    %3016 = vmatprep.subr.mxu0 0.0
    %3017 = vmatpush1.msra.mxu0 0.0
    %3018 = vmatprep.subr.mxu0 0.0
    %3019 = vmatpush1.msra.mxu0 0.0
    %3020 = vmatprep.subr.mxu0 0.0
    %3021 = vmatpush1.msra.mxu0 0.0
    %3022 = vmatprep.subr.mxu0 0.0
    %3023 = vmatpush1.msra.mxu0 0.0
    %3024 = vmatprep.subr.mxu0 0.0
    %3025 = vmatpush1.msra.mxu0 0.0
    %3026 = vmatprep.subr.mxu0 0.0
    %3027 = vmatpush1.msra.mxu0 0.0
    %3028 = vmatprep.subr.mxu0 0.0
    %3029 = vmatpush1.msra.mxu0 0.0
    %3030 = vmatprep.subr.mxu0 0.0
    %3031 = vmatpush1.msra.mxu0 0.0
    %3032 = vmatprep.subr.mxu0 0.0
    %3033 = vmatpush1.msra.mxu0 0.0
    %3034 = vmatprep.subr.mxu0 0.0
    %3035 = vmatpush1.msra.mxu0 0.0
    %3036 = vmatprep.mubr.f32.mxu0 0.0
    %3037 = vmatmul.mubr.f32.gmra.mrb[0].mxu0 %v2967
    %v3038 = vpop.f32.mrb[0].mxu0
    %v3039 = vadd.f32 0.0, %v3038
    %v3040 = vpop.f32.mrb[0].mxu0
    %v3041 = vadd.f32 0.0, %v3040
    %3042 = vmatprep.mubr.f32.mxu0 0.0
    %3043 = vmatmul.mubr.f32.gmra.mrb[0].mxu0 %v2970
    %v3044 = vpop.f32.mrb[0].mxu0
    %v3045 = vadd.f32 0.0, %v3044
    %v3046 = vpop.f32.mrb[0].mxu0
    %v3047 = vadd.f32 0.0, %v3046
    %3048 = vdwg.mxu0
    %v3049 = vmul.f32 %v3039, %v1161
    %v3050 = vmul.f32 %v3041, %v1162
    %v3051 = vmul.f32 %v3045, %v1163
    %v3052 = vmul.f32 %v3047, %v1164
    %3053 = vmatprep.subr.mxu0 0.0
    %3054 = vmatpush1.msra.mxu0 %v1062
    %3055 = vmatprep.subr.mxu0 0.0
    %3056 = vmatpush1.msra.mxu0 %v1064
    %3057 = vmatprep.subr.mxu0 0.0
    %3058 = vmatpush1.msra.mxu0 %v1069
    %3059 = vmatprep.subr.mxu0 0.0
    %3060 = vmatpush1.msra.mxu0 %v1071
    %3061 = vmatprep.subr.mxu0 0.0
    %3062 = vmatpush1.msra.mxu0 %v1075
    %3063 = vmatprep.subr.mxu0 0.0
    %3064 = vmatpush1.msra.mxu0 %v1077
    %3065 = vmatprep.subr.mxu0 0.0
    %3066 = vmatpush1.msra.mxu0 %v1081
    %3067 = vmatprep.subr.mxu0 0.0
    %3068 = vmatpush1.msra.mxu0 %v1083
    %3069 = vmatprep.subr.mxu0 0.0
    %3070 = vmatpush1.msra.mxu0 %v1087
    %3071 = vmatprep.subr.mxu0 0.0
    %3072 = vmatpush1.msra.mxu0 %v1089
    %3073 = vmatprep.subr.mxu0 0.0
    %3074 = vmatpush1.msra.mxu0 %v1093
    %3075 = vmatprep.subr.mxu0 0.0
    %3076 = vmatpush1.msra.mxu0 %v1095
    %3077 = vmatprep.subr.mxu0 0.0
    %3078 = vmatpush1.msra.mxu0 %v1099
    %3079 = vmatprep.subr.mxu0 0.0
    %3080 = vmatpush1.msra.mxu0 %v1101
    %3081 = vmatprep.subr.mxu0 0.0
    %3082 = vmatpush1.msra.mxu0 %v1105
    %3083 = vmatprep.subr.mxu0 0.0
    %3084 = vmatpush1.msra.mxu0 %v1107
    %3085 = vmatprep.subr.mxu0 0.0
    %3086 = vmatpush1.msra.mxu0 %v1063
    %3087 = vmatprep.subr.mxu0 0.0
    %3088 = vmatpush1.msra.mxu0 %v1065
    %3089 = vmatprep.subr.mxu0 0.0
    %3090 = vmatpush1.msra.mxu0 %v1113
    %3091 = vmatprep.subr.mxu0 0.0
    %3092 = vmatpush1.msra.mxu0 %v1115
    %3093 = vmatprep.subr.mxu0 0.0
    %3094 = vmatpush1.msra.mxu0 %v1119
    %3095 = vmatprep.subr.mxu0 0.0
    %3096 = vmatpush1.msra.mxu0 %v1121
    %3097 = vmatprep.subr.mxu0 0.0
    %3098 = vmatpush1.msra.mxu0 %v1125
    %3099 = vmatprep.subr.mxu0 0.0
    %3100 = vmatpush1.msra.mxu0 %v1127
    %3101 = vmatprep.subr.mxu0 0.0
    %3102 = vmatpush1.msra.mxu0 %v1131
    %3103 = vmatprep.subr.mxu0 0.0
    %3104 = vmatpush1.msra.mxu0 %v1133
    %3105 = vmatprep.subr.mxu0 0.0
    %3106 = vmatpush1.msra.mxu0 %v1137
    %3107 = vmatprep.subr.mxu0 0.0
    %3108 = vmatpush1.msra.mxu0 %v1139
    %3109 = vmatprep.subr.mxu0 0.0
    %3110 = vmatpush1.msra.mxu0 %v1143
    %3111 = vmatprep.subr.mxu0 0.0
    %3112 = vmatpush1.msra.mxu0 %v1145
    %3113 = vmatprep.subr.mxu0 0.0
    %3114 = vmatpush1.msra.mxu0 %v1149
    %3115 = vmatprep.subr.mxu0 0.0
    %3116 = vmatpush1.msra.mxu0 %v1151
    %3117 = vmatprep.mubr.f32.mxu0 %v3050
    %3118 = vmatmul.mubr.f32.gmra.mrb[0].mxu0 %v3049
    %v3119 = vpop.f32.mrb[0].mxu0
    %v3120 = vadd.f32 0.0, %v3119
    %v3121 = vpop.f32.mrb[0].mxu0
    %3122 = vmatprep.mubr.f32.mxu0 %v3052
    %3123 = vmatmul.mubr.f32.gmra.mrb[0].mxu0 %v3051
    %v3124 = vpop.f32.mrb[0].mxu0
    %v3125 = vadd.f32 0.0, %v3124
    %v3126 = vpop.f32.mrb[0].mxu0
    %3127 = vdwg.mxu0
    %3128 = vmatprep.subr.mxu0 0.0
    %3129 = vmatpush1.msra.mxu0 %v3120
    %3130 = vmatprep.subr.mxu0 0.0
    %3131 = vmatpush1.msra.mxu0 %v3125
    %3132 = vmatprep.subr.mxu0 0.0
    %3133 = vmatpush1.msra.mxu0 0.0
    %3134 = vmatprep.subr.mxu0 0.0
    %3135 = vmatpush1.msra.mxu0 0.0
    %3136 = vmatprep.subr.mxu0 0.0
    %3137 = vmatpush1.msra.mxu0 0.0
    %3138 = vmatprep.subr.mxu0 0.0
    %3139 = vmatpush1.msra.mxu0 0.0
    %3140 = vmatprep.subr.mxu0 0.0
    %3141 = vmatpush1.msra.mxu0 0.0
    %3142 = vmatprep.subr.mxu0 0.0
    %3143 = vmatpush1.msra.mxu0 0.0
    %3144 = vmatprep.subr.mxu0 0.0
    %3145 = vmatpush1.msra.mxu0 0.0
    %3146 = vmatprep.subr.mxu0 0.0
    %3147 = vmatpush1.msra.mxu0 0.0
    %3148 = vmatprep.subr.mxu0 0.0
    %3149 = vmatpush1.msra.mxu0 0.0
    %3150 = vmatprep.subr.mxu0 0.0
    %3151 = vmatpush1.msra.mxu0 0.0
    %3152 = vmatprep.subr.mxu0 0.0
    %3153 = vmatpush1.msra.mxu0 0.0
    %3154 = vmatprep.subr.mxu0 0.0
    %3155 = vmatpush1.msra.mxu0 0.0
    %3156 = vmatprep.subr.mxu0 0.0
    %3157 = vmatpush1.msra.mxu0 0.0
    %3158 = vmatprep.subr.mxu0 0.0
    %3159 = vmatpush1.msra.mxu0 0.0
    %3160 = vmatprep.subr.mxu0 0.0
    %3161 = vmatpush1.msra.mxu0 0.0
    %3162 = vmatprep.subr.mxu0 0.0
    %3163 = vmatpush1.msra.mxu0 0.0
    %3164 = vmatprep.subr.mxu0 0.0
    %3165 = vmatpush1.msra.mxu0 0.0
    %3166 = vmatprep.subr.mxu0 0.0
    %3167 = vmatpush1.msra.mxu0 0.0
    %3168 = vmatprep.subr.mxu0 0.0
    %3169 = vmatpush1.msra.mxu0 0.0
    %3170 = vmatprep.subr.mxu0 0.0
    %3171 = vmatpush1.msra.mxu0 0.0
    %3172 = vmatprep.subr.mxu0 0.0
    %3173 = vmatpush1.msra.mxu0 0.0
    %3174 = vmatprep.subr.mxu0 0.0
    %3175 = vmatpush1.msra.mxu0 0.0
    %3176 = vmatprep.subr.mxu0 0.0
    %3177 = vmatpush1.msra.mxu0 0.0
    %3178 = vmatprep.subr.mxu0 0.0
    %3179 = vmatpush1.msra.mxu0 0.0
    %3180 = vmatprep.subr.mxu0 0.0
    %3181 = vmatpush1.msra.mxu0 0.0
    %3182 = vmatprep.subr.mxu0 0.0
    %3183 = vmatpush1.msra.mxu0 0.0
    %3184 = vmatprep.subr.mxu0 0.0
    %3185 = vmatpush1.msra.mxu0 0.0
    %3186 = vmatprep.subr.mxu0 0.0
    %3187 = vmatpush1.msra.mxu0 0.0
    %3188 = vmatprep.subr.mxu0 0.0
    %3189 = vmatpush1.msra.mxu0 0.0
    %3190 = vmatprep.subr.mxu0 0.0
    %3191 = vmatpush1.msra.mxu0 0.0
    %3192 = vmatprep.mubr.f32.mxu0 0.0
    %3193 = vmatmul.mubr.f32.gmra.mrb[0].mxu0 %v1420
    %v3194 = vpop.f32.mrb[0].mxu0
    %v3195 = vadd.f32 %v1417, %v3194
    %v3196 = vpop.f32.mrb[0].mxu0
    %3197 = vdwg.mxu0
    %v3199 = vsel %vm346, %v3195, 0
    %v3201 = vsel %vm346, %v2889, 0
    %3203 = vmatprep.subr.mxu0 0.0
    %3204 = vmatpush1.msra.mxu0 %v1166
    %3205 = vmatprep.subr.mxu0 0.0
    %3206 = vmatpush1.msra.mxu0 %v1167
    %3207 = vmatprep.subr.mxu0 0.0
    %3208 = vmatpush1.msra.mxu0 0.0
    %3209 = vmatprep.subr.mxu0 0.0
    %3210 = vmatpush1.msra.mxu0 0.0
    %3211 = vmatprep.subr.mxu0 0.0
    %3212 = vmatpush1.msra.mxu0 0.0
    %3213 = vmatprep.subr.mxu0 0.0
    %3214 = vmatpush1.msra.mxu0 0.0
    %3215 = vmatprep.subr.mxu0 0.0
    %3216 = vmatpush1.msra.mxu0 0.0
    %3217 = vmatprep.subr.mxu0 0.0
    %3218 = vmatpush1.msra.mxu0 0.0
    %3219 = vmatprep.subr.mxu0 0.0
    %3220 = vmatpush1.msra.mxu0 0.0
    %3221 = vmatprep.subr.mxu0 0.0
    %3222 = vmatpush1.msra.mxu0 0.0
    %3223 = vmatprep.subr.mxu0 0.0
    %3224 = vmatpush1.msra.mxu0 0.0
    %3225 = vmatprep.subr.mxu0 0.0
    %3226 = vmatpush1.msra.mxu0 0.0
    %3227 = vmatprep.subr.mxu0 0.0
    %3228 = vmatpush1.msra.mxu0 0.0
    %3229 = vmatprep.subr.mxu0 0.0
    %3230 = vmatpush1.msra.mxu0 0.0
    %3231 = vmatprep.subr.mxu0 0.0
    %3232 = vmatpush1.msra.mxu0 0.0
    %3233 = vmatprep.subr.mxu0 0.0
    %3234 = vmatpush1.msra.mxu0 0.0
    %3235 = vmatprep.subr.mxu0 0.0
    %3236 = vmatpush1.msra.mxu0 0.0
    %3237 = vmatprep.subr.mxu0 0.0
    %3238 = vmatpush1.msra.mxu0 0.0
    %3239 = vmatprep.subr.mxu0 0.0
    %3240 = vmatpush1.msra.mxu0 0.0
    %3241 = vmatprep.subr.mxu0 0.0
    %3242 = vmatpush1.msra.mxu0 0.0
    %3243 = vmatprep.subr.mxu0 0.0
    %3244 = vmatpush1.msra.mxu0 0.0
    %3245 = vmatprep.subr.mxu0 0.0
    %3246 = vmatpush1.msra.mxu0 0.0
    %3247 = vmatprep.subr.mxu0 0.0
    %3248 = vmatpush1.msra.mxu0 0.0
    %3249 = vmatprep.subr.mxu0 0.0
    %3250 = vmatpush1.msra.mxu0 0.0
    %3251 = vmatprep.subr.mxu0 0.0
    %3252 = vmatpush1.msra.mxu0 0.0
    %3253 = vmatprep.subr.mxu0 0.0
    %3254 = vmatpush1.msra.mxu0 0.0
    %3255 = vmatprep.subr.mxu0 0.0
    %3256 = vmatpush1.msra.mxu0 0.0
    %3257 = vmatprep.subr.mxu0 0.0
    %3258 = vmatpush1.msra.mxu0 0.0
    %3259 = vmatprep.subr.mxu0 0.0
    %3260 = vmatpush1.msra.mxu0 0.0
    %3261 = vmatprep.subr.mxu0 0.0
    %3262 = vmatpush1.msra.mxu0 0.0
    %3263 = vmatprep.subr.mxu0 0.0
    %3264 = vmatpush1.msra.mxu0 0.0
    %3265 = vmatprep.subr.mxu0 0.0
    %3266 = vmatpush1.msra.mxu0 0.0
    %3267 = vmatprep.mubr.f32.mxu0 0.0
    %3268 = vmatmul.mubr.f32.gmra.mrb[0].mxu0 %v3199
    %v3269 = vpop.f32.mrb[0].mxu0
    %v3270 = vadd.f32 0.0, %v3269
    %v3271 = vpop.f32.mrb[0].mxu0
    %3272 = vmatprep.mubr.f32.mxu0 0.0
    %3273 = vmatmul.mubr.f32.gmra.mrb[0].mxu0 %v3201
    %v3274 = vpop.f32.mrb[0].mxu0
    %v3275 = vadd.f32 0.0, %v3274
    %v3276 = vpop.f32.mrb[0].mxu0
    %3277 = vdwg.mxu0
    %v3278 = vadd.f32 %v3270, %v1577
    %v3279 = vadd.f32 %v3275, %v1586
    %3281 = vrot.lane.b32.xlu0 %v3279, 80
    %v3282 = vpop.permute.xlu0 %3281
    %v3284 = vadd.f32 %v3278, %v3282
    %v3285 = vxor.u32 %v3284, 2147483648
    %v3286 = vmul.f32 %v3285, 1.442695
    %v3287 = vpow.pop %v3286
    %v3288 = vadd.f32 %v3287, 1.0
    %v3289 = vrcp.pop %v3288
    %v3290 = vmul.f32 1.0, %v3289
    %3291 = vrot.lane.b32.xlu0 %v3279, 48
    %v3292 = vpop.permute.xlu0 %3291
    %v3294 = vmul.f32 %v3290, %v3292
    %3296 = vrot.lane.b32.xlu0 %v3294, 32
    %v3297 = vpop.permute.xlu0 %3296
    %v3299 = vadd.f32 %v3278, %v3297
    %v3300 = vtanh.pop %v3299
    %v3301 = vsub.f32 1.0, %v3290
    %3303 = vrot.lane.b32.xlu0 %v3300, 112
    %v3304 = vpop.permute.xlu0 %3303
    %v3306 = vmul.f32 %v3301, %v3304
    %v3307 = vmul.f32 %v3290, %v2886
    %v3308 = vadd.f32 %v3306, %v3307
    %v3309 = vld [vmem:[%s53] sm:$0xff]
    %v3310 = vld [vmem:[%s53 + $0x8] sm:$0xff]
    %v3311 = vld [vmem:[%s53 + $0x10] sm:$0xff]
    %v3312 = vld [vmem:[%s53 + $0x18] sm:$0xff]
    %v3313 = vld [vmem:[%s53 + $0x20] sm:$0xff]
    %v3314 = vld [vmem:[%s53 + $0x28] sm:$0xff]
    %v3315 = vld [vmem:[%s53 + $0x30] sm:$0xff]
    %v3316 = vld [vmem:[%s53 + $0x38] sm:$0xff]
    %v3317 = vld [vmem:[%s53 + $0x40] sm:$0xff]
    %v3318 = vld [vmem:[%s53 + $0x48] sm:$0xff]
    %v3319 = vld [vmem:[%s53 + $0x50] sm:$0xff]
    %v3320 = vld [vmem:[%s53 + $0x58] sm:$0xff]
    %v3321 = vld [vmem:[#allocation26] sm:$0x1]
    %3322 = vmatprep.subr.mxu0 0.0
    %3323 = vmatpush1.msra.mxu0 %v3309
    %3324 = vmatprep.subr.mxu0 0.0
    %3325 = vmatpush1.msra.mxu0 %v3310
    %3326 = vmatprep.subr.mxu0 0.0
    %3327 = vmatpush1.msra.mxu0 0.0
    %3328 = vmatprep.subr.mxu0 0.0
    %3329 = vmatpush1.msra.mxu0 0.0
    %3330 = vmatprep.subr.mxu0 0.0
    %3331 = vmatpush1.msra.mxu0 0.0
    %3332 = vmatprep.subr.mxu0 0.0
    %3333 = vmatpush1.msra.mxu0 0.0
    %3334 = vmatprep.subr.mxu0 0.0
    %3335 = vmatpush1.msra.mxu0 0.0
    %3336 = vmatprep.subr.mxu0 0.0
    %3337 = vmatpush1.msra.mxu0 0.0
    %3338 = vmatprep.subr.mxu0 0.0
    %3339 = vmatpush1.msra.mxu0 0.0
    %3340 = vmatprep.subr.mxu0 0.0
    %3341 = vmatpush1.msra.mxu0 0.0
    %3342 = vmatprep.subr.mxu0 0.0
    %3343 = vmatpush1.msra.mxu0 0.0
    %3344 = vmatprep.subr.mxu0 0.0
    %3345 = vmatpush1.msra.mxu0 0.0
    %3346 = vmatprep.subr.mxu0 0.0
    %3347 = vmatpush1.msra.mxu0 0.0
    %3348 = vmatprep.subr.mxu0 0.0
    %3349 = vmatpush1.msra.mxu0 0.0
    %3350 = vmatprep.subr.mxu0 0.0
    %3351 = vmatpush1.msra.mxu0 0.0
    %3352 = vmatprep.subr.mxu0 0.0
    %3353 = vmatpush1.msra.mxu0 0.0
    %3354 = vmatprep.subr.mxu0 0.0
    %3355 = vmatpush1.msra.mxu0 0.0
    %3356 = vmatprep.subr.mxu0 0.0
    %3357 = vmatpush1.msra.mxu0 0.0
    %3358 = vmatprep.subr.mxu0 0.0
    %3359 = vmatpush1.msra.mxu0 0.0
    %3360 = vmatprep.subr.mxu0 0.0
    %3361 = vmatpush1.msra.mxu0 0.0
    %3362 = vmatprep.subr.mxu0 0.0
    %3363 = vmatpush1.msra.mxu0 0.0
    %3364 = vmatprep.subr.mxu0 0.0
    %3365 = vmatpush1.msra.mxu0 0.0
    %3366 = vmatprep.subr.mxu0 0.0
    %3367 = vmatpush1.msra.mxu0 0.0
    %3368 = vmatprep.subr.mxu0 0.0
    %3369 = vmatpush1.msra.mxu0 0.0
    %3370 = vmatprep.subr.mxu0 0.0
    %3371 = vmatpush1.msra.mxu0 0.0
    %3372 = vmatprep.subr.mxu0 0.0
    %3373 = vmatpush1.msra.mxu0 0.0
    %3374 = vmatprep.subr.mxu0 0.0
    %3375 = vmatpush1.msra.mxu0 0.0
    %3376 = vmatprep.subr.mxu0 0.0
    %3377 = vmatpush1.msra.mxu0 0.0
    %3378 = vmatprep.subr.mxu0 0.0
    %3379 = vmatpush1.msra.mxu0 0.0
    %3380 = vmatprep.subr.mxu0 0.0
    %3381 = vmatpush1.msra.mxu0 0.0
    %3382 = vmatprep.subr.mxu0 0.0
    %3383 = vmatpush1.msra.mxu0 0.0
    %3384 = vmatprep.subr.mxu0 0.0
    %3385 = vmatpush1.msra.mxu0 0.0
    %3386 = vmatprep.mubr.f32.mxu0 0.0
    %3387 = vmatmul.mubr.f32.gmra.mrb[0].mxu0 %v1496
    %v3388 = vpop.f32.mrb[0].mxu0
    %v3389 = vadd.f32 0.0, %v3388
    %v3390 = vpop.f32.mrb[0].mxu0
    %3391 = vdwg.mxu0
    %v3393 = vlaneseq
    %v3394 = vshrl.u32 %v3393, 7
    %v3395 = vsub.s32 0, %v3394
    %v3396 = vrot.slane %v3321, %v3395
    %v3398 = vadd.f32 %v3396, %v3389
    %3399 = vmatprep.subr.mxu0 0.0
    %3400 = vmatpush1.msra.mxu0 %v3311
    %3401 = vmatprep.subr.mxu0 0.0
    %3402 = vmatpush1.msra.mxu0 %v3312
    %3403 = vmatprep.subr.mxu0 0.0
    %3404 = vmatpush1.msra.mxu0 0.0
    %3405 = vmatprep.subr.mxu0 0.0
    %3406 = vmatpush1.msra.mxu0 0.0
    %3407 = vmatprep.subr.mxu0 0.0
    %3408 = vmatpush1.msra.mxu0 0.0
    %3409 = vmatprep.subr.mxu0 0.0
    %3410 = vmatpush1.msra.mxu0 0.0
    %3411 = vmatprep.subr.mxu0 0.0
    %3412 = vmatpush1.msra.mxu0 0.0
    %3413 = vmatprep.subr.mxu0 0.0
    %3414 = vmatpush1.msra.mxu0 0.0
    %3415 = vmatprep.subr.mxu0 0.0
    %3416 = vmatpush1.msra.mxu0 0.0
    %3417 = vmatprep.subr.mxu0 0.0
    %3418 = vmatpush1.msra.mxu0 0.0
    %3419 = vmatprep.subr.mxu0 0.0
    %3420 = vmatpush1.msra.mxu0 0.0
    %3421 = vmatprep.subr.mxu0 0.0
    %3422 = vmatpush1.msra.mxu0 0.0
    %3423 = vmatprep.subr.mxu0 0.0
    %3424 = vmatpush1.msra.mxu0 0.0
    %3425 = vmatprep.subr.mxu0 0.0
    %3426 = vmatpush1.msra.mxu0 0.0
    %3427 = vmatprep.subr.mxu0 0.0
    %3428 = vmatpush1.msra.mxu0 0.0
    %3429 = vmatprep.subr.mxu0 0.0
    %3430 = vmatpush1.msra.mxu0 0.0
    %3431 = vmatprep.subr.mxu0 0.0
    %3432 = vmatpush1.msra.mxu0 0.0
    %3433 = vmatprep.subr.mxu0 0.0
    %3434 = vmatpush1.msra.mxu0 0.0
    %3435 = vmatprep.subr.mxu0 0.0
    %3436 = vmatpush1.msra.mxu0 0.0
    %3437 = vmatprep.subr.mxu0 0.0
    %3438 = vmatpush1.msra.mxu0 0.0
    %3439 = vmatprep.subr.mxu0 0.0
    %3440 = vmatpush1.msra.mxu0 0.0
    %3441 = vmatprep.subr.mxu0 0.0
    %3442 = vmatpush1.msra.mxu0 0.0
    %3443 = vmatprep.subr.mxu0 0.0
    %3444 = vmatpush1.msra.mxu0 0.0
    %3445 = vmatprep.subr.mxu0 0.0
    %3446 = vmatpush1.msra.mxu0 0.0
    %3447 = vmatprep.subr.mxu0 0.0
    %3448 = vmatpush1.msra.mxu0 0.0
    %3449 = vmatprep.subr.mxu0 0.0
    %3450 = vmatpush1.msra.mxu0 0.0
    %3451 = vmatprep.subr.mxu0 0.0
    %3452 = vmatpush1.msra.mxu0 0.0
    %3453 = vmatprep.subr.mxu0 0.0
    %3454 = vmatpush1.msra.mxu0 0.0
    %3455 = vmatprep.subr.mxu0 0.0
    %3456 = vmatpush1.msra.mxu0 0.0
    %3457 = vmatprep.subr.mxu0 0.0
    %3458 = vmatpush1.msra.mxu0 0.0
    %3459 = vmatprep.subr.mxu0 0.0
    %3460 = vmatpush1.msra.mxu0 0.0
    %3461 = vmatprep.subr.mxu0 0.0
    %3462 = vmatpush1.msra.mxu0 0.0
    %3463 = vmatprep.mubr.f32.mxu0 0.0
    %3464 = vmatmul.mubr.f32.gmra.mrb[0].mxu0 %v1935
    %v3465 = vpop.f32.mrb[0].mxu0
    %v3466 = vadd.f32 0.0, %v3465
    %v3467 = vpop.f32.mrb[0].mxu0
    %3468 = vdwg.mxu0
    %v3469 = vadd.f32 %v3398, %v3466
    %3470 = vmatprep.subr.mxu0 0.0
    %3471 = vmatpush1.msra.mxu0 %v3313
    %3472 = vmatprep.subr.mxu0 0.0
    %3473 = vmatpush1.msra.mxu0 %v3314
    %3474 = vmatprep.subr.mxu0 0.0
    %3475 = vmatpush1.msra.mxu0 0.0
    %3476 = vmatprep.subr.mxu0 0.0
    %3477 = vmatpush1.msra.mxu0 0.0
    %3478 = vmatprep.subr.mxu0 0.0
    %3479 = vmatpush1.msra.mxu0 0.0
    %3480 = vmatprep.subr.mxu0 0.0
    %3481 = vmatpush1.msra.mxu0 0.0
    %3482 = vmatprep.subr.mxu0 0.0
    %3483 = vmatpush1.msra.mxu0 0.0
    %3484 = vmatprep.subr.mxu0 0.0
    %3485 = vmatpush1.msra.mxu0 0.0
    %3486 = vmatprep.subr.mxu0 0.0
    %3487 = vmatpush1.msra.mxu0 0.0
    %3488 = vmatprep.subr.mxu0 0.0
    %3489 = vmatpush1.msra.mxu0 0.0
    %3490 = vmatprep.subr.mxu0 0.0
    %3491 = vmatpush1.msra.mxu0 0.0
    %3492 = vmatprep.subr.mxu0 0.0
    %3493 = vmatpush1.msra.mxu0 0.0
    %3494 = vmatprep.subr.mxu0 0.0
    %3495 = vmatpush1.msra.mxu0 0.0
    %3496 = vmatprep.subr.mxu0 0.0
    %3497 = vmatpush1.msra.mxu0 0.0
    %3498 = vmatprep.subr.mxu0 0.0
    %3499 = vmatpush1.msra.mxu0 0.0
    %3500 = vmatprep.subr.mxu0 0.0
    %3501 = vmatpush1.msra.mxu0 0.0
    %3502 = vmatprep.subr.mxu0 0.0
    %3503 = vmatpush1.msra.mxu0 0.0
    %3504 = vmatprep.subr.mxu0 0.0
    %3505 = vmatpush1.msra.mxu0 0.0
    %3506 = vmatprep.subr.mxu0 0.0
    %3507 = vmatpush1.msra.mxu0 0.0
    %3508 = vmatprep.subr.mxu0 0.0
    %3509 = vmatpush1.msra.mxu0 0.0
    %3510 = vmatprep.subr.mxu0 0.0
    %3511 = vmatpush1.msra.mxu0 0.0
    %3512 = vmatprep.subr.mxu0 0.0
    %3513 = vmatpush1.msra.mxu0 0.0
    %3514 = vmatprep.subr.mxu0 0.0
    %3515 = vmatpush1.msra.mxu0 0.0
    %3516 = vmatprep.subr.mxu0 0.0
    %3517 = vmatpush1.msra.mxu0 0.0
    %3518 = vmatprep.subr.mxu0 0.0
    %3519 = vmatpush1.msra.mxu0 0.0
    %3520 = vmatprep.subr.mxu0 0.0
    %3521 = vmatpush1.msra.mxu0 0.0
    %3522 = vmatprep.subr.mxu0 0.0
    %3523 = vmatpush1.msra.mxu0 0.0
    %3524 = vmatprep.subr.mxu0 0.0
    %3525 = vmatpush1.msra.mxu0 0.0
    %3526 = vmatprep.subr.mxu0 0.0
    %3527 = vmatpush1.msra.mxu0 0.0
    %3528 = vmatprep.subr.mxu0 0.0
    %3529 = vmatpush1.msra.mxu0 0.0
    %3530 = vmatprep.subr.mxu0 0.0
    %3531 = vmatpush1.msra.mxu0 0.0
    %3532 = vmatprep.subr.mxu0 0.0
    %3533 = vmatpush1.msra.mxu0 0.0
    %3534 = vmatprep.mubr.f32.mxu0 0.0
    %3535 = vmatmul.mubr.f32.gmra.mrb[0].mxu0 %v2357
    %v3536 = vpop.f32.mrb[0].mxu0
    %v3537 = vadd.f32 0.0, %v3536
    %v3538 = vpop.f32.mrb[0].mxu0
    %3539 = vdwg.mxu0
    %v3540 = vadd.f32 %v3469, %v3537
    %3541 = vmatprep.subr.mxu0 0.0
    %3542 = vmatpush1.msra.mxu0 %v3315
    %3543 = vmatprep.subr.mxu0 0.0
    %3544 = vmatpush1.msra.mxu0 %v3316
    %3545 = vmatprep.subr.mxu0 0.0
    %3546 = vmatpush1.msra.mxu0 0.0
    %3547 = vmatprep.subr.mxu0 0.0
    %3548 = vmatpush1.msra.mxu0 0.0
    %3549 = vmatprep.subr.mxu0 0.0
    %3550 = vmatpush1.msra.mxu0 0.0
    %3551 = vmatprep.subr.mxu0 0.0
    %3552 = vmatpush1.msra.mxu0 0.0
    %3553 = vmatprep.subr.mxu0 0.0
    %3554 = vmatpush1.msra.mxu0 0.0
    %3555 = vmatprep.subr.mxu0 0.0
    %3556 = vmatpush1.msra.mxu0 0.0
    %3557 = vmatprep.subr.mxu0 0.0
    %3558 = vmatpush1.msra.mxu0 0.0
    %3559 = vmatprep.subr.mxu0 0.0
    %3560 = vmatpush1.msra.mxu0 0.0
    %3561 = vmatprep.subr.mxu0 0.0
    %3562 = vmatpush1.msra.mxu0 0.0
    %3563 = vmatprep.subr.mxu0 0.0
    %3564 = vmatpush1.msra.mxu0 0.0
    %3565 = vmatprep.subr.mxu0 0.0
    %3566 = vmatpush1.msra.mxu0 0.0
    %3567 = vmatprep.subr.mxu0 0.0
    %3568 = vmatpush1.msra.mxu0 0.0
    %3569 = vmatprep.subr.mxu0 0.0
    %3570 = vmatpush1.msra.mxu0 0.0
    %3571 = vmatprep.subr.mxu0 0.0
    %3572 = vmatpush1.msra.mxu0 0.0
    %3573 = vmatprep.subr.mxu0 0.0
    %3574 = vmatpush1.msra.mxu0 0.0
    %3575 = vmatprep.subr.mxu0 0.0
    %3576 = vmatpush1.msra.mxu0 0.0
    %3577 = vmatprep.subr.mxu0 0.0
    %3578 = vmatpush1.msra.mxu0 0.0
    %3579 = vmatprep.subr.mxu0 0.0
    %3580 = vmatpush1.msra.mxu0 0.0
    %3581 = vmatprep.subr.mxu0 0.0
    %3582 = vmatpush1.msra.mxu0 0.0
    %3583 = vmatprep.subr.mxu0 0.0
    %3584 = vmatpush1.msra.mxu0 0.0
    %3585 = vmatprep.subr.mxu0 0.0
    %3586 = vmatpush1.msra.mxu0 0.0
    %3587 = vmatprep.subr.mxu0 0.0
    %3588 = vmatpush1.msra.mxu0 0.0
    %3589 = vmatprep.subr.mxu0 0.0
    %3590 = vmatpush1.msra.mxu0 0.0
    %3591 = vmatprep.subr.mxu0 0.0
    %3592 = vmatpush1.msra.mxu0 0.0
    %3593 = vmatprep.subr.mxu0 0.0
    %3594 = vmatpush1.msra.mxu0 0.0
    %3595 = vmatprep.subr.mxu0 0.0
    %3596 = vmatpush1.msra.mxu0 0.0
    %3597 = vmatprep.subr.mxu0 0.0
    %3598 = vmatpush1.msra.mxu0 0.0
    %3599 = vmatprep.subr.mxu0 0.0
    %3600 = vmatpush1.msra.mxu0 0.0
    %3601 = vmatprep.subr.mxu0 0.0
    %3602 = vmatpush1.msra.mxu0 0.0
    %3603 = vmatprep.subr.mxu0 0.0
    %3604 = vmatpush1.msra.mxu0 0.0
    %3605 = vmatprep.mubr.f32.mxu0 0.0
    %3606 = vmatmul.mubr.f32.gmra.mrb[0].mxu0 %v2779
    %v3607 = vpop.f32.mrb[0].mxu0
    %v3608 = vadd.f32 0.0, %v3607
    %v3609 = vpop.f32.mrb[0].mxu0
    %3610 = vdwg.mxu0
    %v3611 = vadd.f32 %v3540, %v3608
    %3612 = vmatprep.subr.mxu0 0.0
    %3613 = vmatpush1.msra.mxu0 %v3317
    %3614 = vmatprep.subr.mxu0 0.0
    %3615 = vmatpush1.msra.mxu0 %v3318
    %3616 = vmatprep.subr.mxu0 0.0
    %3617 = vmatpush1.msra.mxu0 0.0
    %3618 = vmatprep.subr.mxu0 0.0
    %3619 = vmatpush1.msra.mxu0 0.0
    %3620 = vmatprep.subr.mxu0 0.0
    %3621 = vmatpush1.msra.mxu0 0.0
    %3622 = vmatprep.subr.mxu0 0.0
    %3623 = vmatpush1.msra.mxu0 0.0
    %3624 = vmatprep.subr.mxu0 0.0
    %3625 = vmatpush1.msra.mxu0 0.0
    %3626 = vmatprep.subr.mxu0 0.0
    %3627 = vmatpush1.msra.mxu0 0.0
    %3628 = vmatprep.subr.mxu0 0.0
    %3629 = vmatpush1.msra.mxu0 0.0
    %3630 = vmatprep.subr.mxu0 0.0
    %3631 = vmatpush1.msra.mxu0 0.0
    %3632 = vmatprep.subr.mxu0 0.0
    %3633 = vmatpush1.msra.mxu0 0.0
    %3634 = vmatprep.subr.mxu0 0.0
    %3635 = vmatpush1.msra.mxu0 0.0
    %3636 = vmatprep.subr.mxu0 0.0
    %3637 = vmatpush1.msra.mxu0 0.0
    %3638 = vmatprep.subr.mxu0 0.0
    %3639 = vmatpush1.msra.mxu0 0.0
    %3640 = vmatprep.subr.mxu0 0.0
    %3641 = vmatpush1.msra.mxu0 0.0
    %3642 = vmatprep.subr.mxu0 0.0
    %3643 = vmatpush1.msra.mxu0 0.0
    %3644 = vmatprep.subr.mxu0 0.0
    %3645 = vmatpush1.msra.mxu0 0.0
    %3646 = vmatprep.subr.mxu0 0.0
    %3647 = vmatpush1.msra.mxu0 0.0
    %3648 = vmatprep.subr.mxu0 0.0
    %3649 = vmatpush1.msra.mxu0 0.0
    %3650 = vmatprep.subr.mxu0 0.0
    %3651 = vmatpush1.msra.mxu0 0.0
    %3652 = vmatprep.subr.mxu0 0.0
    %3653 = vmatpush1.msra.mxu0 0.0
    %3654 = vmatprep.subr.mxu0 0.0
    %3655 = vmatpush1.msra.mxu0 0.0
    %3656 = vmatprep.subr.mxu0 0.0
    %3657 = vmatpush1.msra.mxu0 0.0
    %3658 = vmatprep.subr.mxu0 0.0
    %3659 = vmatpush1.msra.mxu0 0.0
    %3660 = vmatprep.subr.mxu0 0.0
    %3661 = vmatpush1.msra.mxu0 0.0
    %3662 = vmatprep.subr.mxu0 0.0
    %3663 = vmatpush1.msra.mxu0 0.0
    %3664 = vmatprep.subr.mxu0 0.0
    %3665 = vmatpush1.msra.mxu0 0.0
    %3666 = vmatprep.subr.mxu0 0.0
    %3667 = vmatpush1.msra.mxu0 0.0
    %3668 = vmatprep.subr.mxu0 0.0
    %3669 = vmatpush1.msra.mxu0 0.0
    %3670 = vmatprep.subr.mxu0 0.0
    %3671 = vmatpush1.msra.mxu0 0.0
    %3672 = vmatprep.subr.mxu0 0.0
    %3673 = vmatpush1.msra.mxu0 0.0
    %3674 = vmatprep.subr.mxu0 0.0
    %3675 = vmatpush1.msra.mxu0 0.0
    %3676 = vmatprep.mubr.f32.mxu0 0.0
    %3677 = vmatmul.mubr.f32.gmra.mrb[0].mxu0 %v3201
    %v3678 = vpop.f32.mrb[0].mxu0
    %v3679 = vadd.f32 0.0, %v3678
    %v3680 = vpop.f32.mrb[0].mxu0
    %3681 = vdwg.mxu0
    %v3682 = vadd.f32 %v3611, %v3679
    %3684 = vrot.lane.b32.xlu0 %v3308, 112
    %v3685 = vpop.permute.xlu0 %3684
    %v3686 = vsel %vm346, %v3685, 0
    %3688 = vmatprep.subr.mxu0 0.0
    %3689 = vmatpush1.msra.mxu0 %v3319
    %3690 = vmatprep.subr.mxu0 0.0
    %3691 = vmatpush1.msra.mxu0 %v3320
    %3692 = vmatprep.subr.mxu0 0.0
    %3693 = vmatpush1.msra.mxu0 0.0
    %3694 = vmatprep.subr.mxu0 0.0
    %3695 = vmatpush1.msra.mxu0 0.0
    %3696 = vmatprep.subr.mxu0 0.0
    %3697 = vmatpush1.msra.mxu0 0.0
    %3698 = vmatprep.subr.mxu0 0.0
    %3699 = vmatpush1.msra.mxu0 0.0
    %3700 = vmatprep.subr.mxu0 0.0
    %3701 = vmatpush1.msra.mxu0 0.0
    %3702 = vmatprep.subr.mxu0 0.0
    %3703 = vmatpush1.msra.mxu0 0.0
    %3704 = vmatprep.subr.mxu0 0.0
    %3705 = vmatpush1.msra.mxu0 0.0
    %3706 = vmatprep.subr.mxu0 0.0
    %3707 = vmatpush1.msra.mxu0 0.0
    %3708 = vmatprep.subr.mxu0 0.0
    %3709 = vmatpush1.msra.mxu0 0.0
    %3710 = vmatprep.subr.mxu0 0.0
    %3711 = vmatpush1.msra.mxu0 0.0
    %3712 = vmatprep.subr.mxu0 0.0
    %3713 = vmatpush1.msra.mxu0 0.0
    %3714 = vmatprep.subr.mxu0 0.0
    %3715 = vmatpush1.msra.mxu0 0.0
    %3716 = vmatprep.subr.mxu0 0.0
    %3717 = vmatpush1.msra.mxu0 0.0
    %3718 = vmatprep.subr.mxu0 0.0
    %3719 = vmatpush1.msra.mxu0 0.0
    %3720 = vmatprep.subr.mxu0 0.0
    %3721 = vmatpush1.msra.mxu0 0.0
    %3722 = vmatprep.subr.mxu0 0.0
    %3723 = vmatpush1.msra.mxu0 0.0
    %3724 = vmatprep.subr.mxu0 0.0
    %3725 = vmatpush1.msra.mxu0 0.0
    %3726 = vmatprep.subr.mxu0 0.0
    %3727 = vmatpush1.msra.mxu0 0.0
    %3728 = vmatprep.subr.mxu0 0.0
    %3729 = vmatpush1.msra.mxu0 0.0
    %3730 = vmatprep.subr.mxu0 0.0
    %3731 = vmatpush1.msra.mxu0 0.0
    %3732 = vmatprep.subr.mxu0 0.0
    %3733 = vmatpush1.msra.mxu0 0.0
    %3734 = vmatprep.subr.mxu0 0.0
    %3735 = vmatpush1.msra.mxu0 0.0
    %3736 = vmatprep.subr.mxu0 0.0
    %3737 = vmatpush1.msra.mxu0 0.0
    %3738 = vmatprep.subr.mxu0 0.0
    %3739 = vmatpush1.msra.mxu0 0.0
    %3740 = vmatprep.subr.mxu0 0.0
    %3741 = vmatpush1.msra.mxu0 0.0
    %3742 = vmatprep.subr.mxu0 0.0
    %3743 = vmatpush1.msra.mxu0 0.0
    %3744 = vmatprep.subr.mxu0 0.0
    %3745 = vmatpush1.msra.mxu0 0.0
    %3746 = vmatprep.subr.mxu0 0.0
    %3747 = vmatpush1.msra.mxu0 0.0
    %3748 = vmatprep.subr.mxu0 0.0
    %3749 = vmatpush1.msra.mxu0 0.0
    %3750 = vmatprep.subr.mxu0 0.0
    %3751 = vmatpush1.msra.mxu0 0.0
    %3752 = vmatprep.mubr.f32.mxu0 0.0
    %3753 = vmatmul.mubr.f32.gmra.mrb[0].mxu0 %v3686
    %v3754 = vpop.f32.mrb[0].mxu0
    %v3755 = vadd.f32 0.0, %v3754
    %v3756 = vpop.f32.mrb[0].mxu0
    %3757 = vdwg.mxu0
    %v3758 = vadd.f32 %v3682, %v3755
    %vm3759 = vcmp.ge.f32.partialorder %v3758, 0.0
    %s3760 = sld [smem:[#allocation27]]
    %v3761 = vstv %s3760
    %v3762 = vmul.f32 %v3761, %v3758
    %v3763 = vsel %vm3759, %v3758, %v3762
    %v3764 = vld [vmem:[%s57] sm:$0xff]
    %v3765 = vld [vmem:[%s57 + $0x8] sm:$0xff]
    %v3766 = vld [vmem:[%s57 + $0x10] sm:$0xff]
    %v3767 = vld [vmem:[%s57 + $0x18] sm:$0xff]
    %v3768 = vld [vmem:[%s59] sm:$0x1]
    %v3770 = vlaneseq
    %v3771 = vshrl.u32 %v3770, 7
    %v3772 = vsub.s32 0, %v3771
    %v3773 = vrot.slane %v3768, %v3772
    %v3776 = vsel %vm432, %v3763, 0
    %3778 = vmatprep.subr.mxu0 0.0
    %3779 = vmatpush1.msra.mxu0 %v3764
    %3780 = vmatprep.subr.mxu0 0.0
    %3781 = vmatpush1.msra.mxu0 %v3765
    %3782 = vmatprep.subr.mxu0 0.0
    %3783 = vmatpush1.msra.mxu0 %v3766
    %3784 = vmatprep.subr.mxu0 0.0
    %3785 = vmatpush1.msra.mxu0 %v3767
    %3786 = vmatprep.subr.mxu0 0.0
    %3787 = vmatpush1.msra.mxu0 0.0
    %3788 = vmatprep.subr.mxu0 0.0
    %3789 = vmatpush1.msra.mxu0 0.0
    %3790 = vmatprep.subr.mxu0 0.0
    %3791 = vmatpush1.msra.mxu0 0.0
    %3792 = vmatprep.subr.mxu0 0.0
    %3793 = vmatpush1.msra.mxu0 0.0
    %3794 = vmatprep.subr.mxu0 0.0
    %3795 = vmatpush1.msra.mxu0 0.0
    %3796 = vmatprep.subr.mxu0 0.0
    %3797 = vmatpush1.msra.mxu0 0.0
    %3798 = vmatprep.subr.mxu0 0.0
    %3799 = vmatpush1.msra.mxu0 0.0
    %3800 = vmatprep.subr.mxu0 0.0
    %3801 = vmatpush1.msra.mxu0 0.0
    %3802 = vmatprep.subr.mxu0 0.0
    %3803 = vmatpush1.msra.mxu0 0.0
    %3804 = vmatprep.subr.mxu0 0.0
    %3805 = vmatpush1.msra.mxu0 0.0
    %3806 = vmatprep.subr.mxu0 0.0
    %3807 = vmatpush1.msra.mxu0 0.0
    %3808 = vmatprep.subr.mxu0 0.0
    %3809 = vmatpush1.msra.mxu0 0.0
    %3810 = vmatprep.subr.mxu0 0.0
    %3811 = vmatpush1.msra.mxu0 0.0
    %3812 = vmatprep.subr.mxu0 0.0
    %3813 = vmatpush1.msra.mxu0 0.0
    %3814 = vmatprep.subr.mxu0 0.0
    %3815 = vmatpush1.msra.mxu0 0.0
    %3816 = vmatprep.subr.mxu0 0.0
    %3817 = vmatpush1.msra.mxu0 0.0
    %3818 = vmatprep.subr.mxu0 0.0
    %3819 = vmatpush1.msra.mxu0 0.0
    %3820 = vmatprep.subr.mxu0 0.0
    %3821 = vmatpush1.msra.mxu0 0.0
    %3822 = vmatprep.subr.mxu0 0.0
    %3823 = vmatpush1.msra.mxu0 0.0
    %3824 = vmatprep.subr.mxu0 0.0
    %3825 = vmatpush1.msra.mxu0 0.0
    %3826 = vmatprep.subr.mxu0 0.0
    %3827 = vmatpush1.msra.mxu0 0.0
    %3828 = vmatprep.subr.mxu0 0.0
    %3829 = vmatpush1.msra.mxu0 0.0
    %3830 = vmatprep.subr.mxu0 0.0
    %3831 = vmatpush1.msra.mxu0 0.0
    %3832 = vmatprep.subr.mxu0 0.0
    %3833 = vmatpush1.msra.mxu0 0.0
    %3834 = vmatprep.subr.mxu0 0.0
    %3835 = vmatpush1.msra.mxu0 0.0
    %3836 = vmatprep.subr.mxu0 0.0
    %3837 = vmatpush1.msra.mxu0 0.0
    %3838 = vmatprep.subr.mxu0 0.0
    %3839 = vmatpush1.msra.mxu0 0.0
    %3840 = vmatprep.subr.mxu0 0.0
    %3841 = vmatpush1.msra.mxu0 0.0
    %3842 = vmatprep.mubr.f32.mxu0 0.0
    %3843 = vmatmul.mubr.f32.gmra.mrb[0].mxu0 %v3776
    %v3844 = vpop.f32.mrb[0].mxu0
    %v3845 = vadd.f32 %v3773, %v3844
    %v3846 = vpop.f32.mrb[0].mxu0
    %3847 = vdwg.mxu0
    %vm3848 = vcmp.ge.f32.partialorder %v3845, 0.0
    %s3849 = sld [smem:[#allocation27 + $0x1]]
    %v3850 = vstv %s3849
    %v3851 = vmul.f32 %v3850, %v3845
    %v3852 = vsel %vm3848, %v3845, %v3851
    %v3853 = vld [vmem:[%s61] sm:$0xff]
    %v3854 = vld [vmem:[%s61 + $0x8] sm:$0xff]
    %v3855 = vld [vmem:[%s61 + $0x10] sm:$0xff]
    %v3856 = vld [vmem:[%s61 + $0x18] sm:$0xff]
    %v3857 = vld [vmem:[%s63] sm:$0x1]
    %v3859 = vlaneseq
    %v3860 = vshrl.u32 %v3859, 7
    %v3861 = vsub.s32 0, %v3860
    %v3862 = vrot.slane %v3857, %v3861
    %v3865 = vsel %vm432, %v3852, 0
    %3867 = vmatprep.subr.mxu0 0.0
    %3868 = vmatpush1.msra.mxu0 %v3853
    %3869 = vmatprep.subr.mxu0 0.0
    %3870 = vmatpush1.msra.mxu0 %v3854
    %3871 = vmatprep.subr.mxu0 0.0
    %3872 = vmatpush1.msra.mxu0 %v3855
    %3873 = vmatprep.subr.mxu0 0.0
    %3874 = vmatpush1.msra.mxu0 %v3856
    %3875 = vmatprep.subr.mxu0 0.0
    %3876 = vmatpush1.msra.mxu0 0.0
    %3877 = vmatprep.subr.mxu0 0.0
    %3878 = vmatpush1.msra.mxu0 0.0
    %3879 = vmatprep.subr.mxu0 0.0
    %3880 = vmatpush1.msra.mxu0 0.0
    %3881 = vmatprep.subr.mxu0 0.0
    %3882 = vmatpush1.msra.mxu0 0.0
    %3883 = vmatprep.subr.mxu0 0.0
    %3884 = vmatpush1.msra.mxu0 0.0
    %3885 = vmatprep.subr.mxu0 0.0
    %3886 = vmatpush1.msra.mxu0 0.0
    %3887 = vmatprep.subr.mxu0 0.0
    %3888 = vmatpush1.msra.mxu0 0.0
    %3889 = vmatprep.subr.mxu0 0.0
    %3890 = vmatpush1.msra.mxu0 0.0
    %3891 = vmatprep.subr.mxu0 0.0
    %3892 = vmatpush1.msra.mxu0 0.0
    %3893 = vmatprep.subr.mxu0 0.0
    %3894 = vmatpush1.msra.mxu0 0.0
    %3895 = vmatprep.subr.mxu0 0.0
    %3896 = vmatpush1.msra.mxu0 0.0
    %3897 = vmatprep.subr.mxu0 0.0
    %3898 = vmatpush1.msra.mxu0 0.0
    %3899 = vmatprep.subr.mxu0 0.0
    %3900 = vmatpush1.msra.mxu0 0.0
    %3901 = vmatprep.subr.mxu0 0.0
    %3902 = vmatpush1.msra.mxu0 0.0
    %3903 = vmatprep.subr.mxu0 0.0
    %3904 = vmatpush1.msra.mxu0 0.0
    %3905 = vmatprep.subr.mxu0 0.0
    %3906 = vmatpush1.msra.mxu0 0.0
    %3907 = vmatprep.subr.mxu0 0.0
    %3908 = vmatpush1.msra.mxu0 0.0
    %3909 = vmatprep.subr.mxu0 0.0
    %3910 = vmatpush1.msra.mxu0 0.0
    %3911 = vmatprep.subr.mxu0 0.0
    %3912 = vmatpush1.msra.mxu0 0.0
    %3913 = vmatprep.subr.mxu0 0.0
    %3914 = vmatpush1.msra.mxu0 0.0
    %3915 = vmatprep.subr.mxu0 0.0
    %3916 = vmatpush1.msra.mxu0 0.0
    %3917 = vmatprep.subr.mxu0 0.0
    %3918 = vmatpush1.msra.mxu0 0.0
    %3919 = vmatprep.subr.mxu0 0.0
    %3920 = vmatpush1.msra.mxu0 0.0
    %3921 = vmatprep.subr.mxu0 0.0
    %3922 = vmatpush1.msra.mxu0 0.0
    %3923 = vmatprep.subr.mxu0 0.0
    %3924 = vmatpush1.msra.mxu0 0.0
    %3925 = vmatprep.subr.mxu0 0.0
    %3926 = vmatpush1.msra.mxu0 0.0
    %3927 = vmatprep.subr.mxu0 0.0
    %3928 = vmatpush1.msra.mxu0 0.0
    %3929 = vmatprep.subr.mxu0 0.0
    %3930 = vmatpush1.msra.mxu0 0.0
    %3931 = vmatprep.mubr.f32.mxu0 0.0
    %3932 = vmatmul.mubr.f32.gmra.mrb[0].mxu0 %v3865
    %v3933 = vpop.f32.mrb[0].mxu0
    %v3934 = vadd.f32 %v3862, %v3933
    %v3935 = vpop.f32.mrb[0].mxu0
    %3936 = vdwg.mxu0
    %vm3937 = vcmp.ge.f32.partialorder %v3934, 0.0
    %s3938 = sld [smem:[#allocation27 + $0x2]]
    %v3939 = vstv %s3938
    %v3940 = vmul.f32 %v3939, %v3934
    %v3941 = vsel %vm3937, %v3934, %v3940
    %v3942 = vld [vmem:[%s65] sm:$0xff]
    %v3943 = vld [vmem:[%s65 + $0x8] sm:$0xff]
    %v3944 = vld [vmem:[%s65 + $0x10] sm:$0xff]
    %v3945 = vld [vmem:[%s65 + $0x18] sm:$0xff]
    %v3946 = vld [vmem:[#allocation2] sm:$0x1]
    %v3948 = vlaneseq
    %v3949 = vshrl.u32 %v3948, 7
    %v3950 = vsub.s32 0, %v3949
    %v3951 = vrot.slane %v3946, %v3950
    %v3954 = vsel %vm432, %v3941, 0
    %3956 = vmatprep.subr.mxu0 0.0
    %3957 = vmatpush1.msra.mxu0 %v3942
    %3958 = vmatprep.subr.mxu0 0.0
    %3959 = vmatpush1.msra.mxu0 %v3943
    %3960 = vmatprep.subr.mxu0 0.0
    %3961 = vmatpush1.msra.mxu0 %v3944
    %3962 = vmatprep.subr.mxu0 0.0
    %3963 = vmatpush1.msra.mxu0 %v3945
    %3964 = vmatprep.subr.mxu0 0.0
    %3965 = vmatpush1.msra.mxu0 0.0
    %3966 = vmatprep.subr.mxu0 0.0
    %3967 = vmatpush1.msra.mxu0 0.0
    %3968 = vmatprep.subr.mxu0 0.0
    %3969 = vmatpush1.msra.mxu0 0.0
    %3970 = vmatprep.subr.mxu0 0.0
    %3971 = vmatpush1.msra.mxu0 0.0
    %3972 = vmatprep.subr.mxu0 0.0
    %3973 = vmatpush1.msra.mxu0 0.0
    %3974 = vmatprep.subr.mxu0 0.0
    %3975 = vmatpush1.msra.mxu0 0.0
    %3976 = vmatprep.subr.mxu0 0.0
    %3977 = vmatpush1.msra.mxu0 0.0
    %3978 = vmatprep.subr.mxu0 0.0
    %3979 = vmatpush1.msra.mxu0 0.0
    %3980 = vmatprep.subr.mxu0 0.0
    %3981 = vmatpush1.msra.mxu0 0.0
    %3982 = vmatprep.subr.mxu0 0.0
    %3983 = vmatpush1.msra.mxu0 0.0
    %3984 = vmatprep.subr.mxu0 0.0
    %3985 = vmatpush1.msra.mxu0 0.0
    %3986 = vmatprep.subr.mxu0 0.0
    %3987 = vmatpush1.msra.mxu0 0.0
    %3988 = vmatprep.subr.mxu0 0.0
    %3989 = vmatpush1.msra.mxu0 0.0
    %3990 = vmatprep.subr.mxu0 0.0
    %3991 = vmatpush1.msra.mxu0 0.0
    %3992 = vmatprep.subr.mxu0 0.0
    %3993 = vmatpush1.msra.mxu0 0.0
    %3994 = vmatprep.subr.mxu0 0.0
    %3995 = vmatpush1.msra.mxu0 0.0
    %3996 = vmatprep.subr.mxu0 0.0
    %3997 = vmatpush1.msra.mxu0 0.0
    %3998 = vmatprep.subr.mxu0 0.0
    %3999 = vmatpush1.msra.mxu0 0.0
    %4000 = vmatprep.subr.mxu0 0.0
    %4001 = vmatpush1.msra.mxu0 0.0
    %4002 = vmatprep.subr.mxu0 0.0
    %4003 = vmatpush1.msra.mxu0 0.0
    %4004 = vmatprep.subr.mxu0 0.0
    %4005 = vmatpush1.msra.mxu0 0.0
    %4006 = vmatprep.subr.mxu0 0.0
    %4007 = vmatpush1.msra.mxu0 0.0
    %4008 = vmatprep.subr.mxu0 0.0
    %4009 = vmatpush1.msra.mxu0 0.0
    %4010 = vmatprep.subr.mxu0 0.0
    %4011 = vmatpush1.msra.mxu0 0.0
    %4012 = vmatprep.subr.mxu0 0.0
    %4013 = vmatpush1.msra.mxu0 0.0
    %4014 = vmatprep.subr.mxu0 0.0
    %4015 = vmatpush1.msra.mxu0 0.0
    %4016 = vmatprep.subr.mxu0 0.0
    %4017 = vmatpush1.msra.mxu0 0.0
    %4018 = vmatprep.subr.mxu0 0.0
    %4019 = vmatpush1.msra.mxu0 0.0
    %4020 = vmatprep.mubr.f32.mxu0 0.0
    %4021 = vmatmul.mubr.f32.gmra.mrb[0].mxu0 %v3954
    %v4022 = vpop.f32.mrb[0].mxu0
    %v4023 = vadd.f32 %v3951, %v4022
    %v4024 = vpop.f32.mrb[0].mxu0
    %4025 = vdwg.mxu0
    %vm4026 = vcmask 7168
    %4027 = vst.msk [vmem:[%s71] sm:$0xff] %vm4026, %v4023
    // Predicated region
    $region206: #{forward.1} parent=1 // pred_check
      _
    $region207: #{forward.1} parent=1 // pred_check_branch
      %4029 = sbr.rel (0) target = $region209
    $region208: #{forward.1} parent=1 // pred_region
      _
    $region209: #{forward.1} parent=1 // pred_fallthru
      _
    // Predicated region
    $region210: #{forward.1} parent=1 // pred_check
      _
    $region211: #{forward.1} parent=1 // pred_check_branch
      %4031 = sbr.rel (0) target = $region213
    $region212: #{forward.1} parent=1 // pred_region
      _
    $region213: #{forward.1} parent=1 // pred_fallthru
      _
    %4032 = vsyncpa [#allocation4], 1
    %4033 = vsyncpa [#allocation7], 1
    %4034 = vsyncpa [#allocation10], 1
    %4035 = vsyncpa [#allocation13], 1
    %4036 = vsyncpa [#allocation16], 1
    %4037 = vsyncpa [#allocation19], 1
    %4038 = vsyncpa [#allocation22], 1
    %4039 = vsyncpa [#allocation25], 1
    %4040 = vsyncpa [#allocation5], 1

</llo_original>
